<compile_context>
chip_gen: v7x
topology: tpu7x:2x2x1
jax: 0.10.0
libtpu: 0.0.40
codegen_flags: <defaults>
</compile_context>

<pallas_src>
import functools

import numpy as np
import jax
import jax.numpy as jnp
from jax import lax
from jax.experimental import pallas as pl
from jax.experimental.pallas import tpu as pltpu

_EPS = 1e-5


# ----------------------------------------------------------------------------
# Fused Pallas kernel
# ----------------------------------------------------------------------------
def _relu(x):
    return jnp.maximum(x, 0.0)


def _mm(a, w_ref):
    # bf16 x bf16 operands -> f32 accumulation on the MXU.
    return jnp.dot(a.astype(jnp.bfloat16), w_ref[...],
                   preferred_element_type=jnp.float32)


def _conv3x3_relu(a, pad_ref, w_ref, b_ref, B, W, H):
    """3x3 conv (stride 1, pad 1) + folded-BN bias + ReLU, fully in VMEM.

    a:       (B*W*H, C) f32 activation, rows in (b, w, h) order.
    pad_ref: (B, W+2, H+2, C) f32 VMEM scratch (spatial dims are leading dims
             so im2col slicing is static slicing of tile rows).
    w_ref:   (9*C, Cout) bf16 weight, rows ordered (kh, kw, cin), BN folded.
    """
    C = a.shape[-1]
    N = B * W * H
    pad_ref[...] = jnp.zeros_like(pad_ref)
    pad_ref[:, 1:W + 1, 1:H + 1, :] = a.reshape(B, W, H, C)
    cols = []
    for kh in range(3):
        for kw in range(3):
            cols.append(pad_ref[:, kw:kw + W, kh:kh + H, :].reshape(N, C))
    xcol = jnp.concatenate(cols, axis=1)          # (N, 9C): single MXU matmul
    return _relu(_mm(xcol, w_ref) + b_ref[...])


def _encoder_kernel(
    x_ref, s_ref,
    w1_0, b1_0, w2_0, b2_0, w3_0, b3_0, wd_0, bd_0,
    w1_1, b1_1, w2_1, b2_1, w3_1, b3_1,
    w1_2, b1_2, w2_2, b2_2, w3_2, b3_2,
    o_ref,
    pad0_ref, pad1_ref,
    *, B, W0, H0, W1, H1, use_avg,
):
    bf16 = jnp.bfloat16
    x = x_ref[...]        # (B*W0*H0, Cin) bf16, rows in (b, w, h) order
    S = s_ref[...]        # (B*W1*H1, B*W0*H0) bf16 0/1 stride-2 subsampler

    # ---- block 0: stride-2 bottleneck with 1x1 downsample -----------------
    a1 = _relu(_mm(x, w1_0) + b1_0[...])                          # (N0, Cmid)
    # stride-2 3x3 conv == full-res stride-1 conv followed by even-(w,h)
    # selection; the selection is a constant 0/1 matmul (MXU, VMEM-resident).
    a2_full = _conv3x3_relu(a1, pad0_ref, w2_0, b2_0, B, W0, H0)  # (N0, Cmid)
    a2 = jnp.dot(S, a2_full.astype(bf16), preferred_element_type=jnp.float32)
    x_sub = jnp.dot(S, x, preferred_element_type=jnp.float32)     # (N1, Cin)
    identity = _mm(x_sub, wd_0) + bd_0[...]                       # (N1, Cout)
    h = _relu(_mm(a2, w3_0) + b3_0[...] + identity)               # (N1, Cout)

    # ---- blocks 1 & 2: stride-1 bottlenecks (shared pad scratch) ----------
    for (w1, b1, w2, b2, w3, b3) in (
        (w1_1, b1_1, w2_1, b2_1, w3_1, b3_1),
        (w1_2, b1_2, w2_2, b2_2, w3_2, b3_2),
    ):
        a1 = _relu(_mm(h, w1) + b1[...])
        a2 = _conv3x3_relu(a1, pad1_ref, w2, b2, B, W1, H1)
        h = _relu(_mm(a2, w3) + b3[...] + h)

    if use_avg:
        # fused nn.AvgPool2d((8,4)) + flatten
        o_ref[...] = jnp.mean(h.reshape(B, W1 * H1, h.shape[-1]), axis=1)
    else:
        o_ref[...] = h


# ----------------------------------------------------------------------------
# Wrapper: BN folding into weights, bf16 casts, constant subsample matrix,
# single pallas_call, boundary layout (NCHW in / NCHW or (B,C) out).
# ----------------------------------------------------------------------------
def _fold_bn(bn):
    gamma, beta, mean, var = bn
    scale = gamma / jnp.sqrt(var + _EPS)
    bias = beta - mean * scale
    return scale, bias


def _prep_block(p, has_down):
    """Fold BN scale into conv weights, reshape 3x3 to (9*Cin, Cout), bf16."""
    s1, b1 = _fold_bn(p["bn1"])
    s2, b2 = _fold_bn(p["bn2"])
    s3, b3 = _fold_bn(p["bn3"])
    w1 = (p["w1"] * s1[None, :]).astype(jnp.bfloat16)              # (Cin, Cmid)
    w2 = p["w2"] * s2[None, None, None, :]                         # HWIO
    w2 = w2.reshape(-1, w2.shape[-1]).astype(jnp.bfloat16)         # (9*Cmid, Cmid)
    w3 = (p["w3"] * s3[None, :]).astype(jnp.bfloat16)              # (Cmid, Cout)
    args = [w1, b1.reshape(1, -1), w2, b2.reshape(1, -1), w3, b3.reshape(1, -1)]
    if has_down:
        sd, bd = _fold_bn(p["bnd"])
        wd = (p["wd"] * sd[None, :]).astype(jnp.bfloat16)          # (Cin, Cout)
        args += [wd, bd.reshape(1, -1)]
    return args


def _subsample_matrix(B, W, H, stride):
    """0/1 matrix selecting (b, stride*wo, stride*ho) rows of a (B*W*H, C) slab."""
    Wo, Ho = W // stride, H // stride
    S = np.zeros((B * Wo * Ho, B * W * H), np.float32)
    for b in range(B):
        for wo in range(Wo):
            for ho in range(Ho):
                S[b * Wo * Ho + wo * Ho + ho,
                  b * W * H + (stride * wo) * H + (stride * ho)] = 1.0
    return jnp.asarray(S, jnp.bfloat16)


@functools.partial(jax.jit, static_argnames=("use_avg",))
def encoder_forward(x_nchw, params, use_avg=False):
    B, Cin, H, W = x_nchw.shape
    H1, W1 = H // 2, W // 2
    Cmid = params["block0"]["w1"].shape[-1]
    Cout = params["block0"]["w3"].shape[-1]

    # NCHW -> (b, w, h, c)-flattened bf16 matrix (spatial dims become the
    # leading dims of the in-kernel padded scratch; last dim = channels).
    x2d = jnp.transpose(x_nchw, (0, 3, 2, 1)).reshape(B * W * H, Cin)
    x2d = x2d.astype(jnp.bfloat16)
    S = _subsample_matrix(B, W, H, 2)

    args = [x2d, S]
    args += _prep_block(params["block0"], True)
    args += _prep_block(params["block1"], False)
    args += _prep_block(params["block2"], False)

    out_rows = B if use_avg else B * W1 * H1
    kernel = functools.partial(
        _encoder_kernel, B=B, W0=W, H0=H, W1=W1, H1=H1, use_avg=use_avg)

    y = pl.pallas_call(
        kernel,
        out_shape=jax.ShapeDtypeStruct((out_rows, Cout), jnp.float32),
        scratch_shapes=[
            pltpu.VMEM((B, W + 2, H + 2, Cmid), jnp.float32),    # block 0 pad
            pltpu.VMEM((B, W1 + 2, H1 + 2, Cmid), jnp.float32),  # blocks 1/2
        ],
    )(*args)

    if use_avg:
        return y                                                  # (B, Cout)
    # (b, w, h, c)-flattened -> NCHW
    return jnp.transpose(y.reshape(B, W1, H1, Cout), (0, 3, 2, 1))


# ----------------------------------------------------------------------------
# Deterministic synthetic parameter init (no checkpoint loading)
# ----------------------------------------------------------------------------
def init_bn(key, c):
    k1, k2, k3, k4 = jax.random.split(key, 4)
    gamma = jax.random.uniform(k1, (c,), jnp.float32, 0.5, 1.5)
    beta = 0.1 * jax.random.normal(k2, (c,), jnp.float32)
    mean = 0.1 * jax.random.normal(k3, (c,), jnp.float32)
    var = jax.random.uniform(k4, (c,), jnp.float32, 0.5, 1.5)
    return (gamma, beta, mean, var)


def init_block(key, cin, cmid, cout, downsample):
    ks = jax.random.split(key, 8)
    p = {}
    p["w1"] = jax.random.normal(ks[0], (cin, cmid), jnp.float32) / jnp.sqrt(cin)
    p["bn1"] = init_bn(ks[1], cmid)
    p["w2"] = jax.random.normal(ks[2], (3, 3, cmid, cmid), jnp.float32) / jnp.sqrt(9.0 * cmid)
    p["bn2"] = init_bn(ks[3], cmid)
    p["w3"] = jax.random.normal(ks[4], (cmid, cout), jnp.float32) / jnp.sqrt(cmid)
    p["bn3"] = init_bn(ks[5], cout)
    if downsample:
        p["wd"] = jax.random.normal(ks[6], (cin, cout), jnp.float32) / jnp.sqrt(cin)
        p["bnd"] = init_bn(ks[7], cout)
    return p


# ----------------------------------------------------------------------------
# Pure-JAX f32 reference (for correctness checking only)
# ----------------------------------------------------------------------------
def _bn_ref(x, bn):
    gamma, beta, mean, var = bn
    return (x - mean) / jnp.sqrt(var + _EPS) * gamma + beta


def _conv_ref(x, w_hwio, stride, pad):
    return lax.conv_general_dilated(
        x, w_hwio, (stride, stride), [(pad, pad), (pad, pad)],
        dimension_numbers=("NHWC", "HWIO", "NHWC"))


def _ref_bottleneck(x, p, stride):
    identity = x
    out = jax.nn.relu(_bn_ref(_conv_ref(x, p["w1"].reshape(1, 1, *p["w1"].shape), 1, 0), p["bn1"]))
    out = jax.nn.relu(_bn_ref(_conv_ref(out, p["w2"], stride, 1), p["bn2"]))
    out = _bn_ref(_conv_ref(out, p["w3"].reshape(1, 1, *p["w3"].shape), 1, 0), p["bn3"])
    if "wd" in p:
        identity = _bn_ref(_conv_ref(x, p["wd"].reshape(1, 1, *p["wd"].shape), stride, 0), p["bnd"])
    return jax.nn.relu(out + identity)


def reference_forward(x_nchw, params, use_avg=False):
    x = jnp.transpose(x_nchw, (0, 2, 3, 1)).astype(jnp.float32)
    x = _ref_bottleneck(x, params["block0"], 2)
    x = _ref_bottleneck(x, params["block1"], 1)
    x = _ref_bottleneck(x, params["block2"], 1)
    if use_avg:
        return jnp.mean(x, axis=(1, 2))
    return jnp.transpose(x, (0, 3, 1, 2))


# ----------------------------------------------------------------------------
if __name__ == "__main__":
    key = jax.random.PRNGKey(0)
    k_in, k_p = jax.random.split(key)

    # Small stand-in for resnet50 layer4: 64 -> (32 mid) -> 128 channels,
    # spatial 16x8 (re-ID style) -> 8x4 after the stride-2 block.
    B, C_IN, H, W = 2, 64, 16, 8
    C_MID, C_OUT = 32, 128

    x = jax.random.normal(k_in, (B, C_IN, H, W), dtype=jnp.float32)

    kb = jax.random.split(k_p, 3)
    params = {
        "block0": init_block(kb[0], C_IN, C_MID, C_OUT, downsample=True),
        "block1": init_block(kb[1], C_OUT, C_MID, C_OUT, downsample=False),
        "block2": init_block(kb[2], C_OUT, C_MID, C_OUT, downsample=False),
    }

    feat = jax.block_until_ready(encoder_forward(x, params, use_avg=False))
    feat_avg = jax.block_until_ready(encoder_forward(x, params, use_avg=True))

    assert feat.shape == (B, C_OUT, 8, 4), feat.shape
    assert feat_avg.shape == (B, C_OUT), feat_avg.shape

    # Kernel runs bf16 on the MXU (f32 accumulation); compare against the pure
    # f32 reference with a correspondingly relaxed tolerance.
    ref = reference_forward(x, params, use_avg=False)
    ref_avg = reference_forward(x, params, use_avg=True)
    assert jnp.allclose(feat, ref, atol=5e-2, rtol=5e-2)
    assert jnp.allclose(feat_avg, ref_avg, atol=5e-2, rtol=5e-2)

    print("KERNEL_OK")
</pallas_src>

<mosaic_0001>
module attributes {stable_mosaic.version = 11 : i64} {
  func.func @_encoder_kernel(%arg0: memref<256x64xbf16, #tpu.memory_space<vmem>>, %arg1: memref<64x256xbf16, #tpu.memory_space<vmem>>, %arg2: memref<64x32xbf16, #tpu.memory_space<vmem>>, %arg3: memref<1x32xf32, #tpu.memory_space<vmem>>, %arg4: memref<288x32xbf16, #tpu.memory_space<vmem>>, %arg5: memref<1x32xf32, #tpu.memory_space<vmem>>, %arg6: memref<32x128xbf16, #tpu.memory_space<vmem>>, %arg7: memref<1x128xf32, #tpu.memory_space<vmem>>, %arg8: memref<64x128xbf16, #tpu.memory_space<vmem>>, %arg9: memref<1x128xf32, #tpu.memory_space<vmem>>, %arg10: memref<128x32xbf16, #tpu.memory_space<vmem>>, %arg11: memref<1x32xf32, #tpu.memory_space<vmem>>, %arg12: memref<288x32xbf16, #tpu.memory_space<vmem>>, %arg13: memref<1x32xf32, #tpu.memory_space<vmem>>, %arg14: memref<32x128xbf16, #tpu.memory_space<vmem>>, %arg15: memref<1x128xf32, #tpu.memory_space<vmem>>, %arg16: memref<128x32xbf16, #tpu.memory_space<vmem>>, %arg17: memref<1x32xf32, #tpu.memory_space<vmem>>, %arg18: memref<288x32xbf16, #tpu.memory_space<vmem>>, %arg19: memref<1x32xf32, #tpu.memory_space<vmem>>, %arg20: memref<32x128xbf16, #tpu.memory_space<vmem>>, %arg21: memref<1x128xf32, #tpu.memory_space<vmem>>, %arg22: memref<64x128xf32, #tpu.memory_space<vmem>>, %arg23: memref<2x10x18x32xf32, #tpu.memory_space<vmem>>, %arg24: memref<2x6x10x32xf32, #tpu.memory_space<vmem>>) attributes {dimension_semantics = [], scalar_prefetch = 0 : i64, scratch_operands = 2 : i64, tpu.core_type = #tpu.core_type<tc>} {
    %c0 = arith.constant 0 : index
    %c0_0 = arith.constant 0 : index
    %0 = vector.load %arg0[%c0, %c0_0] : memref<256x64xbf16, #tpu.memory_space<vmem>>, vector<256x64xbf16>
    %c0_1 = arith.constant 0 : index
    %c0_2 = arith.constant 0 : index
    %1 = vector.load %arg1[%c0_1, %c0_2] : memref<64x256xbf16, #tpu.memory_space<vmem>>, vector<64x256xbf16>
    %c0_3 = arith.constant 0 : index
    %c0_4 = arith.constant 0 : index
    %2 = vector.load %arg2[%c0_3, %c0_4] : memref<64x32xbf16, #tpu.memory_space<vmem>>, vector<64x32xbf16>
    %cst = arith.constant dense<0.000000e+00> : vector<256x32xf32>
    %3 = tpu.matmul %0, %2, %cst {dimension_numbers = #tpu.dot_dimension_numbers<[1], [0], [0], [1], [0, 0, 1, 1], [], []>} : vector<256x64xbf16>, vector<64x32xbf16>, vector<256x32xf32> -> vector<256x32xf32>
    %c0_5 = arith.constant 0 : index
    %c0_6 = arith.constant 0 : index
    %4 = vector.load %arg3[%c0_5, %c0_6] : memref<1x32xf32, #tpu.memory_space<vmem>>, vector<1x32xf32>
    %5 = vector.broadcast %4 : vector<1x32xf32> to vector<256x32xf32>
    %6 = arith.addf %3, %5 : vector<256x32xf32>
    %cst_7 = arith.constant 0.000000e+00 : f32
    %7 = vector.broadcast %cst_7 : f32 to vector<256x32xf32>
    %8 = arith.maximumf %6, %7 : vector<256x32xf32>
    %cst_8 = arith.constant 0.000000e+00 : f32
    %9 = vector.broadcast %cst_8 : f32 to vector<2x10x18x32xf32>
    %c0_9 = arith.constant 0 : index
    %c0_10 = arith.constant 0 : index
    %c0_11 = arith.constant 0 : index
    %c0_12 = arith.constant 0 : index
    %10 = vector.load %arg23[%c0_9, %c0_10, %c0_11, %c0_12] : memref<2x10x18x32xf32, #tpu.memory_space<vmem>>, vector<2x10x18x32xf32>
    tpu.vector_store %arg23[%c0_9, %c0_10, %c0_11, %c0_12], %9 {strides = array<i32>} : memref<2x10x18x32xf32, #tpu.memory_space<vmem>>, vector<2x10x18x32xf32>,
    %11 = vector.shape_cast %8 : vector<256x32xf32> to vector<2x8x16x32xf32>
    %c0_13 = arith.constant 0 : index
    %c1 = arith.constant 1 : index
    %c1_14 = arith.constant 1 : index
    %c0_15 = arith.constant 0 : index
    %12 = vector.load %arg23[%c0_13, %c1, %c1_14, %c0_15] : memref<2x10x18x32xf32, #tpu.memory_space<vmem>>, vector<2x8x16x32xf32>
    tpu.vector_store %arg23[%c0_13, %c1, %c1_14, %c0_15], %11 {strides = array<i32>} : memref<2x10x18x32xf32, #tpu.memory_space<vmem>>, vector<2x8x16x32xf32>,
    %c0_16 = arith.constant 0 : index
    %c0_17 = arith.constant 0 : index
    %c0_18 = arith.constant 0 : index
    %c0_19 = arith.constant 0 : index
    %13 = vector.load %arg23[%c0_16, %c0_17, %c0_18, %c0_19] : memref<2x10x18x32xf32, #tpu.memory_space<vmem>>, vector<2x8x16x32xf32>
    %14 = vector.shape_cast %13 : vector<2x8x16x32xf32> to vector<256x32xf32>
    %c0_20 = arith.constant 0 : index
    %c1_21 = arith.constant 1 : index
    %c0_22 = arith.constant 0 : index
    %c0_23 = arith.constant 0 : index
    %15 = vector.load %arg23[%c0_20, %c1_21, %c0_22, %c0_23] : memref<2x10x18x32xf32, #tpu.memory_space<vmem>>, vector<2x8x16x32xf32>
    %16 = vector.shape_cast %15 : vector<2x8x16x32xf32> to vector<256x32xf32>
    %c0_24 = arith.constant 0 : index
    %c2 = arith.constant 2 : index
    %c0_25 = arith.constant 0 : index
    %c0_26 = arith.constant 0 : index
    %17 = vector.load %arg23[%c0_24, %c2, %c0_25, %c0_26] : memref<2x10x18x32xf32, #tpu.memory_space<vmem>>, vector<2x8x16x32xf32>
    %18 = vector.shape_cast %17 : vector<2x8x16x32xf32> to vector<256x32xf32>
    %c0_27 = arith.constant 0 : index
    %c0_28 = arith.constant 0 : index
    %c1_29 = arith.constant 1 : index
    %c0_30 = arith.constant 0 : index
    %19 = vector.load %arg23[%c0_27, %c0_28, %c1_29, %c0_30] : memref<2x10x18x32xf32, #tpu.memory_space<vmem>>, vector<2x8x16x32xf32>
    %20 = vector.shape_cast %19 : vector<2x8x16x32xf32> to vector<256x32xf32>
    %c0_31 = arith.constant 0 : index
    %c1_32 = arith.constant 1 : index
    %c1_33 = arith.constant 1 : index
    %c0_34 = arith.constant 0 : index
    %21 = vector.load %arg23[%c0_31, %c1_32, %c1_33, %c0_34] : memref<2x10x18x32xf32, #tpu.memory_space<vmem>>, vector<2x8x16x32xf32>
    %22 = vector.shape_cast %21 : vector<2x8x16x32xf32> to vector<256x32xf32>
    %c0_35 = arith.constant 0 : index
    %c2_36 = arith.constant 2 : index
    %c1_37 = arith.constant 1 : index
    %c0_38 = arith.constant 0 : index
    %23 = vector.load %arg23[%c0_35, %c2_36, %c1_37, %c0_38] : memref<2x10x18x32xf32, #tpu.memory_space<vmem>>, vector<2x8x16x32xf32>
    %24 = vector.shape_cast %23 : vector<2x8x16x32xf32> to vector<256x32xf32>
    %c0_39 = arith.constant 0 : index
    %c0_40 = arith.constant 0 : index
    %c2_41 = arith.constant 2 : index
    %c0_42 = arith.constant 0 : index
    %25 = vector.load %arg23[%c0_39, %c0_40, %c2_41, %c0_42] : memref<2x10x18x32xf32, #tpu.memory_space<vmem>>, vector<2x8x16x32xf32>
    %26 = vector.shape_cast %25 : vector<2x8x16x32xf32> to vector<256x32xf32>
    %c0_43 = arith.constant 0 : index
    %c1_44 = arith.constant 1 : index
    %c2_45 = arith.constant 2 : index
    %c0_46 = arith.constant 0 : index
    %27 = vector.load %arg23[%c0_43, %c1_44, %c2_45, %c0_46] : memref<2x10x18x32xf32, #tpu.memory_space<vmem>>, vector<2x8x16x32xf32>
    %28 = vector.shape_cast %27 : vector<2x8x16x32xf32> to vector<256x32xf32>
    %c0_47 = arith.constant 0 : index
    %c2_48 = arith.constant 2 : index
    %c2_49 = arith.constant 2 : index
    %c0_50 = arith.constant 0 : index
    %29 = vector.load %arg23[%c0_47, %c2_48, %c2_49, %c0_50] : memref<2x10x18x32xf32, #tpu.memory_space<vmem>>, vector<2x8x16x32xf32>
    %30 = vector.shape_cast %29 : vector<2x8x16x32xf32> to vector<256x32xf32>
    %31 = tpu.concatenate %14, %16, %18, %20, %22, %24, %26, %28, %30 in 1 : vector<256x32xf32>, vector<256x32xf32>, vector<256x32xf32>, vector<256x32xf32>, vector<256x32xf32>, vector<256x32xf32>, vector<256x32xf32>, vector<256x32xf32>, vector<256x32xf32> -> vector<256x288xf32>
    %32 = arith.truncf %31 : vector<256x288xf32> to vector<256x288xbf16>
    %c0_51 = arith.constant 0 : index
    %c0_52 = arith.constant 0 : index
    %33 = vector.load %arg4[%c0_51, %c0_52] : memref<288x32xbf16, #tpu.memory_space<vmem>>, vector<288x32xbf16>
    %cst_53 = arith.constant dense<0.000000e+00> : vector<256x32xf32>
    %34 = tpu.matmul %32, %33, %cst_53 {dimension_numbers = #tpu.dot_dimension_numbers<[1], [0], [0], [1], [0, 0, 1, 1], [], []>} : vector<256x288xbf16>, vector<288x32xbf16>, vector<256x32xf32> -> vector<256x32xf32>
    %c0_54 = arith.constant 0 : index
    %c0_55 = arith.constant 0 : index
    %35 = vector.load %arg5[%c0_54, %c0_55] : memref<1x32xf32, #tpu.memory_space<vmem>>, vector<1x32xf32>
    %36 = vector.broadcast %35 : vector<1x32xf32> to vector<256x32xf32>
    %37 = arith.addf %34, %36 : vector<256x32xf32>
    %cst_56 = arith.constant 0.000000e+00 : f32
    %38 = vector.broadcast %cst_56 : f32 to vector<256x32xf32>
    %39 = arith.maximumf %37, %38 : vector<256x32xf32>
    %40 = arith.truncf %39 : vector<256x32xf32> to vector<256x32xbf16>
    %cst_57 = arith.constant dense<0.000000e+00> : vector<64x32xf32>
    %41 = tpu.matmul %1, %40, %cst_57 {dimension_numbers = #tpu.dot_dimension_numbers<[1], [0], [0], [1], [0, 0, 1, 1], [], []>} : vector<64x256xbf16>, vector<256x32xbf16>, vector<64x32xf32> -> vector<64x32xf32>
    %cst_58 = arith.constant dense<0.000000e+00> : vector<64x64xf32>
    %42 = tpu.matmul %1, %0, %cst_58 {dimension_numbers = #tpu.dot_dimension_numbers<[1], [0], [0], [1], [0, 0, 1, 1], [], []>} : vector<64x256xbf16>, vector<256x64xbf16>, vector<64x64xf32> -> vector<64x64xf32>
    %43 = arith.truncf %42 : vector<64x64xf32> to vector<64x64xbf16>
    %c0_59 = arith.constant 0 : index
    %c0_60 = arith.constant 0 : index
    %44 = vector.load %arg8[%c0_59, %c0_60] : memref<64x128xbf16, #tpu.memory_space<vmem>>, vector<64x128xbf16>
    %cst_61 = arith.constant dense<0.000000e+00> : vector<64x128xf32>
    %45 = tpu.matmul %43, %44, %cst_61 {dimension_numbers = #tpu.dot_dimension_numbers<[1], [0], [0], [1], [0, 0, 1, 1], [], []>} : vector<64x64xbf16>, vector<64x128xbf16>, vector<64x128xf32> -> vector<64x128xf32>
    %c0_62 = arith.constant 0 : index
    %c0_63 = arith.constant 0 : index
    %46 = vector.load %arg9[%c0_62, %c0_63] : memref<1x128xf32, #tpu.memory_space<vmem>>, vector<1x128xf32>
    %47 = vector.broadcast %46 : vector<1x128xf32> to vector<64x128xf32>
    %48 = arith.addf %45, %47 : vector<64x128xf32>
    %49 = arith.truncf %41 : vector<64x32xf32> to vector<64x32xbf16>
    %c0_64 = arith.constant 0 : index
    %c0_65 = arith.constant 0 : index
    %50 = vector.load %arg6[%c0_64, %c0_65] : memref<32x128xbf16, #tpu.memory_space<vmem>>, vector<32x128xbf16>
    %cst_66 = arith.constant dense<0.000000e+00> : vector<64x128xf32>
    %51 = tpu.matmul %49, %50, %cst_66 {dimension_numbers = #tpu.dot_dimension_numbers<[1], [0], [0], [1], [0, 0, 1, 1], [], []>} : vector<64x32xbf16>, vector<32x128xbf16>, vector<64x128xf32> -> vector<64x128xf32>
    %c0_67 = arith.constant 0 : index
    %c0_68 = arith.constant 0 : index
    %52 = vector.load %arg7[%c0_67, %c0_68] : memref<1x128xf32, #tpu.memory_space<vmem>>, vector<1x128xf32>
    %53 = vector.broadcast %52 : vector<1x128xf32> to vector<64x128xf32>
    %54 = arith.addf %51, %53 : vector<64x128xf32>
    %55 = arith.addf %54, %48 : vector<64x128xf32>
    %cst_69 = arith.constant 0.000000e+00 : f32
    %56 = vector.broadcast %cst_69 : f32 to vector<64x128xf32>
    %57 = arith.maximumf %55, %56 : vector<64x128xf32>
    %58 = arith.truncf %57 : vector<64x128xf32> to vector<64x128xbf16>
    %c0_70 = arith.constant 0 : index
    %c0_71 = arith.constant 0 : index
    %59 = vector.load %arg10[%c0_70, %c0_71] : memref<128x32xbf16, #tpu.memory_space<vmem>>, vector<128x32xbf16>
    %cst_72 = arith.constant dense<0.000000e+00> : vector<64x32xf32>
    %60 = tpu.matmul %58, %59, %cst_72 {dimension_numbers = #tpu.dot_dimension_numbers<[1], [0], [0], [1], [0, 0, 1, 1], [], []>} : vector<64x128xbf16>, vector<128x32xbf16>, vector<64x32xf32> -> vector<64x32xf32>
    %c0_73 = arith.constant 0 : index
    %c0_74 = arith.constant 0 : index
    %61 = vector.load %arg11[%c0_73, %c0_74] : memref<1x32xf32, #tpu.memory_space<vmem>>, vector<1x32xf32>
    %62 = vector.broadcast %61 : vector<1x32xf32> to vector<64x32xf32>
    %63 = arith.addf %60, %62 : vector<64x32xf32>
    %cst_75 = arith.constant 0.000000e+00 : f32
    %64 = vector.broadcast %cst_75 : f32 to vector<64x32xf32>
    %65 = arith.maximumf %63, %64 : vector<64x32xf32>
    %cst_76 = arith.constant 0.000000e+00 : f32
    %66 = vector.broadcast %cst_76 : f32 to vector<2x6x10x32xf32>
    %c0_77 = arith.constant 0 : index
    %c0_78 = arith.constant 0 : index
    %c0_79 = arith.constant 0 : index
    %c0_80 = arith.constant 0 : index
    %67 = vector.load %arg24[%c0_77, %c0_78, %c0_79, %c0_80] : memref<2x6x10x32xf32, #tpu.memory_space<vmem>>, vector<2x6x10x32xf32>
    tpu.vector_store %arg24[%c0_77, %c0_78, %c0_79, %c0_80], %66 {strides = array<i32>} : memref<2x6x10x32xf32, #tpu.memory_space<vmem>>, vector<2x6x10x32xf32>,
    %68 = vector.shape_cast %65 : vector<64x32xf32> to vector<2x4x8x32xf32>
    %c0_81 = arith.constant 0 : index
    %c1_82 = arith.constant 1 : index
    %c1_83 = arith.constant 1 : index
    %c0_84 = arith.constant 0 : index
    %69 = vector.load %arg24[%c0_81, %c1_82, %c1_83, %c0_84] : memref<2x6x10x32xf32, #tpu.memory_space<vmem>>, vector<2x4x8x32xf32>
    tpu.vector_store %arg24[%c0_81, %c1_82, %c1_83, %c0_84], %68 {strides = array<i32>} : memref<2x6x10x32xf32, #tpu.memory_space<vmem>>, vector<2x4x8x32xf32>,
    %c0_85 = arith.constant 0 : index
    %c0_86 = arith.constant 0 : index
    %c0_87 = arith.constant 0 : index
    %c0_88 = arith.constant 0 : index
    %70 = vector.load %arg24[%c0_85, %c0_86, %c0_87, %c0_88] : memref<2x6x10x32xf32, #tpu.memory_space<vmem>>, vector<2x4x8x32xf32>
    %71 = vector.shape_cast %70 : vector<2x4x8x32xf32> to vector<64x32xf32>
    %c0_89 = arith.constant 0 : index
    %c1_90 = arith.constant 1 : index
    %c0_91 = arith.constant 0 : index
    %c0_92 = arith.constant 0 : index
    %72 = vector.load %arg24[%c0_89, %c1_90, %c0_91, %c0_92] : memref<2x6x10x32xf32, #tpu.memory_space<vmem>>, vector<2x4x8x32xf32>
    %73 = vector.shape_cast %72 : vector<2x4x8x32xf32> to vector<64x32xf32>
    %c0_93 = arith.constant 0 : index
    %c2_94 = arith.constant 2 : index
    %c0_95 = arith.constant 0 : index
    %c0_96 = arith.constant 0 : index
    %74 = vector.load %arg24[%c0_93, %c2_94, %c0_95, %c0_96] : memref<2x6x10x32xf32, #tpu.memory_space<vmem>>, vector<2x4x8x32xf32>
    %75 = vector.shape_cast %74 : vector<2x4x8x32xf32> to vector<64x32xf32>
    %c0_97 = arith.constant 0 : index
    %c0_98 = arith.constant 0 : index
    %c1_99 = arith.constant 1 : index
    %c0_100 = arith.constant 0 : index
    %76 = vector.load %arg24[%c0_97, %c0_98, %c1_99, %c0_100] : memref<2x6x10x32xf32, #tpu.memory_space<vmem>>, vector<2x4x8x32xf32>
    %77 = vector.shape_cast %76 : vector<2x4x8x32xf32> to vector<64x32xf32>
    %c0_101 = arith.constant 0 : index
    %c1_102 = arith.constant 1 : index
    %c1_103 = arith.constant 1 : index
    %c0_104 = arith.constant 0 : index
    %78 = vector.load %arg24[%c0_101, %c1_102, %c1_103, %c0_104] : memref<2x6x10x32xf32, #tpu.memory_space<vmem>>, vector<2x4x8x32xf32>
    %79 = vector.shape_cast %78 : vector<2x4x8x32xf32> to vector<64x32xf32>
    %c0_105 = arith.constant 0 : index
    %c2_106 = arith.constant 2 : index
    %c1_107 = arith.constant 1 : index
    %c0_108 = arith.constant 0 : index
    %80 = vector.load %arg24[%c0_105, %c2_106, %c1_107, %c0_108] : memref<2x6x10x32xf32, #tpu.memory_space<vmem>>, vector<2x4x8x32xf32>
    %81 = vector.shape_cast %80 : vector<2x4x8x32xf32> to vector<64x32xf32>
    %c0_109 = arith.constant 0 : index
    %c0_110 = arith.constant 0 : index
    %c2_111 = arith.constant 2 : index
    %c0_112 = arith.constant 0 : index
    %82 = vector.load %arg24[%c0_109, %c0_110, %c2_111, %c0_112] : memref<2x6x10x32xf32, #tpu.memory_space<vmem>>, vector<2x4x8x32xf32>
    %83 = vector.shape_cast %82 : vector<2x4x8x32xf32> to vector<64x32xf32>
    %c0_113 = arith.constant 0 : index
    %c1_114 = arith.constant 1 : index
    %c2_115 = arith.constant 2 : index
    %c0_116 = arith.constant 0 : index
    %84 = vector.load %arg24[%c0_113, %c1_114, %c2_115, %c0_116] : memref<2x6x10x32xf32, #tpu.memory_space<vmem>>, vector<2x4x8x32xf32>
    %85 = vector.shape_cast %84 : vector<2x4x8x32xf32> to vector<64x32xf32>
    %c0_117 = arith.constant 0 : index
    %c2_118 = arith.constant 2 : index
    %c2_119 = arith.constant 2 : index
    %c0_120 = arith.constant 0 : index
    %86 = vector.load %arg24[%c0_117, %c2_118, %c2_119, %c0_120] : memref<2x6x10x32xf32, #tpu.memory_space<vmem>>, vector<2x4x8x32xf32>
    %87 = vector.shape_cast %86 : vector<2x4x8x32xf32> to vector<64x32xf32>
    %88 = tpu.concatenate %71, %73, %75, %77, %79, %81, %83, %85, %87 in 1 : vector<64x32xf32>, vector<64x32xf32>, vector<64x32xf32>, vector<64x32xf32>, vector<64x32xf32>, vector<64x32xf32>, vector<64x32xf32>, vector<64x32xf32>, vector<64x32xf32> -> vector<64x288xf32>
    %89 = arith.truncf %88 : vector<64x288xf32> to vector<64x288xbf16>
    %c0_121 = arith.constant 0 : index
    %c0_122 = arith.constant 0 : index
    %90 = vector.load %arg12[%c0_121, %c0_122] : memref<288x32xbf16, #tpu.memory_space<vmem>>, vector<288x32xbf16>
    %cst_123 = arith.constant dense<0.000000e+00> : vector<64x32xf32>
    %91 = tpu.matmul %89, %90, %cst_123 {dimension_numbers = #tpu.dot_dimension_numbers<[1], [0], [0], [1], [0, 0, 1, 1], [], []>} : vector<64x288xbf16>, vector<288x32xbf16>, vector<64x32xf32> -> vector<64x32xf32>
    %c0_124 = arith.constant 0 : index
    %c0_125 = arith.constant 0 : index
    %92 = vector.load %arg13[%c0_124, %c0_125] : memref<1x32xf32, #tpu.memory_space<vmem>>, vector<1x32xf32>
    %93 = vector.broadcast %92 : vector<1x32xf32> to vector<64x32xf32>
    %94 = arith.addf %91, %93 : vector<64x32xf32>
    %cst_126 = arith.constant 0.000000e+00 : f32
    %95 = vector.broadcast %cst_126 : f32 to vector<64x32xf32>
    %96 = arith.maximumf %94, %95 : vector<64x32xf32>
    %97 = arith.truncf %96 : vector<64x32xf32> to vector<64x32xbf16>
    %c0_127 = arith.constant 0 : index
    %c0_128 = arith.constant 0 : index
    %98 = vector.load %arg14[%c0_127, %c0_128] : memref<32x128xbf16, #tpu.memory_space<vmem>>, vector<32x128xbf16>
    %cst_129 = arith.constant dense<0.000000e+00> : vector<64x128xf32>
    %99 = tpu.matmul %97, %98, %cst_129 {dimension_numbers = #tpu.dot_dimension_numbers<[1], [0], [0], [1], [0, 0, 1, 1], [], []>} : vector<64x32xbf16>, vector<32x128xbf16>, vector<64x128xf32> -> vector<64x128xf32>
    %c0_130 = arith.constant 0 : index
    %c0_131 = arith.constant 0 : index
    %100 = vector.load %arg15[%c0_130, %c0_131] : memref<1x128xf32, #tpu.memory_space<vmem>>, vector<1x128xf32>
    %101 = vector.broadcast %100 : vector<1x128xf32> to vector<64x128xf32>
    %102 = arith.addf %99, %101 : vector<64x128xf32>
    %103 = arith.addf %102, %57 : vector<64x128xf32>
    %cst_132 = arith.constant 0.000000e+00 : f32
    %104 = vector.broadcast %cst_132 : f32 to vector<64x128xf32>
    %105 = arith.maximumf %103, %104 : vector<64x128xf32>
    %106 = arith.truncf %105 : vector<64x128xf32> to vector<64x128xbf16>
    %c0_133 = arith.constant 0 : index
    %c0_134 = arith.constant 0 : index
    %107 = vector.load %arg16[%c0_133, %c0_134] : memref<128x32xbf16, #tpu.memory_space<vmem>>, vector<128x32xbf16>
    %cst_135 = arith.constant dense<0.000000e+00> : vector<64x32xf32>
    %108 = tpu.matmul %106, %107, %cst_135 {dimension_numbers = #tpu.dot_dimension_numbers<[1], [0], [0], [1], [0, 0, 1, 1], [], []>} : vector<64x128xbf16>, vector<128x32xbf16>, vector<64x32xf32> -> vector<64x32xf32>
    %c0_136 = arith.constant 0 : index
    %c0_137 = arith.constant 0 : index
    %109 = vector.load %arg17[%c0_136, %c0_137] : memref<1x32xf32, #tpu.memory_space<vmem>>, vector<1x32xf32>
    %110 = vector.broadcast %109 : vector<1x32xf32> to vector<64x32xf32>
    %111 = arith.addf %108, %110 : vector<64x32xf32>
    %cst_138 = arith.constant 0.000000e+00 : f32
    %112 = vector.broadcast %cst_138 : f32 to vector<64x32xf32>
    %113 = arith.maximumf %111, %112 : vector<64x32xf32>
    %cst_139 = arith.constant 0.000000e+00 : f32
    %114 = vector.broadcast %cst_139 : f32 to vector<2x6x10x32xf32>
    %c0_140 = arith.constant 0 : index
    %c0_141 = arith.constant 0 : index
    %c0_142 = arith.constant 0 : index
    %c0_143 = arith.constant 0 : index
    %115 = vector.load %arg24[%c0_140, %c0_141, %c0_142, %c0_143] : memref<2x6x10x32xf32, #tpu.memory_space<vmem>>, vector<2x6x10x32xf32>
    tpu.vector_store %arg24[%c0_140, %c0_141, %c0_142, %c0_143], %114 {strides = array<i32>} : memref<2x6x10x32xf32, #tpu.memory_space<vmem>>, vector<2x6x10x32xf32>,
    %116 = vector.shape_cast %113 : vector<64x32xf32> to vector<2x4x8x32xf32>
    %c0_144 = arith.constant 0 : index
    %c1_145 = arith.constant 1 : index
    %c1_146 = arith.constant 1 : index
    %c0_147 = arith.constant 0 : index
    %117 = vector.load %arg24[%c0_144, %c1_145, %c1_146, %c0_147] : memref<2x6x10x32xf32, #tpu.memory_space<vmem>>, vector<2x4x8x32xf32>
    tpu.vector_store %arg24[%c0_144, %c1_145, %c1_146, %c0_147], %116 {strides = array<i32>} : memref<2x6x10x32xf32, #tpu.memory_space<vmem>>, vector<2x4x8x32xf32>,
    %c0_148 = arith.constant 0 : index
    %c0_149 = arith.constant 0 : index
    %c0_150 = arith.constant 0 : index
    %c0_151 = arith.constant 0 : index
    %118 = vector.load %arg24[%c0_148, %c0_149, %c0_150, %c0_151] : memref<2x6x10x32xf32, #tpu.memory_space<vmem>>, vector<2x4x8x32xf32>
    %119 = vector.shape_cast %118 : vector<2x4x8x32xf32> to vector<64x32xf32>
    %c0_152 = arith.constant 0 : index
    %c1_153 = arith.constant 1 : index
    %c0_154 = arith.constant 0 : index
    %c0_155 = arith.constant 0 : index
    %120 = vector.load %arg24[%c0_152, %c1_153, %c0_154, %c0_155] : memref<2x6x10x32xf32, #tpu.memory_space<vmem>>, vector<2x4x8x32xf32>
    %121 = vector.shape_cast %120 : vector<2x4x8x32xf32> to vector<64x32xf32>
    %c0_156 = arith.constant 0 : index
    %c2_157 = arith.constant 2 : index
    %c0_158 = arith.constant 0 : index
    %c0_159 = arith.constant 0 : index
    %122 = vector.load %arg24[%c0_156, %c2_157, %c0_158, %c0_159] : memref<2x6x10x32xf32, #tpu.memory_space<vmem>>, vector<2x4x8x32xf32>
    %123 = vector.shape_cast %122 : vector<2x4x8x32xf32> to vector<64x32xf32>
    %c0_160 = arith.constant 0 : index
    %c0_161 = arith.constant 0 : index
    %c1_162 = arith.constant 1 : index
    %c0_163 = arith.constant 0 : index
    %124 = vector.load %arg24[%c0_160, %c0_161, %c1_162, %c0_163] : memref<2x6x10x32xf32, #tpu.memory_space<vmem>>, vector<2x4x8x32xf32>
    %125 = vector.shape_cast %124 : vector<2x4x8x32xf32> to vector<64x32xf32>
    %c0_164 = arith.constant 0 : index
    %c1_165 = arith.constant 1 : index
    %c1_166 = arith.constant 1 : index
    %c0_167 = arith.constant 0 : index
    %126 = vector.load %arg24[%c0_164, %c1_165, %c1_166, %c0_167] : memref<2x6x10x32xf32, #tpu.memory_space<vmem>>, vector<2x4x8x32xf32>
    %127 = vector.shape_cast %126 : vector<2x4x8x32xf32> to vector<64x32xf32>
    %c0_168 = arith.constant 0 : index
    %c2_169 = arith.constant 2 : index
    %c1_170 = arith.constant 1 : index
    %c0_171 = arith.constant 0 : index
    %128 = vector.load %arg24[%c0_168, %c2_169, %c1_170, %c0_171] : memref<2x6x10x32xf32, #tpu.memory_space<vmem>>, vector<2x4x8x32xf32>
    %129 = vector.shape_cast %128 : vector<2x4x8x32xf32> to vector<64x32xf32>
    %c0_172 = arith.constant 0 : index
    %c0_173 = arith.constant 0 : index
    %c2_174 = arith.constant 2 : index
    %c0_175 = arith.constant 0 : index
    %130 = vector.load %arg24[%c0_172, %c0_173, %c2_174, %c0_175] : memref<2x6x10x32xf32, #tpu.memory_space<vmem>>, vector<2x4x8x32xf32>
    %131 = vector.shape_cast %130 : vector<2x4x8x32xf32> to vector<64x32xf32>
    %c0_176 = arith.constant 0 : index
    %c1_177 = arith.constant 1 : index
    %c2_178 = arith.constant 2 : index
    %c0_179 = arith.constant 0 : index
    %132 = vector.load %arg24[%c0_176, %c1_177, %c2_178, %c0_179] : memref<2x6x10x32xf32, #tpu.memory_space<vmem>>, vector<2x4x8x32xf32>
    %133 = vector.shape_cast %132 : vector<2x4x8x32xf32> to vector<64x32xf32>
    %c0_180 = arith.constant 0 : index
    %c2_181 = arith.constant 2 : index
    %c2_182 = arith.constant 2 : index
    %c0_183 = arith.constant 0 : index
    %134 = vector.load %arg24[%c0_180, %c2_181, %c2_182, %c0_183] : memref<2x6x10x32xf32, #tpu.memory_space<vmem>>, vector<2x4x8x32xf32>
    %135 = vector.shape_cast %134 : vector<2x4x8x32xf32> to vector<64x32xf32>
    %136 = tpu.concatenate %119, %121, %123, %125, %127, %129, %131, %133, %135 in 1 : vector<64x32xf32>, vector<64x32xf32>, vector<64x32xf32>, vector<64x32xf32>, vector<64x32xf32>, vector<64x32xf32>, vector<64x32xf32>, vector<64x32xf32>, vector<64x32xf32> -> vector<64x288xf32>
    %137 = arith.truncf %136 : vector<64x288xf32> to vector<64x288xbf16>
    %c0_184 = arith.constant 0 : index
    %c0_185 = arith.constant 0 : index
    %138 = vector.load %arg18[%c0_184, %c0_185] : memref<288x32xbf16, #tpu.memory_space<vmem>>, vector<288x32xbf16>
    %cst_186 = arith.constant dense<0.000000e+00> : vector<64x32xf32>
    %139 = tpu.matmul %137, %138, %cst_186 {dimension_numbers = #tpu.dot_dimension_numbers<[1], [0], [0], [1], [0, 0, 1, 1], [], []>} : vector<64x288xbf16>, vector<288x32xbf16>, vector<64x32xf32> -> vector<64x32xf32>
    %c0_187 = arith.constant 0 : index
    %c0_188 = arith.constant 0 : index
    %140 = vector.load %arg19[%c0_187, %c0_188] : memref<1x32xf32, #tpu.memory_space<vmem>>, vector<1x32xf32>
    %141 = vector.broadcast %140 : vector<1x32xf32> to vector<64x32xf32>
    %142 = arith.addf %139, %141 : vector<64x32xf32>
    %cst_189 = arith.constant 0.000000e+00 : f32
    %143 = vector.broadcast %cst_189 : f32 to vector<64x32xf32>
    %144 = arith.maximumf %142, %143 : vector<64x32xf32>
    %145 = arith.truncf %144 : vector<64x32xf32> to vector<64x32xbf16>
    %c0_190 = arith.constant 0 : index
    %c0_191 = arith.constant 0 : index
    %146 = vector.load %arg20[%c0_190, %c0_191] : memref<32x128xbf16, #tpu.memory_space<vmem>>, vector<32x128xbf16>
    %cst_192 = arith.constant dense<0.000000e+00> : vector<64x128xf32>
    %147 = tpu.matmul %145, %146, %cst_192 {dimension_numbers = #tpu.dot_dimension_numbers<[1], [0], [0], [1], [0, 0, 1, 1], [], []>} : vector<64x32xbf16>, vector<32x128xbf16>, vector<64x128xf32> -> vector<64x128xf32>
    %c0_193 = arith.constant 0 : index
    %c0_194 = arith.constant 0 : index
    %148 = vector.load %arg21[%c0_193, %c0_194] : memref<1x128xf32, #tpu.memory_space<vmem>>, vector<1x128xf32>
    %149 = vector.broadcast %148 : vector<1x128xf32> to vector<64x128xf32>
    %150 = arith.addf %147, %149 : vector<64x128xf32>
    %151 = arith.addf %150, %105 : vector<64x128xf32>
    %cst_195 = arith.constant 0.000000e+00 : f32
    %152 = vector.broadcast %cst_195 : f32 to vector<64x128xf32>
    %153 = arith.maximumf %151, %152 : vector<64x128xf32>
    %c0_196 = arith.constant 0 : index
    %c0_197 = arith.constant 0 : index
    %154 = vector.load %arg22[%c0_196, %c0_197] : memref<64x128xf32, #tpu.memory_space<vmem>>, vector<64x128xf32>
    tpu.vector_store %arg22[%c0_196, %c0_197], %153 {strides = array<i32>} : memref<64x128xf32, #tpu.memory_space<vmem>>, vector<64x128xf32>,
    return
  }
}

</mosaic_0001>

<llo_original>
// kernel: encoder_forward.1
$region0: #{encoder_forward.1}
  #allocation0 [shape = 'u32[]', space=smem, size = 0x4, offset = 0x4, fixed_abs, tag = 'smem constant byte address 0x4 - core index']
  #allocation1 [shape = 'u32[144,128]{1,0:T(1,128)}', space=vmem, size = 0x12000, scoped, tag = 'internal scratch']
  #allocation2 [shape = 'f32[2,10,18,32]{3,2,1,0:T(8,128)}', space=vmem, size = 0x3c000, scoped, tag = 'scratch operand']
  #allocation3 [shape = 'f32[2,6,10,32]{3,2,1,0:T(8,128)}', space=vmem, size = 0x18000, scoped, tag = 'scratch operand']
  %s0 = inlined_call_operand.vmem [shape: bf16[256,64], index: 0, kind: input, shape index: {}]
  %s1 = inlined_call_operand.vmem [shape: bf16[64,256], index: 1, kind: input, shape index: {}]
  %s2 = inlined_call_operand.vmem [shape: bf16[64,32], index: 2, kind: input, shape index: {}]
  %s3 = inlined_call_operand.vmem [shape: f32[1,32], index: 3, kind: input, shape index: {}]
  %s4 = inlined_call_operand.vmem [shape: bf16[288,32], index: 4, kind: input, shape index: {}]
  %s5 = inlined_call_operand.vmem [shape: f32[1,32], index: 5, kind: input, shape index: {}]
  %s6 = inlined_call_operand.vmem [shape: bf16[32,128], index: 6, kind: input, shape index: {}]
  %s7 = inlined_call_operand.vmem [shape: f32[1,128], index: 7, kind: input, shape index: {}]
  %s8 = inlined_call_operand.vmem [shape: bf16[64,128], index: 8, kind: input, shape index: {}]
  %s9 = inlined_call_operand.vmem [shape: f32[1,128], index: 9, kind: input, shape index: {}]
  %s10 = inlined_call_operand.vmem [shape: bf16[128,32], index: 10, kind: input, shape index: {}]
  %s11 = inlined_call_operand.vmem [shape: f32[1,32], index: 11, kind: input, shape index: {}]
  %s12 = inlined_call_operand.vmem [shape: bf16[288,32], index: 12, kind: input, shape index: {}]
  %s13 = inlined_call_operand.vmem [shape: f32[1,32], index: 13, kind: input, shape index: {}]
  %s14 = inlined_call_operand.vmem [shape: bf16[32,128], index: 14, kind: input, shape index: {}]
  %s15 = inlined_call_operand.vmem [shape: f32[1,128], index: 15, kind: input, shape index: {}]
  %s16 = inlined_call_operand.vmem [shape: bf16[128,32], index: 16, kind: input, shape index: {}]
  %s17 = inlined_call_operand.vmem [shape: f32[1,32], index: 17, kind: input, shape index: {}]
  %s18 = inlined_call_operand.vmem [shape: bf16[288,32], index: 18, kind: input, shape index: {}]
  %s19 = inlined_call_operand.vmem [shape: f32[1,32], index: 19, kind: input, shape index: {}]
  %s20 = inlined_call_operand.vmem [shape: bf16[32,128], index: 20, kind: input, shape index: {}]
  %s21 = inlined_call_operand.vmem [shape: f32[1,128], index: 21, kind: input, shape index: {}]
  %s22 = inlined_call_operand.vmem [shape: f32[64,128], index: 22, kind: output, shape index: {}]
  %s23 = sld [smem:[#allocation0]]
  $region98: #{encoder_forward.1} parent=0
    _
  %s25 = ssub.s32 1, %s23
  %s26 = scalar_select 0, %s25, %s23
  // Predicated region
  $region2: #{encoder_forward.1} parent=0 // pred_check
    _
  $region3: #{encoder_forward.1} parent=0 // pred_check_branch
    %28 = sbr.rel (0) target = $region5
  $region4: #{encoder_forward.1} parent=0 // pred_region
    _
  $region5: #{encoder_forward.1} parent=0 // pred_fallthru
    _
  // Predicated region
  $region6: #{encoder_forward.1} parent=0 // pred_check
    _
  $region7: #{encoder_forward.1} parent=0 // pred_check_branch
    %30 = sbr.rel (0) target = $region9
  $region8: #{encoder_forward.1} parent=0 // pred_region
    _
  $region9: #{encoder_forward.1} parent=0 // pred_fallthru
    _
  // Predicated region
  $region10: #{encoder_forward.1} parent=0 // pred_check
    _
  $region11: #{encoder_forward.1} parent=0 // pred_check_branch
    %32 = sbr.rel (0) target = $region13
  $region12: #{encoder_forward.1} parent=0 // pred_region
    _
  $region13: #{encoder_forward.1} parent=0 // pred_fallthru
    _
  // Predicated region
  $region14: #{encoder_forward.1} parent=0 // pred_check
    _
  $region15: #{encoder_forward.1} parent=0 // pred_check_branch
    %34 = sbr.rel (0) target = $region17
  $region16: #{encoder_forward.1} parent=0 // pred_region
    _
  $region17: #{encoder_forward.1} parent=0 // pred_fallthru
    _
  // Predicated region
  $region18: #{encoder_forward.1} parent=0 // pred_check
    _
  $region19: #{encoder_forward.1} parent=0 // pred_check_branch
    %36 = sbr.rel (0) target = $region21
  $region20: #{encoder_forward.1} parent=0 // pred_region
    _
  $region21: #{encoder_forward.1} parent=0 // pred_fallthru
    _
  // Predicated region
  $region22: #{encoder_forward.1} parent=0 // pred_check
    _
  $region23: #{encoder_forward.1} parent=0 // pred_check_branch
    %38 = sbr.rel (0) target = $region25
  $region24: #{encoder_forward.1} parent=0 // pred_region
    _
  $region25: #{encoder_forward.1} parent=0 // pred_fallthru
    _
  // Predicated region
  $region26: #{encoder_forward.1} parent=0 // pred_check
    _
  $region27: #{encoder_forward.1} parent=0 // pred_check_branch
    %40 = sbr.rel (0) target = $region29
  $region28: #{encoder_forward.1} parent=0 // pred_region
    _
  $region29: #{encoder_forward.1} parent=0 // pred_fallthru
    _
  // Predicated region
  $region30: #{encoder_forward.1} parent=0 // pred_check
    _
  $region31: #{encoder_forward.1} parent=0 // pred_check_branch
    %42 = sbr.rel (0) target = $region33
  $region32: #{encoder_forward.1} parent=0 // pred_region
    _
  $region33: #{encoder_forward.1} parent=0 // pred_fallthru
    _
  // Predicated region
  $region34: #{encoder_forward.1} parent=0 // pred_check
    _
  $region35: #{encoder_forward.1} parent=0 // pred_check_branch
    %44 = sbr.rel (0) target = $region37
  $region36: #{encoder_forward.1} parent=0 // pred_region
    _
  $region37: #{encoder_forward.1} parent=0 // pred_fallthru
    _
  // Predicated region
  $region38: #{encoder_forward.1} parent=0 // pred_check
    _
  $region39: #{encoder_forward.1} parent=0 // pred_check_branch
    %46 = sbr.rel (0) target = $region41
  $region40: #{encoder_forward.1} parent=0 // pred_region
    _
  $region41: #{encoder_forward.1} parent=0 // pred_fallthru
    _
  // Predicated region
  $region42: #{encoder_forward.1} parent=0 // pred_check
    _
  $region43: #{encoder_forward.1} parent=0 // pred_check_branch
    %48 = sbr.rel (0) target = $region45
  $region44: #{encoder_forward.1} parent=0 // pred_region
    _
  $region45: #{encoder_forward.1} parent=0 // pred_fallthru
    _
  // Predicated region
  $region46: #{encoder_forward.1} parent=0 // pred_check
    _
  $region47: #{encoder_forward.1} parent=0 // pred_check_branch
    %50 = sbr.rel (0) target = $region49
  $region48: #{encoder_forward.1} parent=0 // pred_region
    _
  $region49: #{encoder_forward.1} parent=0 // pred_fallthru
    _
  // Predicated region
  $region50: #{encoder_forward.1} parent=0 // pred_check
    _
  $region51: #{encoder_forward.1} parent=0 // pred_check_branch
    %52 = sbr.rel (0) target = $region53
  $region52: #{encoder_forward.1} parent=0 // pred_region
    _
  $region53: #{encoder_forward.1} parent=0 // pred_fallthru
    _
  // Predicated region
  $region54: #{encoder_forward.1} parent=0 // pred_check
    _
  $region55: #{encoder_forward.1} parent=0 // pred_check_branch
    %54 = sbr.rel (0) target = $region57
  $region56: #{encoder_forward.1} parent=0 // pred_region
    _
  $region57: #{encoder_forward.1} parent=0 // pred_fallthru
    _
  // Predicated region
  $region58: #{encoder_forward.1} parent=0 // pred_check
    _
  $region59: #{encoder_forward.1} parent=0 // pred_check_branch
    %56 = sbr.rel (0) target = $region61
  $region60: #{encoder_forward.1} parent=0 // pred_region
    _
  $region61: #{encoder_forward.1} parent=0 // pred_fallthru
    _
  // Predicated region
  $region62: #{encoder_forward.1} parent=0 // pred_check
    _
  $region63: #{encoder_forward.1} parent=0 // pred_check_branch
    %58 = sbr.rel (0) target = $region65
  $region64: #{encoder_forward.1} parent=0 // pred_region
    _
  $region65: #{encoder_forward.1} parent=0 // pred_fallthru
    _
  // Predicated region
  $region66: #{encoder_forward.1} parent=0 // pred_check
    _
  $region67: #{encoder_forward.1} parent=0 // pred_check_branch
    %60 = sbr.rel (0) target = $region69
  $region68: #{encoder_forward.1} parent=0 // pred_region
    _
  $region69: #{encoder_forward.1} parent=0 // pred_fallthru
    _
  // Predicated region
  $region70: #{encoder_forward.1} parent=0 // pred_check
    _
  $region71: #{encoder_forward.1} parent=0 // pred_check_branch
    %62 = sbr.rel (0) target = $region73
  $region72: #{encoder_forward.1} parent=0 // pred_region
    _
  $region73: #{encoder_forward.1} parent=0 // pred_fallthru
    _
  // Predicated region
  $region74: #{encoder_forward.1} parent=0 // pred_check
    _
  $region75: #{encoder_forward.1} parent=0 // pred_check_branch
    %64 = sbr.rel (0) target = $region77
  $region76: #{encoder_forward.1} parent=0 // pred_region
    _
  $region77: #{encoder_forward.1} parent=0 // pred_fallthru
    _
  // Predicated region
  $region78: #{encoder_forward.1} parent=0 // pred_check
    _
  $region79: #{encoder_forward.1} parent=0 // pred_check_branch
    %66 = sbr.rel (0) target = $region81
  $region80: #{encoder_forward.1} parent=0 // pred_region
    _
  $region81: #{encoder_forward.1} parent=0 // pred_fallthru
    _
  // Predicated region
  $region82: #{encoder_forward.1} parent=0 // pred_check
    _
  $region83: #{encoder_forward.1} parent=0 // pred_check_branch
    %68 = sbr.rel (0) target = $region85
  $region84: #{encoder_forward.1} parent=0 // pred_region
    _
  $region85: #{encoder_forward.1} parent=0 // pred_fallthru
    _
  // Predicated region
  $region86: #{encoder_forward.1} parent=0 // pred_check
    _
  $region87: #{encoder_forward.1} parent=0 // pred_check_branch
    %70 = sbr.rel (0) target = $region89
  $region88: #{encoder_forward.1} parent=0 // pred_region
    _
  $region89: #{encoder_forward.1} parent=0 // pred_fallthru
    _
  %v72 = vld [vmem:[%s0] sm:$0xf]
  %v73 = vld [vmem:[%s0 + $0x4] sm:$0xf]
  %v74 = vld [vmem:[%s0 + $0x8] sm:$0xf]
  %v75 = vld [vmem:[%s0 + $0xc] sm:$0xf]
  %v76 = vld [vmem:[%s0 + $0x10] sm:$0xf]
  %v77 = vld [vmem:[%s0 + $0x14] sm:$0xf]
  %v78 = vld [vmem:[%s0 + $0x18] sm:$0xf]
  %v79 = vld [vmem:[%s0 + $0x1c] sm:$0xf]
  %v80 = vld [vmem:[%s0 + $0x20] sm:$0xf]
  %v81 = vld [vmem:[%s0 + $0x24] sm:$0xf]
  %v82 = vld [vmem:[%s0 + $0x28] sm:$0xf]
  %v83 = vld [vmem:[%s0 + $0x2c] sm:$0xf]
  %v84 = vld [vmem:[%s0 + $0x30] sm:$0xf]
  %v85 = vld [vmem:[%s0 + $0x34] sm:$0xf]
  %v86 = vld [vmem:[%s0 + $0x38] sm:$0xf]
  %v87 = vld [vmem:[%s0 + $0x3c] sm:$0xf]
  %v88 = vld [vmem:[%s0 + $0x40] sm:$0xf]
  %v89 = vld [vmem:[%s0 + $0x44] sm:$0xf]
  %v90 = vld [vmem:[%s0 + $0x48] sm:$0xf]
  %v91 = vld [vmem:[%s0 + $0x4c] sm:$0xf]
  %v92 = vld [vmem:[%s0 + $0x50] sm:$0xf]
  %v93 = vld [vmem:[%s0 + $0x54] sm:$0xf]
  %v94 = vld [vmem:[%s0 + $0x58] sm:$0xf]
  %v95 = vld [vmem:[%s0 + $0x5c] sm:$0xf]
  %v96 = vld [vmem:[%s0 + $0x60] sm:$0xf]
  %v97 = vld [vmem:[%s0 + $0x64] sm:$0xf]
  %v98 = vld [vmem:[%s0 + $0x68] sm:$0xf]
  %v99 = vld [vmem:[%s0 + $0x6c] sm:$0xf]
  %v100 = vld [vmem:[%s0 + $0x70] sm:$0xf]
  %v101 = vld [vmem:[%s0 + $0x74] sm:$0xf]
  %v102 = vld [vmem:[%s0 + $0x78] sm:$0xf]
  %v103 = vld [vmem:[%s0 + $0x7c] sm:$0xf]
  %v104 = vld [vmem:[%s1] sm:$0xff]
  %v105 = vld [vmem:[%s1 + $0x8] sm:$0xff]
  %v106 = vld [vmem:[%s1 + $0x10] sm:$0xff]
  %v107 = vld [vmem:[%s1 + $0x18] sm:$0xff]
  %v108 = vld [vmem:[%s1 + $0x20] sm:$0xff]
  %v109 = vld [vmem:[%s1 + $0x28] sm:$0xff]
  %v110 = vld [vmem:[%s1 + $0x30] sm:$0xff]
  %v111 = vld [vmem:[%s1 + $0x38] sm:$0xff]
  %v112 = vld [vmem:[%s2] sm:$0xf]
  %v113 = vld [vmem:[%s2 + $0x4] sm:$0xf]
  %v114 = vld [vmem:[%s2 + $0x8] sm:$0xf]
  %v115 = vld [vmem:[%s2 + $0xc] sm:$0xf]
  %v116 = vld [vmem:[%s2 + $0x10] sm:$0xf]
  %v117 = vld [vmem:[%s2 + $0x14] sm:$0xf]
  %v118 = vld [vmem:[%s2 + $0x18] sm:$0xf]
  %v119 = vld [vmem:[%s2 + $0x1c] sm:$0xf]
  %v120 = vld [vmem:[%s3] sm:$0x1]
  %v122 = vlaneseq
  %v123 = vshrl.u32 %v122, 7
  %v124 = vsub.s32 0, %v123
  %v125 = vrot.slane %v120, %v124
  %v159 = vunpack.c.l.b16 %v72
  %v160 = vunpack.c.l.b16 %v73
  %v161 = vunpack.c.l.b16 %v74
  %v162 = vunpack.c.l.b16 %v75
  %v163 = vunpack.c.l.b16 %v76
  %v164 = vunpack.c.l.b16 %v77
  %v165 = vunpack.c.l.b16 %v78
  %v166 = vunpack.c.l.b16 %v79
  %v167 = vunpack.c.l.b16 %v80
  %v168 = vunpack.c.l.b16 %v81
  %v169 = vunpack.c.l.b16 %v82
  %v170 = vunpack.c.l.b16 %v83
  %v171 = vunpack.c.l.b16 %v84
  %v172 = vunpack.c.l.b16 %v85
  %v173 = vunpack.c.l.b16 %v86
  %v174 = vunpack.c.l.b16 %v87
  %v175 = vunpack.c.l.b16 %v88
  %v176 = vunpack.c.l.b16 %v89
  %v177 = vunpack.c.l.b16 %v90
  %v178 = vunpack.c.l.b16 %v91
  %v179 = vunpack.c.l.b16 %v92
  %v180 = vunpack.c.l.b16 %v93
  %v181 = vunpack.c.l.b16 %v94
  %v182 = vunpack.c.l.b16 %v95
  %v183 = vunpack.c.l.b16 %v96
  %v184 = vunpack.c.l.b16 %v97
  %v185 = vunpack.c.l.b16 %v98
  %v186 = vunpack.c.l.b16 %v99
  %v187 = vunpack.c.l.b16 %v100
  %v188 = vunpack.c.l.b16 %v101
  %v189 = vunpack.c.l.b16 %v102
  %v190 = vunpack.c.l.b16 %v103
  %v191 = vpack.c.b16 %v160, %v159
  %v192 = vpack.c.b16 %v162, %v161
  %v193 = vpack.c.b16 %v164, %v163
  %v194 = vpack.c.b16 %v166, %v165
  %v195 = vpack.c.b16 %v168, %v167
  %v196 = vpack.c.b16 %v170, %v169
  %v197 = vpack.c.b16 %v172, %v171
  %v198 = vpack.c.b16 %v174, %v173
  %v199 = vpack.c.b16 %v176, %v175
  %v200 = vpack.c.b16 %v178, %v177
  %v201 = vpack.c.b16 %v180, %v179
  %v202 = vpack.c.b16 %v182, %v181
  %v203 = vpack.c.b16 %v184, %v183
  %v204 = vpack.c.b16 %v186, %v185
  %v205 = vpack.c.b16 %v188, %v187
  %v206 = vpack.c.b16 %v190, %v189
  %v215 = vunpack.c.l.b16 %v112
  %v216 = vunpack.c.l.b16 %v113
  %v217 = vunpack.c.l.b16 %v114
  %v218 = vunpack.c.l.b16 %v115
  %v219 = vunpack.c.l.b16 %v116
  %v220 = vunpack.c.l.b16 %v117
  %v221 = vunpack.c.l.b16 %v118
  %v222 = vunpack.c.l.b16 %v119
  %v223 = vpack.c.b16 %v216, %v215
  %v224 = vpack.c.b16 %v218, %v217
  %v225 = vpack.c.b16 %v220, %v219
  %v226 = vpack.c.b16 %v222, %v221
  %vm231 = vcmask 523264
  %v233 = vsel %vm231, %v191, 0
  %v236 = vsel %vm231, %v192, 0
  %v239 = vsel %vm231, %v193, 0
  %v242 = vsel %vm231, %v194, 0
  %v245 = vsel %vm231, %v195, 0
  %v248 = vsel %vm231, %v196, 0
  %v251 = vsel %vm231, %v197, 0
  %v254 = vsel %vm231, %v198, 0
  %v257 = vsel %vm231, %v199, 0
  %v260 = vsel %vm231, %v200, 0
  %v263 = vsel %vm231, %v201, 0
  %v266 = vsel %vm231, %v202, 0
  %v269 = vsel %vm231, %v203, 0
  %v272 = vsel %vm231, %v204, 0
  %v275 = vsel %vm231, %v205, 0
  %v278 = vsel %vm231, %v206, 0
  %280 = vmatprep.subr.bf16.mxu0 0
  %281 = vmatpush1.bf16.msra.mxu0 %v223
  %282 = vmatprep.subr.bf16.mxu0 0
  %283 = vmatpush1.bf16.msra.mxu0 %v224
  %284 = vmatprep.subr.bf16.mxu0 0
  %285 = vmatpush1.bf16.msra.mxu0 %v225
  %286 = vmatprep.subr.bf16.mxu0 0
  %287 = vmatpush1.bf16.msra.mxu0 %v226
  %288 = vmatprep.subr.bf16.mxu0 0
  %289 = vmatpush1.bf16.msra.mxu0 0
  %290 = vmatprep.subr.bf16.mxu0 0
  %291 = vmatpush1.bf16.msra.mxu0 0
  %292 = vmatprep.subr.bf16.mxu0 0
  %293 = vmatpush1.bf16.msra.mxu0 0
  %294 = vmatprep.subr.bf16.mxu0 0
  %295 = vmatpush1.bf16.msra.mxu0 0
  %296 = vmatprep.subr.bf16.mxu0 0
  %297 = vmatpush1.bf16.msra.mxu0 0
  %298 = vmatprep.subr.bf16.mxu0 0
  %299 = vmatpush1.bf16.msra.mxu0 0
  %300 = vmatprep.subr.bf16.mxu0 0
  %301 = vmatpush1.bf16.msra.mxu0 0
  %302 = vmatprep.subr.bf16.mxu0 0
  %303 = vmatpush1.bf16.msra.mxu0 0
  %304 = vmatprep.subr.bf16.mxu0 0
  %305 = vmatpush1.bf16.msra.mxu0 0
  %306 = vmatprep.subr.bf16.mxu0 0
  %307 = vmatpush1.bf16.msra.mxu0 0
  %308 = vmatprep.subr.bf16.mxu0 0
  %309 = vmatpush1.bf16.msra.mxu0 0
  %310 = vmatprep.subr.bf16.mxu0 0
  %311 = vmatpush1.bf16.msra.mxu0 0
  %312 = vmatprep.mubr.bf16.mxu0 0
  %313 = vmatmul.mubr.bf16.gmra.mrb[0].mxu0 %v233
  %v314 = vpop.f32.mrb[0].mxu0
  %v315 = vadd.f32 %v125, %v314
  %v316 = vpop.f32.mrb[0].mxu0
  %v317 = vpop.f32.mrb[0].mxu0
  %v318 = vadd.f32 %v125, %v317
  %v319 = vpop.f32.mrb[0].mxu0
  %320 = vmatprep.mubr.bf16.mxu0 0
  %321 = vmatmul.mubr.bf16.gmra.mrb[0].mxu0 %v236
  %v322 = vpop.f32.mrb[0].mxu0
  %v323 = vadd.f32 %v125, %v322
  %v324 = vpop.f32.mrb[0].mxu0
  %v325 = vpop.f32.mrb[0].mxu0
  %v326 = vadd.f32 %v125, %v325
  %v327 = vpop.f32.mrb[0].mxu0
  %328 = vmatprep.mubr.bf16.mxu0 0
  %329 = vmatmul.mubr.bf16.gmra.mrb[0].mxu0 %v239
  %v330 = vpop.f32.mrb[0].mxu0
  %v331 = vadd.f32 %v125, %v330
  %v332 = vpop.f32.mrb[0].mxu0
  %v333 = vpop.f32.mrb[0].mxu0
  %v334 = vadd.f32 %v125, %v333
  %v335 = vpop.f32.mrb[0].mxu0
  %336 = vmatprep.mubr.bf16.mxu0 0
  %337 = vmatmul.mubr.bf16.gmra.mrb[0].mxu0 %v242
  %v338 = vpop.f32.mrb[0].mxu0
  %v339 = vadd.f32 %v125, %v338
  %v340 = vpop.f32.mrb[0].mxu0
  %v341 = vpop.f32.mrb[0].mxu0
  %v342 = vadd.f32 %v125, %v341
  %v343 = vpop.f32.mrb[0].mxu0
  %344 = vmatprep.mubr.bf16.mxu0 0
  %345 = vmatmul.mubr.bf16.gmra.mrb[0].mxu0 %v245
  %v346 = vpop.f32.mrb[0].mxu0
  %v347 = vadd.f32 %v125, %v346
  %v348 = vpop.f32.mrb[0].mxu0
  %v349 = vpop.f32.mrb[0].mxu0
  %v350 = vadd.f32 %v125, %v349
  %v351 = vpop.f32.mrb[0].mxu0
  %352 = vmatprep.mubr.bf16.mxu0 0
  %353 = vmatmul.mubr.bf16.gmra.mrb[0].mxu0 %v248
  %v354 = vpop.f32.mrb[0].mxu0
  %v355 = vadd.f32 %v125, %v354
  %v356 = vpop.f32.mrb[0].mxu0
  %v357 = vpop.f32.mrb[0].mxu0
  %v358 = vadd.f32 %v125, %v357
  %v359 = vpop.f32.mrb[0].mxu0
  %360 = vmatprep.mubr.bf16.mxu0 0
  %361 = vmatmul.mubr.bf16.gmra.mrb[0].mxu0 %v251
  %v362 = vpop.f32.mrb[0].mxu0
  %v363 = vadd.f32 %v125, %v362
  %v364 = vpop.f32.mrb[0].mxu0
  %v365 = vpop.f32.mrb[0].mxu0
  %v366 = vadd.f32 %v125, %v365
  %v367 = vpop.f32.mrb[0].mxu0
  %368 = vmatprep.mubr.bf16.mxu0 0
  %369 = vmatmul.mubr.bf16.gmra.mrb[0].mxu0 %v254
  %v370 = vpop.f32.mrb[0].mxu0
  %v371 = vadd.f32 %v125, %v370
  %v372 = vpop.f32.mrb[0].mxu0
  %v373 = vpop.f32.mrb[0].mxu0
  %v374 = vadd.f32 %v125, %v373
  %v375 = vpop.f32.mrb[0].mxu0
  %376 = vmatprep.mubr.bf16.mxu0 0
  %377 = vmatmul.mubr.bf16.gmra.mrb[0].mxu0 %v257
  %v378 = vpop.f32.mrb[0].mxu0
  %v379 = vadd.f32 %v125, %v378
  %v380 = vpop.f32.mrb[0].mxu0
  %v381 = vpop.f32.mrb[0].mxu0
  %v382 = vadd.f32 %v125, %v381
  %v383 = vpop.f32.mrb[0].mxu0
  %384 = vmatprep.mubr.bf16.mxu0 0
  %385 = vmatmul.mubr.bf16.gmra.mrb[0].mxu0 %v260
  %v386 = vpop.f32.mrb[0].mxu0
  %v387 = vadd.f32 %v125, %v386
  %v388 = vpop.f32.mrb[0].mxu0
  %v389 = vpop.f32.mrb[0].mxu0
  %v390 = vadd.f32 %v125, %v389
  %v391 = vpop.f32.mrb[0].mxu0
  %392 = vmatprep.mubr.bf16.mxu0 0
  %393 = vmatmul.mubr.bf16.gmra.mrb[0].mxu0 %v263
  %v394 = vpop.f32.mrb[0].mxu0
  %v395 = vadd.f32 %v125, %v394
  %v396 = vpop.f32.mrb[0].mxu0
  %v397 = vpop.f32.mrb[0].mxu0
  %v398 = vadd.f32 %v125, %v397
  %v399 = vpop.f32.mrb[0].mxu0
  %400 = vmatprep.mubr.bf16.mxu0 0
  %401 = vmatmul.mubr.bf16.gmra.mrb[0].mxu0 %v266
  %v402 = vpop.f32.mrb[0].mxu0
  %v403 = vadd.f32 %v125, %v402
  %v404 = vpop.f32.mrb[0].mxu0
  %v405 = vpop.f32.mrb[0].mxu0
  %v406 = vadd.f32 %v125, %v405
  %v407 = vpop.f32.mrb[0].mxu0
  %408 = vmatprep.mubr.bf16.mxu0 0
  %409 = vmatmul.mubr.bf16.gmra.mrb[0].mxu0 %v269
  %v410 = vpop.f32.mrb[0].mxu0
  %v411 = vadd.f32 %v125, %v410
  %v412 = vpop.f32.mrb[0].mxu0
  %v413 = vpop.f32.mrb[0].mxu0
  %v414 = vadd.f32 %v125, %v413
  %v415 = vpop.f32.mrb[0].mxu0
  %416 = vmatprep.mubr.bf16.mxu0 0
  %417 = vmatmul.mubr.bf16.gmra.mrb[0].mxu0 %v272
  %v418 = vpop.f32.mrb[0].mxu0
  %v419 = vadd.f32 %v125, %v418
  %v420 = vpop.f32.mrb[0].mxu0
  %v421 = vpop.f32.mrb[0].mxu0
  %v422 = vadd.f32 %v125, %v421
  %v423 = vpop.f32.mrb[0].mxu0
  %424 = vmatprep.mubr.bf16.mxu0 0
  %425 = vmatmul.mubr.bf16.gmra.mrb[0].mxu0 %v275
  %v426 = vpop.f32.mrb[0].mxu0
  %v427 = vadd.f32 %v125, %v426
  %v428 = vpop.f32.mrb[0].mxu0
  %v429 = vpop.f32.mrb[0].mxu0
  %v430 = vadd.f32 %v125, %v429
  %v431 = vpop.f32.mrb[0].mxu0
  %432 = vmatprep.mubr.bf16.mxu0 0
  %433 = vmatmul.mubr.bf16.gmra.mrb[0].mxu0 %v278
  %v434 = vpop.f32.mrb[0].mxu0
  %v435 = vadd.f32 %v125, %v434
  %v436 = vpop.f32.mrb[0].mxu0
  %v437 = vpop.f32.mrb[0].mxu0
  %v438 = vadd.f32 %v125, %v437
  %v439 = vpop.f32.mrb[0].mxu0
  %440 = vdwg.mxu0
  %v441 = vmax.f32 %v315, 0.0
  %v442 = vmax.f32 %v318, 0.0
  %v443 = vmax.f32 %v323, 0.0
  %v444 = vmax.f32 %v326, 0.0
  %v445 = vmax.f32 %v331, 0.0
  %v446 = vmax.f32 %v334, 0.0
  %v447 = vmax.f32 %v339, 0.0
  %v448 = vmax.f32 %v342, 0.0
  %v449 = vmax.f32 %v347, 0.0
  %v450 = vmax.f32 %v350, 0.0
  %v451 = vmax.f32 %v355, 0.0
  %v452 = vmax.f32 %v358, 0.0
  %v453 = vmax.f32 %v363, 0.0
  %v454 = vmax.f32 %v366, 0.0
  %v455 = vmax.f32 %v371, 0.0
  %v456 = vmax.f32 %v374, 0.0
  %v457 = vmax.f32 %v379, 0.0
  %v458 = vmax.f32 %v382, 0.0
  %v459 = vmax.f32 %v387, 0.0
  %v460 = vmax.f32 %v390, 0.0
  %v461 = vmax.f32 %v395, 0.0
  %v462 = vmax.f32 %v398, 0.0
  %v463 = vmax.f32 %v403, 0.0
  %v464 = vmax.f32 %v406, 0.0
  %v465 = vmax.f32 %v411, 0.0
  %v466 = vmax.f32 %v414, 0.0
  %v467 = vmax.f32 %v419, 0.0
  %v468 = vmax.f32 %v422, 0.0
  %v469 = vmax.f32 %v427, 0.0
  %v470 = vmax.f32 %v430, 0.0
  %v471 = vmax.f32 %v435, 0.0
  %v472 = vmax.f32 %v438, 0.0
  %vm473 = vcmask 261120
  %474 = vst.msk [vmem:[#allocation2] sm:$0xff] %vm473, 0.0
  %475 = vst.msk [vmem:[#allocation2 + $0x8] sm:$0xff] %vm473, 0.0
  %vm476 = vcmask 254976
  %477 = vst.msk [vmem:[#allocation2 + $0x10] sm:$0x3] %vm476, 0.0
  %478 = vst.msk [vmem:[#allocation2 + $0x18] sm:$0xff] %vm473, 0.0
  %479 = vst.msk [vmem:[#allocation2 + $0x20] sm:$0xff] %vm473, 0.0
  %480 = vst.msk [vmem:[#allocation2 + $0x28] sm:$0x3] %vm476, 0.0
  %481 = vst.msk [vmem:[#allocation2 + $0x30] sm:$0xff] %vm473, 0.0
  %482 = vst.msk [vmem:[#allocation2 + $0x38] sm:$0xff] %vm473, 0.0
  %483 = vst.msk [vmem:[#allocation2 + $0x40] sm:$0x3] %vm476, 0.0
  %484 = vst.msk [vmem:[#allocation2 + $0x48] sm:$0xff] %vm473, 0.0
  %485 = vst.msk [vmem:[#allocation2 + $0x50] sm:$0xff] %vm473, 0.0
  %486 = vst.msk [vmem:[#allocation2 + $0x58] sm:$0x3] %vm476, 0.0
  %487 = vst.msk [vmem:[#allocation2 + $0x60] sm:$0xff] %vm473, 0.0
  %488 = vst.msk [vmem:[#allocation2 + $0x68] sm:$0xff] %vm473, 0.0
  %489 = vst.msk [vmem:[#allocation2 + $0x70] sm:$0x3] %vm476, 0.0
  %490 = vst.msk [vmem:[#allocation2 + $0x78] sm:$0xff] %vm473, 0.0
  %491 = vst.msk [vmem:[#allocation2 + $0x80] sm:$0xff] %vm473, 0.0
  %492 = vst.msk [vmem:[#allocation2 + $0x88] sm:$0x3] %vm476, 0.0
  %493 = vst.msk [vmem:[#allocation2 + $0x90] sm:$0xff] %vm473, 0.0
  %494 = vst.msk [vmem:[#allocation2 + $0x98] sm:$0xff] %vm473, 0.0
  %495 = vst.msk [vmem:[#allocation2 + $0xa0] sm:$0x3] %vm476, 0.0
  %496 = vst.msk [vmem:[#allocation2 + $0xa8] sm:$0xff] %vm473, 0.0
  %497 = vst.msk [vmem:[#allocation2 + $0xb0] sm:$0xff] %vm473, 0.0
  %498 = vst.msk [vmem:[#allocation2 + $0xb8] sm:$0x3] %vm476, 0.0
  %499 = vst.msk [vmem:[#allocation2 + $0xc0] sm:$0xff] %vm473, 0.0
  %500 = vst.msk [vmem:[#allocation2 + $0xc8] sm:$0xff] %vm473, 0.0
  %501 = vst.msk [vmem:[#allocation2 + $0xd0] sm:$0x3] %vm476, 0.0
  %502 = vst.msk [vmem:[#allocation2 + $0xd8] sm:$0xff] %vm473, 0.0
  %503 = vst.msk [vmem:[#allocation2 + $0xe0] sm:$0xff] %vm473, 0.0
  %504 = vst.msk [vmem:[#allocation2 + $0xe8] sm:$0x3] %vm476, 0.0
  %505 = vst.msk [vmem:[#allocation2 + $0xf0] sm:$0xff] %vm473, 0.0
  %506 = vst.msk [vmem:[#allocation2 + $0xf8] sm:$0xff] %vm473, 0.0
  %507 = vst.msk [vmem:[#allocation2 + $0x100] sm:$0x3] %vm476, 0.0
  %508 = vst.msk [vmem:[#allocation2 + $0x108] sm:$0xff] %vm473, 0.0
  %509 = vst.msk [vmem:[#allocation2 + $0x110] sm:$0xff] %vm473, 0.0
  %510 = vst.msk [vmem:[#allocation2 + $0x118] sm:$0x3] %vm476, 0.0
  %511 = vst.msk [vmem:[#allocation2 + $0x120] sm:$0xff] %vm473, 0.0
  %512 = vst.msk [vmem:[#allocation2 + $0x128] sm:$0xff] %vm473, 0.0
  %513 = vst.msk [vmem:[#allocation2 + $0x130] sm:$0x3] %vm476, 0.0
  %514 = vst.msk [vmem:[#allocation2 + $0x138] sm:$0xff] %vm473, 0.0
  %515 = vst.msk [vmem:[#allocation2 + $0x140] sm:$0xff] %vm473, 0.0
  %516 = vst.msk [vmem:[#allocation2 + $0x148] sm:$0x3] %vm476, 0.0
  %517 = vst.msk [vmem:[#allocation2 + $0x150] sm:$0xff] %vm473, 0.0
  %518 = vst.msk [vmem:[#allocation2 + $0x158] sm:$0xff] %vm473, 0.0
  %519 = vst.msk [vmem:[#allocation2 + $0x160] sm:$0x3] %vm476, 0.0
  %520 = vst.msk [vmem:[#allocation2 + $0x168] sm:$0xff] %vm473, 0.0
  %521 = vst.msk [vmem:[#allocation2 + $0x170] sm:$0xff] %vm473, 0.0
  %522 = vst.msk [vmem:[#allocation2 + $0x178] sm:$0x3] %vm476, 0.0
  %523 = vst.msk [vmem:[#allocation2 + $0x180] sm:$0xff] %vm473, 0.0
  %524 = vst.msk [vmem:[#allocation2 + $0x188] sm:$0xff] %vm473, 0.0
  %525 = vst.msk [vmem:[#allocation2 + $0x190] sm:$0x3] %vm476, 0.0
  %526 = vst.msk [vmem:[#allocation2 + $0x198] sm:$0xff] %vm473, 0.0
  %527 = vst.msk [vmem:[#allocation2 + $0x1a0] sm:$0xff] %vm473, 0.0
  %528 = vst.msk [vmem:[#allocation2 + $0x1a8] sm:$0x3] %vm476, 0.0
  %529 = vst.msk [vmem:[#allocation2 + $0x1b0] sm:$0xff] %vm473, 0.0
  %530 = vst.msk [vmem:[#allocation2 + $0x1b8] sm:$0xff] %vm473, 0.0
  %531 = vst.msk [vmem:[#allocation2 + $0x1c0] sm:$0x3] %vm476, 0.0
  %532 = vst.msk [vmem:[#allocation2 + $0x1c8] sm:$0xff] %vm473, 0.0
  %533 = vst.msk [vmem:[#allocation2 + $0x1d0] sm:$0xff] %vm473, 0.0
  %534 = vst.msk [vmem:[#allocation2 + $0x1d8] sm:$0x3] %vm476, 0.0
  %s535 = scalar_lea.vmem [#allocation2], 24
  %536 = vst.msk [vmem:[%s535 + $0x1] sm:$0xff] %vm473, %v441
  %537 = vst.msk [vmem:[%s535 + $0x9] sm:$0xff] %vm473, %v442
  %538 = vst.msk [vmem:[%s535 + $0x19] sm:$0xff] %vm473, %v443
  %539 = vst.msk [vmem:[%s535 + $0x21] sm:$0xff] %vm473, %v444
  %540 = vst.msk [vmem:[%s535 + $0x31] sm:$0xff] %vm473, %v445
  %541 = vst.msk [vmem:[%s535 + $0x39] sm:$0xff] %vm473, %v446
  %542 = vst.msk [vmem:[%s535 + $0x49] sm:$0xff] %vm473, %v447
  %543 = vst.msk [vmem:[%s535 + $0x51] sm:$0xff] %vm473, %v448
  %544 = vst.msk [vmem:[%s535 + $0x61] sm:$0xff] %vm473, %v449
  %545 = vst.msk [vmem:[%s535 + $0x69] sm:$0xff] %vm473, %v450
  %546 = vst.msk [vmem:[%s535 + $0x79] sm:$0xff] %vm473, %v451
  %547 = vst.msk [vmem:[%s535 + $0x81] sm:$0xff] %vm473, %v452
  %548 = vst.msk [vmem:[%s535 + $0x91] sm:$0xff] %vm473, %v453
  %549 = vst.msk [vmem:[%s535 + $0x99] sm:$0xff] %vm473, %v454
  %550 = vst.msk [vmem:[%s535 + $0xa9] sm:$0xff] %vm473, %v455
  %551 = vst.msk [vmem:[%s535 + $0xb1] sm:$0xff] %vm473, %v456
  %552 = vst.msk [vmem:[%s535 + $0xf1] sm:$0xff] %vm473, %v457
  %553 = vst.msk [vmem:[%s535 + $0xf9] sm:$0xff] %vm473, %v458
  %554 = vst.msk [vmem:[%s535 + $0x109] sm:$0xff] %vm473, %v459
  %555 = vst.msk [vmem:[%s535 + $0x111] sm:$0xff] %vm473, %v460
  %556 = vst.msk [vmem:[%s535 + $0x121] sm:$0xff] %vm473, %v461
  %557 = vst.msk [vmem:[%s535 + $0x129] sm:$0xff] %vm473, %v462
  %558 = vst.msk [vmem:[%s535 + $0x139] sm:$0xff] %vm473, %v463
  %559 = vst.msk [vmem:[%s535 + $0x141] sm:$0xff] %vm473, %v464
  %560 = vst.msk [vmem:[%s535 + $0x151] sm:$0xff] %vm473, %v465
  %561 = vst.msk [vmem:[%s535 + $0x159] sm:$0xff] %vm473, %v466
  %562 = vst.msk [vmem:[%s535 + $0x169] sm:$0xff] %vm473, %v467
  %563 = vst.msk [vmem:[%s535 + $0x171] sm:$0xff] %vm473, %v468
  %564 = vst.msk [vmem:[%s535 + $0x181] sm:$0xff] %vm473, %v469
  %565 = vst.msk [vmem:[%s535 + $0x189] sm:$0xff] %vm473, %v470
  %566 = vst.msk [vmem:[%s535 + $0x199] sm:$0xff] %vm473, %v471
  %567 = vst.msk [vmem:[%s535 + $0x1a1] sm:$0xff] %vm473, %v472
  %v568 = vld [vmem:[#allocation2] sm:$0xff]
  %v569 = vld [vmem:[#allocation2 + $0x8] sm:$0xff]
  %v570 = vld [vmem:[#allocation2 + $0x18] sm:$0xff]
  %v571 = vld [vmem:[#allocation2 + $0x20] sm:$0xff]
  %v572 = vld [vmem:[#allocation2 + $0x30] sm:$0xff]
  %v573 = vld [vmem:[#allocation2 + $0x38] sm:$0xff]
  %v574 = vld [vmem:[#allocation2 + $0x48] sm:$0xff]
  %v575 = vld [vmem:[#allocation2 + $0x50] sm:$0xff]
  %v576 = vld [vmem:[#allocation2 + $0x60] sm:$0xff]
  %v577 = vld [vmem:[#allocation2 + $0x68] sm:$0xff]
  %v578 = vld [vmem:[#allocation2 + $0x78] sm:$0xff]
  %v579 = vld [vmem:[#allocation2 + $0x80] sm:$0xff]
  %v580 = vld [vmem:[#allocation2 + $0x90] sm:$0xff]
  %v581 = vld [vmem:[#allocation2 + $0x98] sm:$0xff]
  %v582 = vld [vmem:[#allocation2 + $0xa8] sm:$0xff]
  %v583 = vld [vmem:[#allocation2 + $0xb0] sm:$0xff]
  %v584 = vld [vmem:[#allocation2 + $0xf0] sm:$0xff]
  %v585 = vld [vmem:[#allocation2 + $0xf8] sm:$0xff]
  %v586 = vld [vmem:[#allocation2 + $0x108] sm:$0xff]
  %v587 = vld [vmem:[#allocation2 + $0x110] sm:$0xff]
  %v588 = vld [vmem:[#allocation2 + $0x120] sm:$0xff]
  %v589 = vld [vmem:[#allocation2 + $0x128] sm:$0xff]
  %v590 = vld [vmem:[#allocation2 + $0x138] sm:$0xff]
  %v591 = vld [vmem:[#allocation2 + $0x140] sm:$0xff]
  %v592 = vld [vmem:[#allocation2 + $0x150] sm:$0xff]
  %v593 = vld [vmem:[#allocation2 + $0x158] sm:$0xff]
  %v594 = vld [vmem:[#allocation2 + $0x168] sm:$0xff]
  %v595 = vld [vmem:[#allocation2 + $0x170] sm:$0xff]
  %v596 = vld [vmem:[#allocation2 + $0x180] sm:$0xff]
  %v597 = vld [vmem:[#allocation2 + $0x188] sm:$0xff]
  %v598 = vld [vmem:[#allocation2 + $0x198] sm:$0xff]
  %v599 = vld [vmem:[#allocation2 + $0x1a0] sm:$0xff]
  %v600 = vld [vmem:[%s535] sm:$0xff]
  %v601 = vld [vmem:[%s535 + $0x8] sm:$0xff]
  %v602 = vld [vmem:[%s535 + $0x18] sm:$0xff]
  %v603 = vld [vmem:[%s535 + $0x20] sm:$0xff]
  %v604 = vld [vmem:[%s535 + $0x30] sm:$0xff]
  %v605 = vld [vmem:[%s535 + $0x38] sm:$0xff]
  %v606 = vld [vmem:[%s535 + $0x48] sm:$0xff]
  %v607 = vld [vmem:[%s535 + $0x50] sm:$0xff]
  %v608 = vld [vmem:[%s535 + $0x60] sm:$0xff]
  %v609 = vld [vmem:[%s535 + $0x68] sm:$0xff]
  %v610 = vld [vmem:[%s535 + $0x78] sm:$0xff]
  %v611 = vld [vmem:[%s535 + $0x80] sm:$0xff]
  %v612 = vld [vmem:[%s535 + $0x90] sm:$0xff]
  %v613 = vld [vmem:[%s535 + $0x98] sm:$0xff]
  %v614 = vld [vmem:[%s535 + $0xa8] sm:$0xff]
  %v615 = vld [vmem:[%s535 + $0xb0] sm:$0xff]
  %v616 = vld [vmem:[%s535 + $0xf0] sm:$0xff]
  %v617 = vld [vmem:[%s535 + $0xf8] sm:$0xff]
  %v618 = vld [vmem:[%s535 + $0x108] sm:$0xff]
  %v619 = vld [vmem:[%s535 + $0x110] sm:$0xff]
  %v620 = vld [vmem:[%s535 + $0x120] sm:$0xff]
  %v621 = vld [vmem:[%s535 + $0x128] sm:$0xff]
  %v622 = vld [vmem:[%s535 + $0x138] sm:$0xff]
  %v623 = vld [vmem:[%s535 + $0x140] sm:$0xff]
  %v624 = vld [vmem:[%s535 + $0x150] sm:$0xff]
  %v625 = vld [vmem:[%s535 + $0x158] sm:$0xff]
  %v626 = vld [vmem:[%s535 + $0x168] sm:$0xff]
  %v627 = vld [vmem:[%s535 + $0x170] sm:$0xff]
  %v628 = vld [vmem:[%s535 + $0x180] sm:$0xff]
  %v629 = vld [vmem:[%s535 + $0x188] sm:$0xff]
  %v630 = vld [vmem:[%s535 + $0x198] sm:$0xff]
  %v631 = vld [vmem:[%s535 + $0x1a0] sm:$0xff]
  %s632 = scalar_lea.vmem [#allocation2], 48
  %v633 = vld [vmem:[%s632] sm:$0xff]
  %v634 = vld [vmem:[%s632 + $0x8] sm:$0xff]
  %v635 = vld [vmem:[%s632 + $0x18] sm:$0xff]
  %v636 = vld [vmem:[%s632 + $0x20] sm:$0xff]
  %v637 = vld [vmem:[%s632 + $0x30] sm:$0xff]
  %v638 = vld [vmem:[%s632 + $0x38] sm:$0xff]
  %v639 = vld [vmem:[%s632 + $0x48] sm:$0xff]
  %v640 = vld [vmem:[%s632 + $0x50] sm:$0xff]
  %v641 = vld [vmem:[%s632 + $0x60] sm:$0xff]
  %v642 = vld [vmem:[%s632 + $0x68] sm:$0xff]
  %v643 = vld [vmem:[%s632 + $0x78] sm:$0xff]
  %v644 = vld [vmem:[%s632 + $0x80] sm:$0xff]
  %v645 = vld [vmem:[%s632 + $0x90] sm:$0xff]
  %v646 = vld [vmem:[%s632 + $0x98] sm:$0xff]
  %v647 = vld [vmem:[%s632 + $0xa8] sm:$0xff]
  %v648 = vld [vmem:[%s632 + $0xb0] sm:$0xff]
  %v649 = vld [vmem:[%s632 + $0xf0] sm:$0xff]
  %v650 = vld [vmem:[%s632 + $0xf8] sm:$0xff]
  %v651 = vld [vmem:[%s632 + $0x108] sm:$0xff]
  %v652 = vld [vmem:[%s632 + $0x110] sm:$0xff]
  %v653 = vld [vmem:[%s632 + $0x120] sm:$0xff]
  %v654 = vld [vmem:[%s632 + $0x128] sm:$0xff]
  %v655 = vld [vmem:[%s632 + $0x138] sm:$0xff]
  %v656 = vld [vmem:[%s632 + $0x140] sm:$0xff]
  %v657 = vld [vmem:[%s632 + $0x150] sm:$0xff]
  %v658 = vld [vmem:[%s632 + $0x158] sm:$0xff]
  %v659 = vld [vmem:[%s632 + $0x168] sm:$0xff]
  %v660 = vld [vmem:[%s632 + $0x170] sm:$0xff]
  %v661 = vld [vmem:[%s632 + $0x180] sm:$0xff]
  %v662 = vld [vmem:[%s632 + $0x188] sm:$0xff]
  %v663 = vld [vmem:[%s632 + $0x198] sm:$0xff]
  %v664 = vld [vmem:[%s632 + $0x1a0] sm:$0xff]
  %v665 = vld [vmem:[#allocation2 + $0x1] sm:$0xff]
  %v666 = vld [vmem:[#allocation2 + $0x9] sm:$0xff]
  %v667 = vld [vmem:[#allocation2 + $0x19] sm:$0xff]
  %v668 = vld [vmem:[#allocation2 + $0x21] sm:$0xff]
  %v669 = vld [vmem:[#allocation2 + $0x31] sm:$0xff]
  %v670 = vld [vmem:[#allocation2 + $0x39] sm:$0xff]
  %v671 = vld [vmem:[#allocation2 + $0x49] sm:$0xff]
  %v672 = vld [vmem:[#allocation2 + $0x51] sm:$0xff]
  %v673 = vld [vmem:[#allocation2 + $0x61] sm:$0xff]
  %v674 = vld [vmem:[#allocation2 + $0x69] sm:$0xff]
  %v675 = vld [vmem:[#allocation2 + $0x79] sm:$0xff]
  %v676 = vld [vmem:[#allocation2 + $0x81] sm:$0xff]
  %v677 = vld [vmem:[#allocation2 + $0x91] sm:$0xff]
  %v678 = vld [vmem:[#allocation2 + $0x99] sm:$0xff]
  %v679 = vld [vmem:[#allocation2 + $0xa9] sm:$0xff]
  %v680 = vld [vmem:[#allocation2 + $0xb1] sm:$0xff]
  %v681 = vld [vmem:[#allocation2 + $0xf1] sm:$0xff]
  %v682 = vld [vmem:[#allocation2 + $0xf9] sm:$0xff]
  %v683 = vld [vmem:[#allocation2 + $0x109] sm:$0xff]
  %v684 = vld [vmem:[#allocation2 + $0x111] sm:$0xff]
  %v685 = vld [vmem:[#allocation2 + $0x121] sm:$0xff]
  %v686 = vld [vmem:[#allocation2 + $0x129] sm:$0xff]
  %v687 = vld [vmem:[#allocation2 + $0x139] sm:$0xff]
  %v688 = vld [vmem:[#allocation2 + $0x141] sm:$0xff]
  %v689 = vld [vmem:[#allocation2 + $0x151] sm:$0xff]
  %v690 = vld [vmem:[#allocation2 + $0x159] sm:$0xff]
  %v691 = vld [vmem:[#allocation2 + $0x169] sm:$0xff]
  %v692 = vld [vmem:[#allocation2 + $0x171] sm:$0xff]
  %v693 = vld [vmem:[#allocation2 + $0x181] sm:$0xff]
  %v694 = vld [vmem:[#allocation2 + $0x189] sm:$0xff]
  %v695 = vld [vmem:[#allocation2 + $0x199] sm:$0xff]
  %v696 = vld [vmem:[#allocation2 + $0x1a1] sm:$0xff]
  %v697 = vld [vmem:[%s535 + $0x1] sm:$0xff]
  %v698 = vld [vmem:[%s535 + $0x9] sm:$0xff]
  %v699 = vld [vmem:[%s535 + $0x19] sm:$0xff]
  %v700 = vld [vmem:[%s535 + $0x21] sm:$0xff]
  %v701 = vld [vmem:[%s535 + $0x31] sm:$0xff]
  %v702 = vld [vmem:[%s535 + $0x39] sm:$0xff]
  %v703 = vld [vmem:[%s535 + $0x49] sm:$0xff]
  %v704 = vld [vmem:[%s535 + $0x51] sm:$0xff]
  %v705 = vld [vmem:[%s535 + $0x61] sm:$0xff]
  %v706 = vld [vmem:[%s535 + $0x69] sm:$0xff]
  %v707 = vld [vmem:[%s535 + $0x79] sm:$0xff]
  %v708 = vld [vmem:[%s535 + $0x81] sm:$0xff]
  %v709 = vld [vmem:[%s535 + $0x91] sm:$0xff]
  %v710 = vld [vmem:[%s535 + $0x99] sm:$0xff]
  %v711 = vld [vmem:[%s535 + $0xa9] sm:$0xff]
  %v712 = vld [vmem:[%s535 + $0xb1] sm:$0xff]
  %v713 = vld [vmem:[%s535 + $0xf1] sm:$0xff]
  %v714 = vld [vmem:[%s535 + $0xf9] sm:$0xff]
  %v715 = vld [vmem:[%s535 + $0x109] sm:$0xff]
  %v716 = vld [vmem:[%s535 + $0x111] sm:$0xff]
  %v717 = vld [vmem:[%s535 + $0x121] sm:$0xff]
  %v718 = vld [vmem:[%s535 + $0x129] sm:$0xff]
  %v719 = vld [vmem:[%s535 + $0x139] sm:$0xff]
  %v720 = vld [vmem:[%s535 + $0x141] sm:$0xff]
  %v721 = vld [vmem:[%s535 + $0x151] sm:$0xff]
  %v722 = vld [vmem:[%s535 + $0x159] sm:$0xff]
  %v723 = vld [vmem:[%s535 + $0x169] sm:$0xff]
  %v724 = vld [vmem:[%s535 + $0x171] sm:$0xff]
  %v725 = vld [vmem:[%s535 + $0x181] sm:$0xff]
  %v726 = vld [vmem:[%s535 + $0x189] sm:$0xff]
  %v727 = vld [vmem:[%s535 + $0x199] sm:$0xff]
  %v728 = vld [vmem:[%s535 + $0x1a1] sm:$0xff]
  %v729 = vld [vmem:[%s632 + $0x1] sm:$0xff]
  %v730 = vld [vmem:[%s632 + $0x9] sm:$0xff]
  %v731 = vld [vmem:[%s632 + $0x19] sm:$0xff]
  %v732 = vld [vmem:[%s632 + $0x21] sm:$0xff]
  %v733 = vld [vmem:[%s632 + $0x31] sm:$0xff]
  %v734 = vld [vmem:[%s632 + $0x39] sm:$0xff]
  %v735 = vld [vmem:[%s632 + $0x49] sm:$0xff]
  %v736 = vld [vmem:[%s632 + $0x51] sm:$0xff]
  %v737 = vld [vmem:[%s632 + $0x61] sm:$0xff]
  %v738 = vld [vmem:[%s632 + $0x69] sm:$0xff]
  %v739 = vld [vmem:[%s632 + $0x79] sm:$0xff]
  %v740 = vld [vmem:[%s632 + $0x81] sm:$0xff]
  %v741 = vld [vmem:[%s632 + $0x91] sm:$0xff]
  %v742 = vld [vmem:[%s632 + $0x99] sm:$0xff]
  %v743 = vld [vmem:[%s632 + $0xa9] sm:$0xff]
  %v744 = vld [vmem:[%s632 + $0xb1] sm:$0xff]
  %v745 = vld [vmem:[%s632 + $0xf1] sm:$0xff]
  %v746 = vld [vmem:[%s632 + $0xf9] sm:$0xff]
  %v747 = vld [vmem:[%s632 + $0x109] sm:$0xff]
  %v748 = vld [vmem:[%s632 + $0x111] sm:$0xff]
  %v749 = vld [vmem:[%s632 + $0x121] sm:$0xff]
  %v750 = vld [vmem:[%s632 + $0x129] sm:$0xff]
  %v751 = vld [vmem:[%s632 + $0x139] sm:$0xff]
  %v752 = vld [vmem:[%s632 + $0x141] sm:$0xff]
  %v753 = vld [vmem:[%s632 + $0x151] sm:$0xff]
  %v754 = vld [vmem:[%s632 + $0x159] sm:$0xff]
  %v755 = vld [vmem:[%s632 + $0x169] sm:$0xff]
  %v756 = vld [vmem:[%s632 + $0x171] sm:$0xff]
  %v757 = vld [vmem:[%s632 + $0x181] sm:$0xff]
  %v758 = vld [vmem:[%s632 + $0x189] sm:$0xff]
  %v759 = vld [vmem:[%s632 + $0x199] sm:$0xff]
  %v760 = vld [vmem:[%s632 + $0x1a1] sm:$0xff]
  %v761 = vld [vmem:[#allocation2 + $0x2] sm:$0xff]
  %v762 = vld [vmem:[#allocation2 + $0xa] sm:$0xff]
  %v763 = vld [vmem:[#allocation2 + $0x1a] sm:$0xff]
  %v764 = vld [vmem:[#allocation2 + $0x22] sm:$0xff]
  %v765 = vld [vmem:[#allocation2 + $0x32] sm:$0xff]
  %v766 = vld [vmem:[#allocation2 + $0x3a] sm:$0xff]
  %v767 = vld [vmem:[#allocation2 + $0x4a] sm:$0xff]
  %v768 = vld [vmem:[#allocation2 + $0x52] sm:$0xff]
  %v769 = vld [vmem:[#allocation2 + $0x62] sm:$0xff]
  %v770 = vld [vmem:[#allocation2 + $0x6a] sm:$0xff]
  %v771 = vld [vmem:[#allocation2 + $0x7a] sm:$0xff]
  %v772 = vld [vmem:[#allocation2 + $0x82] sm:$0xff]
  %v773 = vld [vmem:[#allocation2 + $0x92] sm:$0xff]
  %v774 = vld [vmem:[#allocation2 + $0x9a] sm:$0xff]
  %v775 = vld [vmem:[#allocation2 + $0xaa] sm:$0xff]
  %v776 = vld [vmem:[#allocation2 + $0xb2] sm:$0xff]
  %v777 = vld [vmem:[#allocation2 + $0xf2] sm:$0xff]
  %v778 = vld [vmem:[#allocation2 + $0xfa] sm:$0xff]
  %v779 = vld [vmem:[#allocation2 + $0x10a] sm:$0xff]
  %v780 = vld [vmem:[#allocation2 + $0x112] sm:$0xff]
  %v781 = vld [vmem:[#allocation2 + $0x122] sm:$0xff]
  %v782 = vld [vmem:[#allocation2 + $0x12a] sm:$0xff]
  %v783 = vld [vmem:[#allocation2 + $0x13a] sm:$0xff]
  %v784 = vld [vmem:[#allocation2 + $0x142] sm:$0xff]
  %v785 = vld [vmem:[#allocation2 + $0x152] sm:$0xff]
  %v786 = vld [vmem:[#allocation2 + $0x15a] sm:$0xff]
  %v787 = vld [vmem:[#allocation2 + $0x16a] sm:$0xff]
  %v788 = vld [vmem:[#allocation2 + $0x172] sm:$0xff]
  %v789 = vld [vmem:[#allocation2 + $0x182] sm:$0xff]
  %v790 = vld [vmem:[#allocation2 + $0x18a] sm:$0xff]
  %v791 = vld [vmem:[#allocation2 + $0x19a] sm:$0xff]
  %v792 = vld [vmem:[#allocation2 + $0x1a2] sm:$0xff]
  %v793 = vld [vmem:[%s535 + $0x2] sm:$0xff]
  %v794 = vld [vmem:[%s535 + $0xa] sm:$0xff]
  %v795 = vld [vmem:[%s535 + $0x1a] sm:$0xff]
  %v796 = vld [vmem:[%s535 + $0x22] sm:$0xff]
  %v797 = vld [vmem:[%s535 + $0x32] sm:$0xff]
  %v798 = vld [vmem:[%s535 + $0x3a] sm:$0xff]
  %v799 = vld [vmem:[%s535 + $0x4a] sm:$0xff]
  %v800 = vld [vmem:[%s535 + $0x52] sm:$0xff]
  %v801 = vld [vmem:[%s535 + $0x62] sm:$0xff]
  %v802 = vld [vmem:[%s535 + $0x6a] sm:$0xff]
  %v803 = vld [vmem:[%s535 + $0x7a] sm:$0xff]
  %v804 = vld [vmem:[%s535 + $0x82] sm:$0xff]
  %v805 = vld [vmem:[%s535 + $0x92] sm:$0xff]
  %v806 = vld [vmem:[%s535 + $0x9a] sm:$0xff]
  %v807 = vld [vmem:[%s535 + $0xaa] sm:$0xff]
  %v808 = vld [vmem:[%s535 + $0xb2] sm:$0xff]
  %v809 = vld [vmem:[%s535 + $0xf2] sm:$0xff]
  %v810 = vld [vmem:[%s535 + $0xfa] sm:$0xff]
  %v811 = vld [vmem:[%s535 + $0x10a] sm:$0xff]
  %v812 = vld [vmem:[%s535 + $0x112] sm:$0xff]
  %v813 = vld [vmem:[%s535 + $0x122] sm:$0xff]
  %v814 = vld [vmem:[%s535 + $0x12a] sm:$0xff]
  %v815 = vld [vmem:[%s535 + $0x13a] sm:$0xff]
  %v816 = vld [vmem:[%s535 + $0x142] sm:$0xff]
  %v817 = vld [vmem:[%s535 + $0x152] sm:$0xff]
  %v818 = vld [vmem:[%s535 + $0x15a] sm:$0xff]
  %v819 = vld [vmem:[%s535 + $0x16a] sm:$0xff]
  %v820 = vld [vmem:[%s535 + $0x172] sm:$0xff]
  %v821 = vld [vmem:[%s535 + $0x182] sm:$0xff]
  %v822 = vld [vmem:[%s535 + $0x18a] sm:$0xff]
  %v823 = vld [vmem:[%s535 + $0x19a] sm:$0xff]
  %v824 = vld [vmem:[%s535 + $0x1a2] sm:$0xff]
  %v825 = vld [vmem:[%s632 + $0x2] sm:$0xff]
  %v826 = vld [vmem:[%s632 + $0xa] sm:$0xff]
  %v827 = vld [vmem:[%s632 + $0x1a] sm:$0xff]
  %v828 = vld [vmem:[%s632 + $0x22] sm:$0xff]
  %v829 = vld [vmem:[%s632 + $0x32] sm:$0xff]
  %v830 = vld [vmem:[%s632 + $0x3a] sm:$0xff]
  %v831 = vld [vmem:[%s632 + $0x4a] sm:$0xff]
  %v832 = vld [vmem:[%s632 + $0x52] sm:$0xff]
  %v833 = vld [vmem:[%s632 + $0x62] sm:$0xff]
  %v834 = vld [vmem:[%s632 + $0x6a] sm:$0xff]
  %v835 = vld [vmem:[%s632 + $0x7a] sm:$0xff]
  %v836 = vld [vmem:[%s632 + $0x82] sm:$0xff]
  %v837 = vld [vmem:[%s632 + $0x92] sm:$0xff]
  %v838 = vld [vmem:[%s632 + $0x9a] sm:$0xff]
  %v839 = vld [vmem:[%s632 + $0xaa] sm:$0xff]
  %v840 = vld [vmem:[%s632 + $0xb2] sm:$0xff]
  %v841 = vld [vmem:[%s632 + $0xf2] sm:$0xff]
  %v842 = vld [vmem:[%s632 + $0xfa] sm:$0xff]
  %v843 = vld [vmem:[%s632 + $0x10a] sm:$0xff]
  %v844 = vld [vmem:[%s632 + $0x112] sm:$0xff]
  %v845 = vld [vmem:[%s632 + $0x122] sm:$0xff]
  %v846 = vld [vmem:[%s632 + $0x12a] sm:$0xff]
  %v847 = vld [vmem:[%s632 + $0x13a] sm:$0xff]
  %v848 = vld [vmem:[%s632 + $0x142] sm:$0xff]
  %v849 = vld [vmem:[%s632 + $0x152] sm:$0xff]
  %v850 = vld [vmem:[%s632 + $0x15a] sm:$0xff]
  %v851 = vld [vmem:[%s632 + $0x16a] sm:$0xff]
  %v852 = vld [vmem:[%s632 + $0x172] sm:$0xff]
  %v853 = vld [vmem:[%s632 + $0x182] sm:$0xff]
  %v854 = vld [vmem:[%s632 + $0x18a] sm:$0xff]
  %v855 = vld [vmem:[%s632 + $0x19a] sm:$0xff]
  %v856 = vld [vmem:[%s632 + $0x1a2] sm:$0xff]
  %889 = vrot.lane.b32.xlu0 %v600, 32
  %v890 = vpop.permute.xlu0 %889
  %891 = vrot.lane.b32.xlu0 %v601, 32
  %v892 = vpop.permute.xlu0 %891
  %893 = vrot.lane.b32.xlu0 %v602, 32
  %v894 = vpop.permute.xlu0 %893
  %895 = vrot.lane.b32.xlu0 %v603, 32
  %v896 = vpop.permute.xlu0 %895
  %897 = vrot.lane.b32.xlu0 %v604, 32
  %v898 = vpop.permute.xlu0 %897
  %899 = vrot.lane.b32.xlu0 %v605, 32
  %v900 = vpop.permute.xlu0 %899
  %901 = vrot.lane.b32.xlu0 %v606, 32
  %v902 = vpop.permute.xlu0 %901
  %903 = vrot.lane.b32.xlu0 %v607, 32
  %v904 = vpop.permute.xlu0 %903
  %905 = vrot.lane.b32.xlu0 %v608, 32
  %v906 = vpop.permute.xlu0 %905
  %907 = vrot.lane.b32.xlu0 %v609, 32
  %v908 = vpop.permute.xlu0 %907
  %909 = vrot.lane.b32.xlu0 %v610, 32
  %v910 = vpop.permute.xlu0 %909
  %911 = vrot.lane.b32.xlu0 %v611, 32
  %v912 = vpop.permute.xlu0 %911
  %913 = vrot.lane.b32.xlu0 %v612, 32
  %v914 = vpop.permute.xlu0 %913
  %915 = vrot.lane.b32.xlu0 %v613, 32
  %v916 = vpop.permute.xlu0 %915
  %917 = vrot.lane.b32.xlu0 %v614, 32
  %v918 = vpop.permute.xlu0 %917
  %919 = vrot.lane.b32.xlu0 %v615, 32
  %v920 = vpop.permute.xlu0 %919
  %921 = vrot.lane.b32.xlu0 %v616, 32
  %v922 = vpop.permute.xlu0 %921
  %923 = vrot.lane.b32.xlu0 %v617, 32
  %v924 = vpop.permute.xlu0 %923
  %925 = vrot.lane.b32.xlu0 %v618, 32
  %v926 = vpop.permute.xlu0 %925
  %927 = vrot.lane.b32.xlu0 %v619, 32
  %v928 = vpop.permute.xlu0 %927
  %929 = vrot.lane.b32.xlu0 %v620, 32
  %v930 = vpop.permute.xlu0 %929
  %931 = vrot.lane.b32.xlu0 %v621, 32
  %v932 = vpop.permute.xlu0 %931
  %933 = vrot.lane.b32.xlu0 %v622, 32
  %v934 = vpop.permute.xlu0 %933
  %935 = vrot.lane.b32.xlu0 %v623, 32
  %v936 = vpop.permute.xlu0 %935
  %937 = vrot.lane.b32.xlu0 %v624, 32
  %v938 = vpop.permute.xlu0 %937
  %939 = vrot.lane.b32.xlu0 %v625, 32
  %v940 = vpop.permute.xlu0 %939
  %941 = vrot.lane.b32.xlu0 %v626, 32
  %v942 = vpop.permute.xlu0 %941
  %943 = vrot.lane.b32.xlu0 %v627, 32
  %v944 = vpop.permute.xlu0 %943
  %945 = vrot.lane.b32.xlu0 %v628, 32
  %v946 = vpop.permute.xlu0 %945
  %947 = vrot.lane.b32.xlu0 %v629, 32
  %v948 = vpop.permute.xlu0 %947
  %949 = vrot.lane.b32.xlu0 %v630, 32
  %v950 = vpop.permute.xlu0 %949
  %951 = vrot.lane.b32.xlu0 %v631, 32
  %v952 = vpop.permute.xlu0 %951
  %1017 = vrot.lane.b32.xlu0 %v633, 64
  %v1018 = vpop.permute.xlu0 %1017
  %1019 = vrot.lane.b32.xlu0 %v634, 64
  %v1020 = vpop.permute.xlu0 %1019
  %1021 = vrot.lane.b32.xlu0 %v635, 64
  %v1022 = vpop.permute.xlu0 %1021
  %1023 = vrot.lane.b32.xlu0 %v636, 64
  %v1024 = vpop.permute.xlu0 %1023
  %1025 = vrot.lane.b32.xlu0 %v637, 64
  %v1026 = vpop.permute.xlu0 %1025
  %1027 = vrot.lane.b32.xlu0 %v638, 64
  %v1028 = vpop.permute.xlu0 %1027
  %1029 = vrot.lane.b32.xlu0 %v639, 64
  %v1030 = vpop.permute.xlu0 %1029
  %1031 = vrot.lane.b32.xlu0 %v640, 64
  %v1032 = vpop.permute.xlu0 %1031
  %1033 = vrot.lane.b32.xlu0 %v641, 64
  %v1034 = vpop.permute.xlu0 %1033
  %1035 = vrot.lane.b32.xlu0 %v642, 64
  %v1036 = vpop.permute.xlu0 %1035
  %1037 = vrot.lane.b32.xlu0 %v643, 64
  %v1038 = vpop.permute.xlu0 %1037
  %1039 = vrot.lane.b32.xlu0 %v644, 64
  %v1040 = vpop.permute.xlu0 %1039
  %1041 = vrot.lane.b32.xlu0 %v645, 64
  %v1042 = vpop.permute.xlu0 %1041
  %1043 = vrot.lane.b32.xlu0 %v646, 64
  %v1044 = vpop.permute.xlu0 %1043
  %1045 = vrot.lane.b32.xlu0 %v647, 64
  %v1046 = vpop.permute.xlu0 %1045
  %1047 = vrot.lane.b32.xlu0 %v648, 64
  %v1048 = vpop.permute.xlu0 %1047
  %1049 = vrot.lane.b32.xlu0 %v649, 64
  %v1050 = vpop.permute.xlu0 %1049
  %1051 = vrot.lane.b32.xlu0 %v650, 64
  %v1052 = vpop.permute.xlu0 %1051
  %1053 = vrot.lane.b32.xlu0 %v651, 64
  %v1054 = vpop.permute.xlu0 %1053
  %1055 = vrot.lane.b32.xlu0 %v652, 64
  %v1056 = vpop.permute.xlu0 %1055
  %1057 = vrot.lane.b32.xlu0 %v653, 64
  %v1058 = vpop.permute.xlu0 %1057
  %1059 = vrot.lane.b32.xlu0 %v654, 64
  %v1060 = vpop.permute.xlu0 %1059
  %1061 = vrot.lane.b32.xlu0 %v655, 64
  %v1062 = vpop.permute.xlu0 %1061
  %1063 = vrot.lane.b32.xlu0 %v656, 64
  %v1064 = vpop.permute.xlu0 %1063
  %1065 = vrot.lane.b32.xlu0 %v657, 64
  %v1066 = vpop.permute.xlu0 %1065
  %1067 = vrot.lane.b32.xlu0 %v658, 64
  %v1068 = vpop.permute.xlu0 %1067
  %1069 = vrot.lane.b32.xlu0 %v659, 64
  %v1070 = vpop.permute.xlu0 %1069
  %1071 = vrot.lane.b32.xlu0 %v660, 64
  %v1072 = vpop.permute.xlu0 %1071
  %1073 = vrot.lane.b32.xlu0 %v661, 64
  %v1074 = vpop.permute.xlu0 %1073
  %1075 = vrot.lane.b32.xlu0 %v662, 64
  %v1076 = vpop.permute.xlu0 %1075
  %1077 = vrot.lane.b32.xlu0 %v663, 64
  %v1078 = vpop.permute.xlu0 %1077
  %1079 = vrot.lane.b32.xlu0 %v664, 64
  %v1080 = vpop.permute.xlu0 %1079
  %1145 = vrot.lane.b32.xlu0 %v665, 96
  %v1146 = vpop.permute.xlu0 %1145
  %1147 = vrot.lane.b32.xlu0 %v666, 96
  %v1148 = vpop.permute.xlu0 %1147
  %1149 = vrot.lane.b32.xlu0 %v667, 96
  %v1150 = vpop.permute.xlu0 %1149
  %1151 = vrot.lane.b32.xlu0 %v668, 96
  %v1152 = vpop.permute.xlu0 %1151
  %1153 = vrot.lane.b32.xlu0 %v669, 96
  %v1154 = vpop.permute.xlu0 %1153
  %1155 = vrot.lane.b32.xlu0 %v670, 96
  %v1156 = vpop.permute.xlu0 %1155
  %1157 = vrot.lane.b32.xlu0 %v671, 96
  %v1158 = vpop.permute.xlu0 %1157
  %1159 = vrot.lane.b32.xlu0 %v672, 96
  %v1160 = vpop.permute.xlu0 %1159
  %1161 = vrot.lane.b32.xlu0 %v673, 96
  %v1162 = vpop.permute.xlu0 %1161
  %1163 = vrot.lane.b32.xlu0 %v674, 96
  %v1164 = vpop.permute.xlu0 %1163
  %1165 = vrot.lane.b32.xlu0 %v675, 96
  %v1166 = vpop.permute.xlu0 %1165
  %1167 = vrot.lane.b32.xlu0 %v676, 96
  %v1168 = vpop.permute.xlu0 %1167
  %1169 = vrot.lane.b32.xlu0 %v677, 96
  %v1170 = vpop.permute.xlu0 %1169
  %1171 = vrot.lane.b32.xlu0 %v678, 96
  %v1172 = vpop.permute.xlu0 %1171
  %1173 = vrot.lane.b32.xlu0 %v679, 96
  %v1174 = vpop.permute.xlu0 %1173
  %1175 = vrot.lane.b32.xlu0 %v680, 96
  %v1176 = vpop.permute.xlu0 %1175
  %1177 = vrot.lane.b32.xlu0 %v681, 96
  %v1178 = vpop.permute.xlu0 %1177
  %1179 = vrot.lane.b32.xlu0 %v682, 96
  %v1180 = vpop.permute.xlu0 %1179
  %1181 = vrot.lane.b32.xlu0 %v683, 96
  %v1182 = vpop.permute.xlu0 %1181
  %1183 = vrot.lane.b32.xlu0 %v684, 96
  %v1184 = vpop.permute.xlu0 %1183
  %1185 = vrot.lane.b32.xlu0 %v685, 96
  %v1186 = vpop.permute.xlu0 %1185
  %1187 = vrot.lane.b32.xlu0 %v686, 96
  %v1188 = vpop.permute.xlu0 %1187
  %1189 = vrot.lane.b32.xlu0 %v687, 96
  %v1190 = vpop.permute.xlu0 %1189
  %1191 = vrot.lane.b32.xlu0 %v688, 96
  %v1192 = vpop.permute.xlu0 %1191
  %1193 = vrot.lane.b32.xlu0 %v689, 96
  %v1194 = vpop.permute.xlu0 %1193
  %1195 = vrot.lane.b32.xlu0 %v690, 96
  %v1196 = vpop.permute.xlu0 %1195
  %1197 = vrot.lane.b32.xlu0 %v691, 96
  %v1198 = vpop.permute.xlu0 %1197
  %1199 = vrot.lane.b32.xlu0 %v692, 96
  %v1200 = vpop.permute.xlu0 %1199
  %1201 = vrot.lane.b32.xlu0 %v693, 96
  %v1202 = vpop.permute.xlu0 %1201
  %1203 = vrot.lane.b32.xlu0 %v694, 96
  %v1204 = vpop.permute.xlu0 %1203
  %1205 = vrot.lane.b32.xlu0 %v695, 96
  %v1206 = vpop.permute.xlu0 %1205
  %1207 = vrot.lane.b32.xlu0 %v696, 96
  %v1208 = vpop.permute.xlu0 %1207
  %1273 = vrot.lane.b32.xlu0 %v729, 32
  %v1274 = vpop.permute.xlu0 %1273
  %1275 = vrot.lane.b32.xlu0 %v730, 32
  %v1276 = vpop.permute.xlu0 %1275
  %1277 = vrot.lane.b32.xlu0 %v731, 32
  %v1278 = vpop.permute.xlu0 %1277
  %1279 = vrot.lane.b32.xlu0 %v732, 32
  %v1280 = vpop.permute.xlu0 %1279
  %1281 = vrot.lane.b32.xlu0 %v733, 32
  %v1282 = vpop.permute.xlu0 %1281
  %1283 = vrot.lane.b32.xlu0 %v734, 32
  %v1284 = vpop.permute.xlu0 %1283
  %1285 = vrot.lane.b32.xlu0 %v735, 32
  %v1286 = vpop.permute.xlu0 %1285
  %1287 = vrot.lane.b32.xlu0 %v736, 32
  %v1288 = vpop.permute.xlu0 %1287
  %1289 = vrot.lane.b32.xlu0 %v737, 32
  %v1290 = vpop.permute.xlu0 %1289
  %1291 = vrot.lane.b32.xlu0 %v738, 32
  %v1292 = vpop.permute.xlu0 %1291
  %1293 = vrot.lane.b32.xlu0 %v739, 32
  %v1294 = vpop.permute.xlu0 %1293
  %1295 = vrot.lane.b32.xlu0 %v740, 32
  %v1296 = vpop.permute.xlu0 %1295
  %1297 = vrot.lane.b32.xlu0 %v741, 32
  %v1298 = vpop.permute.xlu0 %1297
  %1299 = vrot.lane.b32.xlu0 %v742, 32
  %v1300 = vpop.permute.xlu0 %1299
  %1301 = vrot.lane.b32.xlu0 %v743, 32
  %v1302 = vpop.permute.xlu0 %1301
  %1303 = vrot.lane.b32.xlu0 %v744, 32
  %v1304 = vpop.permute.xlu0 %1303
  %1305 = vrot.lane.b32.xlu0 %v745, 32
  %v1306 = vpop.permute.xlu0 %1305
  %1307 = vrot.lane.b32.xlu0 %v746, 32
  %v1308 = vpop.permute.xlu0 %1307
  %1309 = vrot.lane.b32.xlu0 %v747, 32
  %v1310 = vpop.permute.xlu0 %1309
  %1311 = vrot.lane.b32.xlu0 %v748, 32
  %v1312 = vpop.permute.xlu0 %1311
  %1313 = vrot.lane.b32.xlu0 %v749, 32
  %v1314 = vpop.permute.xlu0 %1313
  %1315 = vrot.lane.b32.xlu0 %v750, 32
  %v1316 = vpop.permute.xlu0 %1315
  %1317 = vrot.lane.b32.xlu0 %v751, 32
  %v1318 = vpop.permute.xlu0 %1317
  %1319 = vrot.lane.b32.xlu0 %v752, 32
  %v1320 = vpop.permute.xlu0 %1319
  %1321 = vrot.lane.b32.xlu0 %v753, 32
  %v1322 = vpop.permute.xlu0 %1321
  %1323 = vrot.lane.b32.xlu0 %v754, 32
  %v1324 = vpop.permute.xlu0 %1323
  %1325 = vrot.lane.b32.xlu0 %v755, 32
  %v1326 = vpop.permute.xlu0 %1325
  %1327 = vrot.lane.b32.xlu0 %v756, 32
  %v1328 = vpop.permute.xlu0 %1327
  %1329 = vrot.lane.b32.xlu0 %v757, 32
  %v1330 = vpop.permute.xlu0 %1329
  %1331 = vrot.lane.b32.xlu0 %v758, 32
  %v1332 = vpop.permute.xlu0 %1331
  %1333 = vrot.lane.b32.xlu0 %v759, 32
  %v1334 = vpop.permute.xlu0 %1333
  %1335 = vrot.lane.b32.xlu0 %v760, 32
  %v1336 = vpop.permute.xlu0 %1335
  %1401 = vrot.lane.b32.xlu0 %v761, 64
  %v1402 = vpop.permute.xlu0 %1401
  %1403 = vrot.lane.b32.xlu0 %v762, 64
  %v1404 = vpop.permute.xlu0 %1403
  %1405 = vrot.lane.b32.xlu0 %v763, 64
  %v1406 = vpop.permute.xlu0 %1405
  %1407 = vrot.lane.b32.xlu0 %v764, 64
  %v1408 = vpop.permute.xlu0 %1407
  %1409 = vrot.lane.b32.xlu0 %v765, 64
  %v1410 = vpop.permute.xlu0 %1409
  %1411 = vrot.lane.b32.xlu0 %v766, 64
  %v1412 = vpop.permute.xlu0 %1411
  %1413 = vrot.lane.b32.xlu0 %v767, 64
  %v1414 = vpop.permute.xlu0 %1413
  %1415 = vrot.lane.b32.xlu0 %v768, 64
  %v1416 = vpop.permute.xlu0 %1415
  %1417 = vrot.lane.b32.xlu0 %v769, 64
  %v1418 = vpop.permute.xlu0 %1417
  %1419 = vrot.lane.b32.xlu0 %v770, 64
  %v1420 = vpop.permute.xlu0 %1419
  %1421 = vrot.lane.b32.xlu0 %v771, 64
  %v1422 = vpop.permute.xlu0 %1421
  %1423 = vrot.lane.b32.xlu0 %v772, 64
  %v1424 = vpop.permute.xlu0 %1423
  %1425 = vrot.lane.b32.xlu0 %v773, 64
  %v1426 = vpop.permute.xlu0 %1425
  %1427 = vrot.lane.b32.xlu0 %v774, 64
  %v1428 = vpop.permute.xlu0 %1427
  %1429 = vrot.lane.b32.xlu0 %v775, 64
  %v1430 = vpop.permute.xlu0 %1429
  %1431 = vrot.lane.b32.xlu0 %v776, 64
  %v1432 = vpop.permute.xlu0 %1431
  %1433 = vrot.lane.b32.xlu0 %v777, 64
  %v1434 = vpop.permute.xlu0 %1433
  %1435 = vrot.lane.b32.xlu0 %v778, 64
  %v1436 = vpop.permute.xlu0 %1435
  %1437 = vrot.lane.b32.xlu0 %v779, 64
  %v1438 = vpop.permute.xlu0 %1437
  %1439 = vrot.lane.b32.xlu0 %v780, 64
  %v1440 = vpop.permute.xlu0 %1439
  %1441 = vrot.lane.b32.xlu0 %v781, 64
  %v1442 = vpop.permute.xlu0 %1441
  %1443 = vrot.lane.b32.xlu0 %v782, 64
  %v1444 = vpop.permute.xlu0 %1443
  %1445 = vrot.lane.b32.xlu0 %v783, 64
  %v1446 = vpop.permute.xlu0 %1445
  %1447 = vrot.lane.b32.xlu0 %v784, 64
  %v1448 = vpop.permute.xlu0 %1447
  %1449 = vrot.lane.b32.xlu0 %v785, 64
  %v1450 = vpop.permute.xlu0 %1449
  %1451 = vrot.lane.b32.xlu0 %v786, 64
  %v1452 = vpop.permute.xlu0 %1451
  %1453 = vrot.lane.b32.xlu0 %v787, 64
  %v1454 = vpop.permute.xlu0 %1453
  %1455 = vrot.lane.b32.xlu0 %v788, 64
  %v1456 = vpop.permute.xlu0 %1455
  %1457 = vrot.lane.b32.xlu0 %v789, 64
  %v1458 = vpop.permute.xlu0 %1457
  %1459 = vrot.lane.b32.xlu0 %v790, 64
  %v1460 = vpop.permute.xlu0 %1459
  %1461 = vrot.lane.b32.xlu0 %v791, 64
  %v1462 = vpop.permute.xlu0 %1461
  %1463 = vrot.lane.b32.xlu0 %v792, 64
  %v1464 = vpop.permute.xlu0 %1463
  %1529 = vrot.lane.b32.xlu0 %v793, 96
  %v1530 = vpop.permute.xlu0 %1529
  %1531 = vrot.lane.b32.xlu0 %v794, 96
  %v1532 = vpop.permute.xlu0 %1531
  %1533 = vrot.lane.b32.xlu0 %v795, 96
  %v1534 = vpop.permute.xlu0 %1533
  %1535 = vrot.lane.b32.xlu0 %v796, 96
  %v1536 = vpop.permute.xlu0 %1535
  %1537 = vrot.lane.b32.xlu0 %v797, 96
  %v1538 = vpop.permute.xlu0 %1537
  %1539 = vrot.lane.b32.xlu0 %v798, 96
  %v1540 = vpop.permute.xlu0 %1539
  %1541 = vrot.lane.b32.xlu0 %v799, 96
  %v1542 = vpop.permute.xlu0 %1541
  %1543 = vrot.lane.b32.xlu0 %v800, 96
  %v1544 = vpop.permute.xlu0 %1543
  %1545 = vrot.lane.b32.xlu0 %v801, 96
  %v1546 = vpop.permute.xlu0 %1545
  %1547 = vrot.lane.b32.xlu0 %v802, 96
  %v1548 = vpop.permute.xlu0 %1547
  %1549 = vrot.lane.b32.xlu0 %v803, 96
  %v1550 = vpop.permute.xlu0 %1549
  %1551 = vrot.lane.b32.xlu0 %v804, 96
  %v1552 = vpop.permute.xlu0 %1551
  %1553 = vrot.lane.b32.xlu0 %v805, 96
  %v1554 = vpop.permute.xlu0 %1553
  %1555 = vrot.lane.b32.xlu0 %v806, 96
  %v1556 = vpop.permute.xlu0 %1555
  %1557 = vrot.lane.b32.xlu0 %v807, 96
  %v1558 = vpop.permute.xlu0 %1557
  %1559 = vrot.lane.b32.xlu0 %v808, 96
  %v1560 = vpop.permute.xlu0 %1559
  %1561 = vrot.lane.b32.xlu0 %v809, 96
  %v1562 = vpop.permute.xlu0 %1561
  %1563 = vrot.lane.b32.xlu0 %v810, 96
  %v1564 = vpop.permute.xlu0 %1563
  %1565 = vrot.lane.b32.xlu0 %v811, 96
  %v1566 = vpop.permute.xlu0 %1565
  %1567 = vrot.lane.b32.xlu0 %v812, 96
  %v1568 = vpop.permute.xlu0 %1567
  %1569 = vrot.lane.b32.xlu0 %v813, 96
  %v1570 = vpop.permute.xlu0 %1569
  %1571 = vrot.lane.b32.xlu0 %v814, 96
  %v1572 = vpop.permute.xlu0 %1571
  %1573 = vrot.lane.b32.xlu0 %v815, 96
  %v1574 = vpop.permute.xlu0 %1573
  %1575 = vrot.lane.b32.xlu0 %v816, 96
  %v1576 = vpop.permute.xlu0 %1575
  %1577 = vrot.lane.b32.xlu0 %v817, 96
  %v1578 = vpop.permute.xlu0 %1577
  %1579 = vrot.lane.b32.xlu0 %v818, 96
  %v1580 = vpop.permute.xlu0 %1579
  %1581 = vrot.lane.b32.xlu0 %v819, 96
  %v1582 = vpop.permute.xlu0 %1581
  %1583 = vrot.lane.b32.xlu0 %v820, 96
  %v1584 = vpop.permute.xlu0 %1583
  %1585 = vrot.lane.b32.xlu0 %v821, 96
  %v1586 = vpop.permute.xlu0 %1585
  %1587 = vrot.lane.b32.xlu0 %v822, 96
  %v1588 = vpop.permute.xlu0 %1587
  %1589 = vrot.lane.b32.xlu0 %v823, 96
  %v1590 = vpop.permute.xlu0 %1589
  %1591 = vrot.lane.b32.xlu0 %v824, 96
  %v1592 = vpop.permute.xlu0 %1591
  %v1625 = vsel %vm473, %v568, %v890
  %v1626 = vsel %vm473, %v569, %v892
  %v1627 = vsel %vm473, %v570, %v894
  %v1628 = vsel %vm473, %v571, %v896
  %v1629 = vsel %vm473, %v572, %v898
  %v1630 = vsel %vm473, %v573, %v900
  %v1631 = vsel %vm473, %v574, %v902
  %v1632 = vsel %vm473, %v575, %v904
  %v1633 = vsel %vm473, %v576, %v906
  %v1634 = vsel %vm473, %v577, %v908
  %v1635 = vsel %vm473, %v578, %v910
  %v1636 = vsel %vm473, %v579, %v912
  %v1637 = vsel %vm473, %v580, %v914
  %v1638 = vsel %vm473, %v581, %v916
  %v1639 = vsel %vm473, %v582, %v918
  %v1640 = vsel %vm473, %v583, %v920
  %v1641 = vsel %vm473, %v584, %v922
  %v1642 = vsel %vm473, %v585, %v924
  %v1643 = vsel %vm473, %v586, %v926
  %v1644 = vsel %vm473, %v587, %v928
  %v1645 = vsel %vm473, %v588, %v930
  %v1646 = vsel %vm473, %v589, %v932
  %v1647 = vsel %vm473, %v590, %v934
  %v1648 = vsel %vm473, %v591, %v936
  %v1649 = vsel %vm473, %v592, %v938
  %v1650 = vsel %vm473, %v593, %v940
  %v1651 = vsel %vm473, %v594, %v942
  %v1652 = vsel %vm473, %v595, %v944
  %v1653 = vsel %vm473, %v596, %v946
  %v1654 = vsel %vm473, %v597, %v948
  %v1655 = vsel %vm473, %v598, %v950
  %v1656 = vsel %vm473, %v599, %v952
  %v1657 = vsel %vm231, %v1625, %v1018
  %v1658 = vsel %vm231, %v1626, %v1020
  %v1659 = vsel %vm231, %v1627, %v1022
  %v1660 = vsel %vm231, %v1628, %v1024
  %v1661 = vsel %vm231, %v1629, %v1026
  %v1662 = vsel %vm231, %v1630, %v1028
  %v1663 = vsel %vm231, %v1631, %v1030
  %v1664 = vsel %vm231, %v1632, %v1032
  %v1665 = vsel %vm231, %v1633, %v1034
  %v1666 = vsel %vm231, %v1634, %v1036
  %v1667 = vsel %vm231, %v1635, %v1038
  %v1668 = vsel %vm231, %v1636, %v1040
  %v1669 = vsel %vm231, %v1637, %v1042
  %v1670 = vsel %vm231, %v1638, %v1044
  %v1671 = vsel %vm231, %v1639, %v1046
  %v1672 = vsel %vm231, %v1640, %v1048
  %v1673 = vsel %vm231, %v1641, %v1050
  %v1674 = vsel %vm231, %v1642, %v1052
  %v1675 = vsel %vm231, %v1643, %v1054
  %v1676 = vsel %vm231, %v1644, %v1056
  %v1677 = vsel %vm231, %v1645, %v1058
  %v1678 = vsel %vm231, %v1646, %v1060
  %v1679 = vsel %vm231, %v1647, %v1062
  %v1680 = vsel %vm231, %v1648, %v1064
  %v1681 = vsel %vm231, %v1649, %v1066
  %v1682 = vsel %vm231, %v1650, %v1068
  %v1683 = vsel %vm231, %v1651, %v1070
  %v1684 = vsel %vm231, %v1652, %v1072
  %v1685 = vsel %vm231, %v1653, %v1074
  %v1686 = vsel %vm231, %v1654, %v1076
  %v1687 = vsel %vm231, %v1655, %v1078
  %v1688 = vsel %vm231, %v1656, %v1080
  %vm1689 = vcmask 785408
  %v1690 = vsel %vm1689, %v1657, %v1146
  %v1691 = vsel %vm1689, %v1658, %v1148
  %v1692 = vsel %vm1689, %v1659, %v1150
  %v1693 = vsel %vm1689, %v1660, %v1152
  %v1694 = vsel %vm1689, %v1661, %v1154
  %v1695 = vsel %vm1689, %v1662, %v1156
  %v1696 = vsel %vm1689, %v1663, %v1158
  %v1697 = vsel %vm1689, %v1664, %v1160
  %v1698 = vsel %vm1689, %v1665, %v1162
  %v1699 = vsel %vm1689, %v1666, %v1164
  %v1700 = vsel %vm1689, %v1667, %v1166
  %v1701 = vsel %vm1689, %v1668, %v1168
  %v1702 = vsel %vm1689, %v1669, %v1170
  %v1703 = vsel %vm1689, %v1670, %v1172
  %v1704 = vsel %vm1689, %v1671, %v1174
  %v1705 = vsel %vm1689, %v1672, %v1176
  %v1706 = vsel %vm1689, %v1673, %v1178
  %v1707 = vsel %vm1689, %v1674, %v1180
  %v1708 = vsel %vm1689, %v1675, %v1182
  %v1709 = vsel %vm1689, %v1676, %v1184
  %v1710 = vsel %vm1689, %v1677, %v1186
  %v1711 = vsel %vm1689, %v1678, %v1188
  %v1712 = vsel %vm1689, %v1679, %v1190
  %v1713 = vsel %vm1689, %v1680, %v1192
  %v1714 = vsel %vm1689, %v1681, %v1194
  %v1715 = vsel %vm1689, %v1682, %v1196
  %v1716 = vsel %vm1689, %v1683, %v1198
  %v1717 = vsel %vm1689, %v1684, %v1200
  %v1718 = vsel %vm1689, %v1685, %v1202
  %v1719 = vsel %vm1689, %v1686, %v1204
  %v1720 = vsel %vm1689, %v1687, %v1206
  %v1721 = vsel %vm1689, %v1688, %v1208
  %v1722 = vsel %vm473, %v697, %v1274
  %v1723 = vsel %vm473, %v698, %v1276
  %v1724 = vsel %vm473, %v699, %v1278
  %v1725 = vsel %vm473, %v700, %v1280
  %v1726 = vsel %vm473, %v701, %v1282
  %v1727 = vsel %vm473, %v702, %v1284
  %v1728 = vsel %vm473, %v703, %v1286
  %v1729 = vsel %vm473, %v704, %v1288
  %v1730 = vsel %vm473, %v705, %v1290
  %v1731 = vsel %vm473, %v706, %v1292
  %v1732 = vsel %vm473, %v707, %v1294
  %v1733 = vsel %vm473, %v708, %v1296
  %v1734 = vsel %vm473, %v709, %v1298
  %v1735 = vsel %vm473, %v710, %v1300
  %v1736 = vsel %vm473, %v711, %v1302
  %v1737 = vsel %vm473, %v712, %v1304
  %v1738 = vsel %vm473, %v713, %v1306
  %v1739 = vsel %vm473, %v714, %v1308
  %v1740 = vsel %vm473, %v715, %v1310
  %v1741 = vsel %vm473, %v716, %v1312
  %v1742 = vsel %vm473, %v717, %v1314
  %v1743 = vsel %vm473, %v718, %v1316
  %v1744 = vsel %vm473, %v719, %v1318
  %v1745 = vsel %vm473, %v720, %v1320
  %v1746 = vsel %vm473, %v721, %v1322
  %v1747 = vsel %vm473, %v722, %v1324
  %v1748 = vsel %vm473, %v723, %v1326
  %v1749 = vsel %vm473, %v724, %v1328
  %v1750 = vsel %vm473, %v725, %v1330
  %v1751 = vsel %vm473, %v726, %v1332
  %v1752 = vsel %vm473, %v727, %v1334
  %v1753 = vsel %vm473, %v728, %v1336
  %v1754 = vsel %vm231, %v1722, %v1402
  %v1755 = vsel %vm231, %v1723, %v1404
  %v1756 = vsel %vm231, %v1724, %v1406
  %v1757 = vsel %vm231, %v1725, %v1408
  %v1758 = vsel %vm231, %v1726, %v1410
  %v1759 = vsel %vm231, %v1727, %v1412
  %v1760 = vsel %vm231, %v1728, %v1414
  %v1761 = vsel %vm231, %v1729, %v1416
  %v1762 = vsel %vm231, %v1730, %v1418
  %v1763 = vsel %vm231, %v1731, %v1420
  %v1764 = vsel %vm231, %v1732, %v1422
  %v1765 = vsel %vm231, %v1733, %v1424
  %v1766 = vsel %vm231, %v1734, %v1426
  %v1767 = vsel %vm231, %v1735, %v1428
  %v1768 = vsel %vm231, %v1736, %v1430
  %v1769 = vsel %vm231, %v1737, %v1432
  %v1770 = vsel %vm231, %v1738, %v1434
  %v1771 = vsel %vm231, %v1739, %v1436
  %v1772 = vsel %vm231, %v1740, %v1438
  %v1773 = vsel %vm231, %v1741, %v1440
  %v1774 = vsel %vm231, %v1742, %v1442
  %v1775 = vsel %vm231, %v1743, %v1444
  %v1776 = vsel %vm231, %v1744, %v1446
  %v1777 = vsel %vm231, %v1745, %v1448
  %v1778 = vsel %vm231, %v1746, %v1450
  %v1779 = vsel %vm231, %v1747, %v1452
  %v1780 = vsel %vm231, %v1748, %v1454
  %v1781 = vsel %vm231, %v1749, %v1456
  %v1782 = vsel %vm231, %v1750, %v1458
  %v1783 = vsel %vm231, %v1751, %v1460
  %v1784 = vsel %vm231, %v1752, %v1462
  %v1785 = vsel %vm231, %v1753, %v1464
  %v1786 = vsel %vm1689, %v1754, %v1530
  %v1787 = vsel %vm1689, %v1755, %v1532
  %v1788 = vsel %vm1689, %v1756, %v1534
  %v1789 = vsel %vm1689, %v1757, %v1536
  %v1790 = vsel %vm1689, %v1758, %v1538
  %v1791 = vsel %vm1689, %v1759, %v1540
  %v1792 = vsel %vm1689, %v1760, %v1542
  %v1793 = vsel %vm1689, %v1761, %v1544
  %v1794 = vsel %vm1689, %v1762, %v1546
  %v1795 = vsel %vm1689, %v1763, %v1548
  %v1796 = vsel %vm1689, %v1764, %v1550
  %v1797 = vsel %vm1689, %v1765, %v1552
  %v1798 = vsel %vm1689, %v1766, %v1554
  %v1799 = vsel %vm1689, %v1767, %v1556
  %v1800 = vsel %vm1689, %v1768, %v1558
  %v1801 = vsel %vm1689, %v1769, %v1560
  %v1802 = vsel %vm1689, %v1770, %v1562
  %v1803 = vsel %vm1689, %v1771, %v1564
  %v1804 = vsel %vm1689, %v1772, %v1566
  %v1805 = vsel %vm1689, %v1773, %v1568
  %v1806 = vsel %vm1689, %v1774, %v1570
  %v1807 = vsel %vm1689, %v1775, %v1572
  %v1808 = vsel %vm1689, %v1776, %v1574
  %v1809 = vsel %vm1689, %v1777, %v1576
  %v1810 = vsel %vm1689, %v1778, %v1578
  %v1811 = vsel %vm1689, %v1779, %v1580
  %v1812 = vsel %vm1689, %v1780, %v1582
  %v1813 = vsel %vm1689, %v1781, %v1584
  %v1814 = vsel %vm1689, %v1782, %v1586
  %v1815 = vsel %vm1689, %v1783, %v1588
  %v1816 = vsel %vm1689, %v1784, %v1590
  %v1817 = vsel %vm1689, %v1785, %v1592
  %v1818 = vpack.c.bf16 %v1691, %v1690
  %v1819 = vpack.c.bf16 %v1787, %v1786
  %v1820 = vpack.c.bf16 %v826, %v825
  %v1821 = vpack.c.bf16 %v1693, %v1692
  %v1822 = vpack.c.bf16 %v1789, %v1788
  %v1823 = vpack.c.bf16 %v828, %v827
  %v1824 = vpack.c.bf16 %v1695, %v1694
  %v1825 = vpack.c.bf16 %v1791, %v1790
  %v1826 = vpack.c.bf16 %v830, %v829
  %v1827 = vpack.c.bf16 %v1697, %v1696
  %v1828 = vpack.c.bf16 %v1793, %v1792
  %v1829 = vpack.c.bf16 %v832, %v831
  %v1830 = vpack.c.bf16 %v1699, %v1698
  %v1831 = vpack.c.bf16 %v1795, %v1794
  %v1832 = vpack.c.bf16 %v834, %v833
  %v1833 = vpack.c.bf16 %v1701, %v1700
  %v1834 = vpack.c.bf16 %v1797, %v1796
  %v1835 = vpack.c.bf16 %v836, %v835
  %v1836 = vpack.c.bf16 %v1703, %v1702
  %v1837 = vpack.c.bf16 %v1799, %v1798
  %v1838 = vpack.c.bf16 %v838, %v837
  %v1839 = vpack.c.bf16 %v1705, %v1704
  %v1840 = vpack.c.bf16 %v1801, %v1800
  %v1841 = vpack.c.bf16 %v840, %v839
  %v1842 = vpack.c.bf16 %v1707, %v1706
  %v1843 = vpack.c.bf16 %v1803, %v1802
  %v1844 = vpack.c.bf16 %v842, %v841
  %v1845 = vpack.c.bf16 %v1709, %v1708
  %v1846 = vpack.c.bf16 %v1805, %v1804
  %v1847 = vpack.c.bf16 %v844, %v843
  %v1848 = vpack.c.bf16 %v1711, %v1710
  %v1849 = vpack.c.bf16 %v1807, %v1806
  %v1850 = vpack.c.bf16 %v846, %v845
  %v1851 = vpack.c.bf16 %v1713, %v1712
  %v1852 = vpack.c.bf16 %v1809, %v1808
  %v1853 = vpack.c.bf16 %v848, %v847
  %v1854 = vpack.c.bf16 %v1715, %v1714
  %v1855 = vpack.c.bf16 %v1811, %v1810
  %v1856 = vpack.c.bf16 %v850, %v849
  %v1857 = vpack.c.bf16 %v1717, %v1716
  %v1858 = vpack.c.bf16 %v1813, %v1812
  %v1859 = vpack.c.bf16 %v852, %v851
  %v1860 = vpack.c.bf16 %v1719, %v1718
  %v1861 = vpack.c.bf16 %v1815, %v1814
  %v1862 = vpack.c.bf16 %v854, %v853
  %v1863 = vpack.c.bf16 %v1721, %v1720
  %v1864 = vpack.c.bf16 %v1817, %v1816
  %v1865 = vpack.c.bf16 %v856, %v855
  %v1866 = vld [vmem:[%s4] sm:$0xf]
  %v1867 = vld [vmem:[%s4 + $0x4] sm:$0xf]
  %v1868 = vld [vmem:[%s4 + $0x8] sm:$0xf]
  %v1869 = vld [vmem:[%s4 + $0xc] sm:$0xf]
  %v1870 = vld [vmem:[%s4 + $0x10] sm:$0xf]
  %v1871 = vld [vmem:[%s4 + $0x14] sm:$0xf]
  %v1872 = vld [vmem:[%s4 + $0x18] sm:$0xf]
  %v1873 = vld [vmem:[%s4 + $0x1c] sm:$0xf]
  %v1874 = vld [vmem:[%s4 + $0x20] sm:$0xf]
  %v1875 = vld [vmem:[%s4 + $0x24] sm:$0xf]
  %v1876 = vld [vmem:[%s4 + $0x28] sm:$0xf]
  %v1877 = vld [vmem:[%s4 + $0x2c] sm:$0xf]
  %v1878 = vld [vmem:[%s4 + $0x30] sm:$0xf]
  %v1879 = vld [vmem:[%s4 + $0x34] sm:$0xf]
  %v1880 = vld [vmem:[%s4 + $0x38] sm:$0xf]
  %v1881 = vld [vmem:[%s4 + $0x3c] sm:$0xf]
  %v1882 = vld [vmem:[%s4 + $0x40] sm:$0xf]
  %v1883 = vld [vmem:[%s4 + $0x44] sm:$0xf]
  %v1884 = vld [vmem:[%s4 + $0x48] sm:$0xf]
  %v1885 = vld [vmem:[%s4 + $0x4c] sm:$0xf]
  %v1886 = vld [vmem:[%s4 + $0x50] sm:$0xf]
  %v1887 = vld [vmem:[%s4 + $0x54] sm:$0xf]
  %v1888 = vld [vmem:[%s4 + $0x58] sm:$0xf]
  %v1889 = vld [vmem:[%s4 + $0x5c] sm:$0xf]
  %v1890 = vld [vmem:[%s4 + $0x60] sm:$0xf]
  %v1891 = vld [vmem:[%s4 + $0x64] sm:$0xf]
  %v1892 = vld [vmem:[%s4 + $0x68] sm:$0xf]
  %v1893 = vld [vmem:[%s4 + $0x6c] sm:$0xf]
  %v1894 = vld [vmem:[%s4 + $0x70] sm:$0xf]
  %v1895 = vld [vmem:[%s4 + $0x74] sm:$0xf]
  %v1896 = vld [vmem:[%s4 + $0x78] sm:$0xf]
  %v1897 = vld [vmem:[%s4 + $0x7c] sm:$0xf]
  %v1898 = vld [vmem:[%s4 + $0x80] sm:$0xf]
  %v1899 = vld [vmem:[%s4 + $0x84] sm:$0xf]
  %v1900 = vld [vmem:[%s4 + $0x88] sm:$0xf]
  %v1901 = vld [vmem:[%s4 + $0x8c] sm:$0xf]
  %v1902 = vld [vmem:[%s5] sm:$0x1]
  %v1904 = vlaneseq
  %v1905 = vshrl.u32 %v1904, 7
  %v1906 = vsub.s32 0, %v1905
  %v1907 = vrot.slane %v1902, %v1906
  %v1945 = vunpack.c.l.b16 %v1866
  %v1946 = vunpack.c.l.b16 %v1867
  %v1947 = vunpack.c.l.b16 %v1868
  %v1948 = vunpack.c.l.b16 %v1869
  %v1949 = vunpack.c.l.b16 %v1870
  %v1950 = vunpack.c.l.b16 %v1871
  %v1951 = vunpack.c.l.b16 %v1872
  %v1952 = vunpack.c.l.b16 %v1873
  %v1953 = vunpack.c.l.b16 %v1874
  %v1954 = vunpack.c.l.b16 %v1875
  %v1955 = vunpack.c.l.b16 %v1876
  %v1956 = vunpack.c.l.b16 %v1877
  %v1957 = vunpack.c.l.b16 %v1878
  %v1958 = vunpack.c.l.b16 %v1879
  %v1959 = vunpack.c.l.b16 %v1880
  %v1960 = vunpack.c.l.b16 %v1881
  %v1961 = vunpack.c.l.b16 %v1882
  %v1962 = vunpack.c.l.b16 %v1883
  %v1963 = vunpack.c.l.b16 %v1884
  %v1964 = vunpack.c.l.b16 %v1885
  %v1965 = vunpack.c.l.b16 %v1886
  %v1966 = vunpack.c.l.b16 %v1887
  %v1967 = vunpack.c.l.b16 %v1888
  %v1968 = vunpack.c.l.b16 %v1889
  %v1969 = vunpack.c.l.b16 %v1890
  %v1970 = vunpack.c.l.b16 %v1891
  %v1971 = vunpack.c.l.b16 %v1892
  %v1972 = vunpack.c.l.b16 %v1893
  %v1973 = vunpack.c.l.b16 %v1894
  %v1974 = vunpack.c.l.b16 %v1895
  %v1975 = vunpack.c.l.b16 %v1896
  %v1976 = vunpack.c.l.b16 %v1897
  %v1977 = vunpack.c.l.b16 %v1898
  %v1978 = vunpack.c.l.b16 %v1899
  %v1979 = vunpack.c.l.b16 %v1900
  %v1980 = vunpack.c.l.b16 %v1901
  %v1981 = vpack.c.b16 %v1946, %v1945
  %v1982 = vpack.c.b16 %v1948, %v1947
  %v1983 = vpack.c.b16 %v1950, %v1949
  %v1984 = vpack.c.b16 %v1952, %v1951
  %v1985 = vpack.c.b16 %v1954, %v1953
  %v1986 = vpack.c.b16 %v1956, %v1955
  %v1987 = vpack.c.b16 %v1958, %v1957
  %v1988 = vpack.c.b16 %v1960, %v1959
  %v1989 = vpack.c.b16 %v1962, %v1961
  %v1990 = vpack.c.b16 %v1964, %v1963
  %v1991 = vpack.c.b16 %v1966, %v1965
  %v1992 = vpack.c.b16 %v1968, %v1967
  %v1993 = vpack.c.b16 %v1970, %v1969
  %v1994 = vpack.c.b16 %v1972, %v1971
  %v1995 = vpack.c.b16 %v1974, %v1973
  %v1996 = vpack.c.b16 %v1976, %v1975
  %v1997 = vpack.c.b16 %v1978, %v1977
  %v1998 = vpack.c.b16 %v1980, %v1979
  %v2018 = vsel %vm473, %v1820, 0
  %v2021 = vsel %vm473, %v1823, 0
  %v2024 = vsel %vm473, %v1826, 0
  %v2027 = vsel %vm473, %v1829, 0
  %v2030 = vsel %vm473, %v1832, 0
  %v2033 = vsel %vm473, %v1835, 0
  %v2036 = vsel %vm473, %v1838, 0
  %v2039 = vsel %vm473, %v1841, 0
  %v2042 = vsel %vm473, %v1844, 0
  %v2045 = vsel %vm473, %v1847, 0
  %v2048 = vsel %vm473, %v1850, 0
  %v2051 = vsel %vm473, %v1853, 0
  %v2054 = vsel %vm473, %v1856, 0
  %v2057 = vsel %vm473, %v1859, 0
  %v2060 = vsel %vm473, %v1862, 0
  %v2063 = vsel %vm473, %v1865, 0
  %2065 = vmatprep.subr.bf16.mxu0 0
  %2066 = vmatpush1.bf16.msra.mxu0 %v1981
  %2067 = vmatprep.subr.bf16.mxu0 0
  %2068 = vmatpush1.bf16.msra.mxu0 %v1982
  %2069 = vmatprep.subr.bf16.mxu0 0
  %2070 = vmatpush1.bf16.msra.mxu0 %v1983
  %2071 = vmatprep.subr.bf16.mxu0 0
  %2072 = vmatpush1.bf16.msra.mxu0 %v1984
  %2073 = vmatprep.subr.bf16.mxu0 0
  %2074 = vmatpush1.bf16.msra.mxu0 %v1985
  %2075 = vmatprep.subr.bf16.mxu0 0
  %2076 = vmatpush1.bf16.msra.mxu0 %v1986
  %2077 = vmatprep.subr.bf16.mxu0 0
  %2078 = vmatpush1.bf16.msra.mxu0 %v1987
  %2079 = vmatprep.subr.bf16.mxu0 0
  %2080 = vmatpush1.bf16.msra.mxu0 %v1988
  %2081 = vmatprep.subr.bf16.mxu0 0
  %2082 = vmatpush1.bf16.msra.mxu0 %v1989
  %2083 = vmatprep.subr.bf16.mxu0 0
  %2084 = vmatpush1.bf16.msra.mxu0 %v1990
  %2085 = vmatprep.subr.bf16.mxu0 0
  %2086 = vmatpush1.bf16.msra.mxu0 %v1991
  %2087 = vmatprep.subr.bf16.mxu0 0
  %2088 = vmatpush1.bf16.msra.mxu0 %v1992
  %2089 = vmatprep.subr.bf16.mxu0 0
  %2090 = vmatpush1.bf16.msra.mxu0 %v1993
  %2091 = vmatprep.subr.bf16.mxu0 0
  %2092 = vmatpush1.bf16.msra.mxu0 %v1994
  %2093 = vmatprep.subr.bf16.mxu0 0
  %2094 = vmatpush1.bf16.msra.mxu0 %v1995
  %2095 = vmatprep.subr.bf16.mxu0 0
  %2096 = vmatpush1.bf16.msra.mxu0 %v1996
  %2097 = vmatprep.mubr.bf16.mxu0 %v1819
  %2098 = vmatmul.mubr.bf16.gmra.mrb[0].mxu0 %v1818
  %v2099 = vpop.f32.mrb[0].mxu0
  %v2100 = vadd.f32 %v1907, %v2099
  %v2101 = vpop.f32.mrb[0].mxu0
  %v2102 = vpop.f32.mrb[0].mxu0
  %v2103 = vadd.f32 %v1907, %v2102
  %v2104 = vpop.f32.mrb[0].mxu0
  %2105 = vmatprep.mubr.bf16.mxu0 %v1822
  %2106 = vmatmul.mubr.bf16.gmra.mrb[0].mxu0 %v1821
  %v2107 = vpop.f32.mrb[0].mxu0
  %v2108 = vadd.f32 %v1907, %v2107
  %v2109 = vpop.f32.mrb[0].mxu0
  %v2110 = vpop.f32.mrb[0].mxu0
  %v2111 = vadd.f32 %v1907, %v2110
  %v2112 = vpop.f32.mrb[0].mxu0
  %2113 = vmatprep.mubr.bf16.mxu0 %v1825
  %2114 = vmatmul.mubr.bf16.gmra.mrb[0].mxu0 %v1824
  %v2115 = vpop.f32.mrb[0].mxu0
  %v2116 = vadd.f32 %v1907, %v2115
  %v2117 = vpop.f32.mrb[0].mxu0
  %v2118 = vpop.f32.mrb[0].mxu0
  %v2119 = vadd.f32 %v1907, %v2118
  %v2120 = vpop.f32.mrb[0].mxu0
  %2121 = vmatprep.mubr.bf16.mxu0 %v1828
  %2122 = vmatmul.mubr.bf16.gmra.mrb[0].mxu0 %v1827
  %v2123 = vpop.f32.mrb[0].mxu0
  %v2124 = vadd.f32 %v1907, %v2123
  %v2125 = vpop.f32.mrb[0].mxu0
  %v2126 = vpop.f32.mrb[0].mxu0
  %v2127 = vadd.f32 %v1907, %v2126
  %v2128 = vpop.f32.mrb[0].mxu0
  %2129 = vmatprep.mubr.bf16.mxu0 %v1831
  %2130 = vmatmul.mubr.bf16.gmra.mrb[0].mxu0 %v1830
  %v2131 = vpop.f32.mrb[0].mxu0
  %v2132 = vadd.f32 %v1907, %v2131
  %v2133 = vpop.f32.mrb[0].mxu0
  %v2134 = vpop.f32.mrb[0].mxu0
  %v2135 = vadd.f32 %v1907, %v2134
  %v2136 = vpop.f32.mrb[0].mxu0
  %2137 = vmatprep.mubr.bf16.mxu0 %v1834
  %2138 = vmatmul.mubr.bf16.gmra.mrb[0].mxu0 %v1833
  %v2139 = vpop.f32.mrb[0].mxu0
  %v2140 = vadd.f32 %v1907, %v2139
  %v2141 = vpop.f32.mrb[0].mxu0
  %v2142 = vpop.f32.mrb[0].mxu0
  %v2143 = vadd.f32 %v1907, %v2142
  %v2144 = vpop.f32.mrb[0].mxu0
  %2145 = vmatprep.mubr.bf16.mxu0 %v1837
  %2146 = vmatmul.mubr.bf16.gmra.mrb[0].mxu0 %v1836
  %v2147 = vpop.f32.mrb[0].mxu0
  %v2148 = vadd.f32 %v1907, %v2147
  %v2149 = vpop.f32.mrb[0].mxu0
  %v2150 = vpop.f32.mrb[0].mxu0
  %v2151 = vadd.f32 %v1907, %v2150
  %v2152 = vpop.f32.mrb[0].mxu0
  %2153 = vmatprep.mubr.bf16.mxu0 %v1840
  %2154 = vmatmul.mubr.bf16.gmra.mrb[0].mxu0 %v1839
  %v2155 = vpop.f32.mrb[0].mxu0
  %v2156 = vadd.f32 %v1907, %v2155
  %v2157 = vpop.f32.mrb[0].mxu0
  %v2158 = vpop.f32.mrb[0].mxu0
  %v2159 = vadd.f32 %v1907, %v2158
  %v2160 = vpop.f32.mrb[0].mxu0
  %2161 = vmatprep.mubr.bf16.mxu0 %v1843
  %2162 = vmatmul.mubr.bf16.gmra.mrb[0].mxu0 %v1842
  %v2163 = vpop.f32.mrb[0].mxu0
  %v2164 = vadd.f32 %v1907, %v2163
  %v2165 = vpop.f32.mrb[0].mxu0
  %v2166 = vpop.f32.mrb[0].mxu0
  %v2167 = vadd.f32 %v1907, %v2166
  %v2168 = vpop.f32.mrb[0].mxu0
  %2169 = vmatprep.mubr.bf16.mxu0 %v1846
  %2170 = vmatmul.mubr.bf16.gmra.mrb[0].mxu0 %v1845
  %v2171 = vpop.f32.mrb[0].mxu0
  %v2172 = vadd.f32 %v1907, %v2171
  %v2173 = vpop.f32.mrb[0].mxu0
  %v2174 = vpop.f32.mrb[0].mxu0
  %v2175 = vadd.f32 %v1907, %v2174
  %v2176 = vpop.f32.mrb[0].mxu0
  %2177 = vmatprep.mubr.bf16.mxu0 %v1849
  %2178 = vmatmul.mubr.bf16.gmra.mrb[0].mxu0 %v1848
  %v2179 = vpop.f32.mrb[0].mxu0
  %v2180 = vadd.f32 %v1907, %v2179
  %v2181 = vpop.f32.mrb[0].mxu0
  %v2182 = vpop.f32.mrb[0].mxu0
  %v2183 = vadd.f32 %v1907, %v2182
  %v2184 = vpop.f32.mrb[0].mxu0
  %2185 = vmatprep.mubr.bf16.mxu0 %v1852
  %2186 = vmatmul.mubr.bf16.gmra.mrb[0].mxu0 %v1851
  %v2187 = vpop.f32.mrb[0].mxu0
  %v2188 = vadd.f32 %v1907, %v2187
  %v2189 = vpop.f32.mrb[0].mxu0
  %v2190 = vpop.f32.mrb[0].mxu0
  %v2191 = vadd.f32 %v1907, %v2190
  %v2192 = vpop.f32.mrb[0].mxu0
  %2193 = vmatprep.mubr.bf16.mxu0 %v1855
  %2194 = vmatmul.mubr.bf16.gmra.mrb[0].mxu0 %v1854
  %v2195 = vpop.f32.mrb[0].mxu0
  %v2196 = vadd.f32 %v1907, %v2195
  %v2197 = vpop.f32.mrb[0].mxu0
  %v2198 = vpop.f32.mrb[0].mxu0
  %v2199 = vadd.f32 %v1907, %v2198
  %v2200 = vpop.f32.mrb[0].mxu0
  %2201 = vmatprep.mubr.bf16.mxu0 %v1858
  %2202 = vmatmul.mubr.bf16.gmra.mrb[0].mxu0 %v1857
  %v2203 = vpop.f32.mrb[0].mxu0
  %v2204 = vadd.f32 %v1907, %v2203
  %v2205 = vpop.f32.mrb[0].mxu0
  %v2206 = vpop.f32.mrb[0].mxu0
  %v2207 = vadd.f32 %v1907, %v2206
  %v2208 = vpop.f32.mrb[0].mxu0
  %2209 = vmatprep.mubr.bf16.mxu0 %v1861
  %2210 = vmatmul.mubr.bf16.gmra.mrb[0].mxu0 %v1860
  %v2211 = vpop.f32.mrb[0].mxu0
  %v2212 = vadd.f32 %v1907, %v2211
  %v2213 = vpop.f32.mrb[0].mxu0
  %v2214 = vpop.f32.mrb[0].mxu0
  %v2215 = vadd.f32 %v1907, %v2214
  %v2216 = vpop.f32.mrb[0].mxu0
  %2217 = vmatprep.mubr.bf16.mxu0 %v1864
  %2218 = vmatmul.mubr.bf16.gmra.mrb[0].mxu0 %v1863
  %v2219 = vpop.f32.mrb[0].mxu0
  %v2220 = vadd.f32 %v1907, %v2219
  %v2221 = vpop.f32.mrb[0].mxu0
  %v2222 = vpop.f32.mrb[0].mxu0
  %v2223 = vadd.f32 %v1907, %v2222
  %v2224 = vpop.f32.mrb[0].mxu0
  %2225 = vdwg.mxu0
  %2226 = vmatprep.subr.bf16.mxu0 0
  %2227 = vmatpush1.bf16.msra.mxu0 %v1997
  %2228 = vmatprep.subr.bf16.mxu0 0
  %2229 = vmatpush1.bf16.msra.mxu0 %v1998
  %2230 = vmatprep.subr.bf16.mxu0 0
  %2231 = vmatpush1.bf16.msra.mxu0 0
  %2232 = vmatprep.subr.bf16.mxu0 0
  %2233 = vmatpush1.bf16.msra.mxu0 0
  %2234 = vmatprep.subr.bf16.mxu0 0
  %2235 = vmatpush1.bf16.msra.mxu0 0
  %2236 = vmatprep.subr.bf16.mxu0 0
  %2237 = vmatpush1.bf16.msra.mxu0 0
  %2238 = vmatprep.subr.bf16.mxu0 0
  %2239 = vmatpush1.bf16.msra.mxu0 0
  %2240 = vmatprep.subr.bf16.mxu0 0
  %2241 = vmatpush1.bf16.msra.mxu0 0
  %2242 = vmatprep.subr.bf16.mxu0 0
  %2243 = vmatpush1.bf16.msra.mxu0 0
  %2244 = vmatprep.subr.bf16.mxu0 0
  %2245 = vmatpush1.bf16.msra.mxu0 0
  %2246 = vmatprep.subr.bf16.mxu0 0
  %2247 = vmatpush1.bf16.msra.mxu0 0
  %2248 = vmatprep.subr.bf16.mxu0 0
  %2249 = vmatpush1.bf16.msra.mxu0 0
  %2250 = vmatprep.subr.bf16.mxu0 0
  %2251 = vmatpush1.bf16.msra.mxu0 0
  %2252 = vmatprep.subr.bf16.mxu0 0
  %2253 = vmatpush1.bf16.msra.mxu0 0
  %2254 = vmatprep.subr.bf16.mxu0 0
  %2255 = vmatpush1.bf16.msra.mxu0 0
  %2256 = vmatprep.subr.bf16.mxu0 0
  %2257 = vmatpush1.bf16.msra.mxu0 0
  %2258 = vmatprep.mubr.bf16.mxu0 0
  %2259 = vmatmul.mubr.bf16.gmra.mrb[0].mxu0 %v2018
  %v2260 = vpop.f32.mrb[0].mxu0
  %v2261 = vadd.f32 %v2100, %v2260
  %v2262 = vpop.f32.mrb[0].mxu0
  %v2263 = vpop.f32.mrb[0].mxu0
  %v2264 = vadd.f32 %v2103, %v2263
  %v2265 = vpop.f32.mrb[0].mxu0
  %2266 = vmatprep.mubr.bf16.mxu0 0
  %2267 = vmatmul.mubr.bf16.gmra.mrb[0].mxu0 %v2021
  %v2268 = vpop.f32.mrb[0].mxu0
  %v2269 = vadd.f32 %v2108, %v2268
  %v2270 = vpop.f32.mrb[0].mxu0
  %v2271 = vpop.f32.mrb[0].mxu0
  %v2272 = vadd.f32 %v2111, %v2271
  %v2273 = vpop.f32.mrb[0].mxu0
  %2274 = vmatprep.mubr.bf16.mxu0 0
  %2275 = vmatmul.mubr.bf16.gmra.mrb[0].mxu0 %v2024
  %v2276 = vpop.f32.mrb[0].mxu0
  %v2277 = vadd.f32 %v2116, %v2276
  %v2278 = vpop.f32.mrb[0].mxu0
  %v2279 = vpop.f32.mrb[0].mxu0
  %v2280 = vadd.f32 %v2119, %v2279
  %v2281 = vpop.f32.mrb[0].mxu0
  %2282 = vmatprep.mubr.bf16.mxu0 0
  %2283 = vmatmul.mubr.bf16.gmra.mrb[0].mxu0 %v2027
  %v2284 = vpop.f32.mrb[0].mxu0
  %v2285 = vadd.f32 %v2124, %v2284
  %v2286 = vpop.f32.mrb[0].mxu0
  %v2287 = vpop.f32.mrb[0].mxu0
  %v2288 = vadd.f32 %v2127, %v2287
  %v2289 = vpop.f32.mrb[0].mxu0
  %2290 = vmatprep.mubr.bf16.mxu0 0
  %2291 = vmatmul.mubr.bf16.gmra.mrb[0].mxu0 %v2030
  %v2292 = vpop.f32.mrb[0].mxu0
  %v2293 = vadd.f32 %v2132, %v2292
  %v2294 = vpop.f32.mrb[0].mxu0
  %v2295 = vpop.f32.mrb[0].mxu0
  %v2296 = vadd.f32 %v2135, %v2295
  %v2297 = vpop.f32.mrb[0].mxu0
  %2298 = vmatprep.mubr.bf16.mxu0 0
  %2299 = vmatmul.mubr.bf16.gmra.mrb[0].mxu0 %v2033
  %v2300 = vpop.f32.mrb[0].mxu0
  %v2301 = vadd.f32 %v2140, %v2300
  %v2302 = vpop.f32.mrb[0].mxu0
  %v2303 = vpop.f32.mrb[0].mxu0
  %v2304 = vadd.f32 %v2143, %v2303
  %v2305 = vpop.f32.mrb[0].mxu0
  %2306 = vmatprep.mubr.bf16.mxu0 0
  %2307 = vmatmul.mubr.bf16.gmra.mrb[0].mxu0 %v2036
  %v2308 = vpop.f32.mrb[0].mxu0
  %v2309 = vadd.f32 %v2148, %v2308
  %v2310 = vpop.f32.mrb[0].mxu0
  %v2311 = vpop.f32.mrb[0].mxu0
  %v2312 = vadd.f32 %v2151, %v2311
  %v2313 = vpop.f32.mrb[0].mxu0
  %2314 = vmatprep.mubr.bf16.mxu0 0
  %2315 = vmatmul.mubr.bf16.gmra.mrb[0].mxu0 %v2039
  %v2316 = vpop.f32.mrb[0].mxu0
  %v2317 = vadd.f32 %v2156, %v2316
  %v2318 = vpop.f32.mrb[0].mxu0
  %v2319 = vpop.f32.mrb[0].mxu0
  %v2320 = vadd.f32 %v2159, %v2319
  %v2321 = vpop.f32.mrb[0].mxu0
  %2322 = vmatprep.mubr.bf16.mxu0 0
  %2323 = vmatmul.mubr.bf16.gmra.mrb[0].mxu0 %v2042
  %v2324 = vpop.f32.mrb[0].mxu0
  %v2325 = vadd.f32 %v2164, %v2324
  %v2326 = vpop.f32.mrb[0].mxu0
  %v2327 = vpop.f32.mrb[0].mxu0
  %v2328 = vadd.f32 %v2167, %v2327
  %v2329 = vpop.f32.mrb[0].mxu0
  %2330 = vmatprep.mubr.bf16.mxu0 0
  %2331 = vmatmul.mubr.bf16.gmra.mrb[0].mxu0 %v2045
  %v2332 = vpop.f32.mrb[0].mxu0
  %v2333 = vadd.f32 %v2172, %v2332
  %v2334 = vpop.f32.mrb[0].mxu0
  %v2335 = vpop.f32.mrb[0].mxu0
  %v2336 = vadd.f32 %v2175, %v2335
  %v2337 = vpop.f32.mrb[0].mxu0
  %2338 = vmatprep.mubr.bf16.mxu0 0
  %2339 = vmatmul.mubr.bf16.gmra.mrb[0].mxu0 %v2048
  %v2340 = vpop.f32.mrb[0].mxu0
  %v2341 = vadd.f32 %v2180, %v2340
  %v2342 = vpop.f32.mrb[0].mxu0
  %v2343 = vpop.f32.mrb[0].mxu0
  %v2344 = vadd.f32 %v2183, %v2343
  %v2345 = vpop.f32.mrb[0].mxu0
  %2346 = vmatprep.mubr.bf16.mxu0 0
  %2347 = vmatmul.mubr.bf16.gmra.mrb[0].mxu0 %v2051
  %v2348 = vpop.f32.mrb[0].mxu0
  %v2349 = vadd.f32 %v2188, %v2348
  %v2350 = vpop.f32.mrb[0].mxu0
  %v2351 = vpop.f32.mrb[0].mxu0
  %v2352 = vadd.f32 %v2191, %v2351
  %v2353 = vpop.f32.mrb[0].mxu0
  %2354 = vmatprep.mubr.bf16.mxu0 0
  %2355 = vmatmul.mubr.bf16.gmra.mrb[0].mxu0 %v2054
  %v2356 = vpop.f32.mrb[0].mxu0
  %v2357 = vadd.f32 %v2196, %v2356
  %v2358 = vpop.f32.mrb[0].mxu0
  %v2359 = vpop.f32.mrb[0].mxu0
  %v2360 = vadd.f32 %v2199, %v2359
  %v2361 = vpop.f32.mrb[0].mxu0
  %2362 = vmatprep.mubr.bf16.mxu0 0
  %2363 = vmatmul.mubr.bf16.gmra.mrb[0].mxu0 %v2057
  %v2364 = vpop.f32.mrb[0].mxu0
  %v2365 = vadd.f32 %v2204, %v2364
  %v2366 = vpop.f32.mrb[0].mxu0
  %v2367 = vpop.f32.mrb[0].mxu0
  %v2368 = vadd.f32 %v2207, %v2367
  %v2369 = vpop.f32.mrb[0].mxu0
  %2370 = vmatprep.mubr.bf16.mxu0 0
  %2371 = vmatmul.mubr.bf16.gmra.mrb[0].mxu0 %v2060
  %v2372 = vpop.f32.mrb[0].mxu0
  %v2373 = vadd.f32 %v2212, %v2372
  %v2374 = vpop.f32.mrb[0].mxu0
  %v2375 = vpop.f32.mrb[0].mxu0
  %v2376 = vadd.f32 %v2215, %v2375
  %v2377 = vpop.f32.mrb[0].mxu0
  %2378 = vmatprep.mubr.bf16.mxu0 0
  %2379 = vmatmul.mubr.bf16.gmra.mrb[0].mxu0 %v2063
  %v2380 = vpop.f32.mrb[0].mxu0
  %v2381 = vadd.f32 %v2220, %v2380
  %v2382 = vpop.f32.mrb[0].mxu0
  %v2383 = vpop.f32.mrb[0].mxu0
  %v2384 = vadd.f32 %v2223, %v2383
  %v2385 = vpop.f32.mrb[0].mxu0
  %2386 = vdwg.mxu0
  %v2387 = vmax.f32 %v2261, 0.0
  %v2388 = vmax.f32 %v2264, 0.0
  %v2389 = vmax.f32 %v2269, 0.0
  %v2390 = vmax.f32 %v2272, 0.0
  %v2391 = vmax.f32 %v2277, 0.0
  %v2392 = vmax.f32 %v2280, 0.0
  %v2393 = vmax.f32 %v2285, 0.0
  %v2394 = vmax.f32 %v2288, 0.0
  %v2395 = vmax.f32 %v2293, 0.0
  %v2396 = vmax.f32 %v2296, 0.0
  %v2397 = vmax.f32 %v2301, 0.0
  %v2398 = vmax.f32 %v2304, 0.0
  %v2399 = vmax.f32 %v2309, 0.0
  %v2400 = vmax.f32 %v2312, 0.0
  %v2401 = vmax.f32 %v2317, 0.0
  %v2402 = vmax.f32 %v2320, 0.0
  %v2403 = vmax.f32 %v2325, 0.0
  %v2404 = vmax.f32 %v2328, 0.0
  %v2405 = vmax.f32 %v2333, 0.0
  %v2406 = vmax.f32 %v2336, 0.0
  %v2407 = vmax.f32 %v2341, 0.0
  %v2408 = vmax.f32 %v2344, 0.0
  %v2409 = vmax.f32 %v2349, 0.0
  %v2410 = vmax.f32 %v2352, 0.0
  %v2411 = vmax.f32 %v2357, 0.0
  %v2412 = vmax.f32 %v2360, 0.0
  %v2413 = vmax.f32 %v2365, 0.0
  %v2414 = vmax.f32 %v2368, 0.0
  %v2415 = vmax.f32 %v2373, 0.0
  %v2416 = vmax.f32 %v2376, 0.0
  %v2417 = vmax.f32 %v2381, 0.0
  %v2418 = vmax.f32 %v2384, 0.0
  %v2419 = vpack.c.bf16 %v2388, %v2387
  %v2420 = vpack.c.bf16 %v2390, %v2389
  %v2421 = vpack.c.bf16 %v2392, %v2391
  %v2422 = vpack.c.bf16 %v2394, %v2393
  %v2423 = vpack.c.bf16 %v2396, %v2395
  %v2424 = vpack.c.bf16 %v2398, %v2397
  %v2425 = vpack.c.bf16 %v2400, %v2399
  %v2426 = vpack.c.bf16 %v2402, %v2401
  %v2427 = vpack.c.bf16 %v2404, %v2403
  %v2428 = vpack.c.bf16 %v2406, %v2405
  %v2429 = vpack.c.bf16 %v2408, %v2407
  %v2430 = vpack.c.bf16 %v2410, %v2409
  %v2431 = vpack.c.bf16 %v2412, %v2411
  %v2432 = vpack.c.bf16 %v2414, %v2413
  %v2433 = vpack.c.bf16 %v2416, %v2415
  %v2434 = vpack.c.bf16 %v2418, %v2417
  %v2443 = vunpack.c.l.b16 %v104
  %v2444 = vunpack.c.h.b16 %v104
  %v2445 = vunpack.c.l.b16 %v105
  %v2446 = vunpack.c.h.b16 %v105
  %v2447 = vunpack.c.l.b16 %v106
  %v2448 = vunpack.c.h.b16 %v106
  %v2449 = vunpack.c.l.b16 %v107
  %v2450 = vunpack.c.h.b16 %v107
  %v2451 = vunpack.c.l.b16 %v108
  %v2452 = vunpack.c.h.b16 %v108
  %v2453 = vunpack.c.l.b16 %v109
  %v2454 = vunpack.c.h.b16 %v109
  %v2455 = vunpack.c.l.b16 %v110
  %v2456 = vunpack.c.h.b16 %v110
  %v2457 = vunpack.c.l.b16 %v111
  %v2458 = vunpack.c.h.b16 %v111
  %v2459 = vpack.c.b16 %v2445, %v2443
  %v2460 = vpack.c.b16 %v2446, %v2444
  %v2461 = vpack.c.b16 %v2449, %v2447
  %v2462 = vpack.c.b16 %v2450, %v2448
  %v2463 = vpack.c.b16 %v2453, %v2451
  %v2464 = vpack.c.b16 %v2454, %v2452
  %v2465 = vpack.c.b16 %v2457, %v2455
  %v2466 = vpack.c.b16 %v2458, %v2456
  %2475 = vmatprep.subr.bf16.mxu0 0
  %2476 = vmatpush1.bf16.msra.mxu0 %v2419
  %2477 = vmatprep.subr.bf16.mxu0 0
  %2478 = vmatpush1.bf16.msra.mxu0 %v2420
  %2479 = vmatprep.subr.bf16.mxu0 0
  %2480 = vmatpush1.bf16.msra.mxu0 %v2421
  %2481 = vmatprep.subr.bf16.mxu0 0
  %2482 = vmatpush1.bf16.msra.mxu0 %v2422
  %2483 = vmatprep.subr.bf16.mxu0 0
  %2484 = vmatpush1.bf16.msra.mxu0 %v2423
  %2485 = vmatprep.subr.bf16.mxu0 0
  %2486 = vmatpush1.bf16.msra.mxu0 %v2424
  %2487 = vmatprep.subr.bf16.mxu0 0
  %2488 = vmatpush1.bf16.msra.mxu0 %v2425
  %2489 = vmatprep.subr.bf16.mxu0 0
  %2490 = vmatpush1.bf16.msra.mxu0 %v2426
  %2491 = vmatprep.subr.bf16.mxu0 0
  %2492 = vmatpush1.bf16.msra.mxu0 %v2427
  %2493 = vmatprep.subr.bf16.mxu0 0
  %2494 = vmatpush1.bf16.msra.mxu0 %v2428
  %2495 = vmatprep.subr.bf16.mxu0 0
  %2496 = vmatpush1.bf16.msra.mxu0 %v2429
  %2497 = vmatprep.subr.bf16.mxu0 0
  %2498 = vmatpush1.bf16.msra.mxu0 %v2430
  %2499 = vmatprep.subr.bf16.mxu0 0
  %2500 = vmatpush1.bf16.msra.mxu0 %v2431
  %2501 = vmatprep.subr.bf16.mxu0 0
  %2502 = vmatpush1.bf16.msra.mxu0 %v2432
  %2503 = vmatprep.subr.bf16.mxu0 0
  %2504 = vmatpush1.bf16.msra.mxu0 %v2433
  %2505 = vmatprep.subr.bf16.mxu0 0
  %2506 = vmatpush1.bf16.msra.mxu0 %v2434
  %2507 = vmatprep.mubr.bf16.mxu0 %v2460
  %2508 = vmatmul.mubr.bf16.gmra.mrb[0].mxu0 %v2459
  %v2509 = vpop.f32.mrb[0].mxu0
  %v2510 = vadd.f32 0.0, %v2509
  %v2511 = vpop.f32.mrb[0].mxu0
  %v2512 = vpop.f32.mrb[0].mxu0
  %v2513 = vadd.f32 0.0, %v2512
  %v2514 = vpop.f32.mrb[0].mxu0
  %2515 = vmatprep.mubr.bf16.mxu0 %v2462
  %2516 = vmatmul.mubr.bf16.gmra.mrb[0].mxu0 %v2461
  %v2517 = vpop.f32.mrb[0].mxu0
  %v2518 = vadd.f32 0.0, %v2517
  %v2519 = vpop.f32.mrb[0].mxu0
  %v2520 = vpop.f32.mrb[0].mxu0
  %v2521 = vadd.f32 0.0, %v2520
  %v2522 = vpop.f32.mrb[0].mxu0
  %2523 = vmatprep.mubr.bf16.mxu0 %v2464
  %2524 = vmatmul.mubr.bf16.gmra.mrb[0].mxu0 %v2463
  %v2525 = vpop.f32.mrb[0].mxu0
  %v2526 = vadd.f32 0.0, %v2525
  %v2527 = vpop.f32.mrb[0].mxu0
  %v2528 = vpop.f32.mrb[0].mxu0
  %v2529 = vadd.f32 0.0, %v2528
  %v2530 = vpop.f32.mrb[0].mxu0
  %2531 = vmatprep.mubr.bf16.mxu0 %v2466
  %2532 = vmatmul.mubr.bf16.gmra.mrb[0].mxu0 %v2465
  %v2533 = vpop.f32.mrb[0].mxu0
  %v2534 = vadd.f32 0.0, %v2533
  %v2535 = vpop.f32.mrb[0].mxu0
  %v2536 = vpop.f32.mrb[0].mxu0
  %v2537 = vadd.f32 0.0, %v2536
  %v2538 = vpop.f32.mrb[0].mxu0
  %2539 = vdwg.mxu0
  %2556 = vmatprep.subr.bf16.mxu0 0
  %2557 = vmatpush1.bf16.msra.mxu0 %v191
  %2558 = vmatprep.subr.bf16.mxu0 0
  %2559 = vmatpush1.bf16.msra.mxu0 %v192
  %2560 = vmatprep.subr.bf16.mxu0 0
  %2561 = vmatpush1.bf16.msra.mxu0 %v193
  %2562 = vmatprep.subr.bf16.mxu0 0
  %2563 = vmatpush1.bf16.msra.mxu0 %v194
  %2564 = vmatprep.subr.bf16.mxu0 0
  %2565 = vmatpush1.bf16.msra.mxu0 %v195
  %2566 = vmatprep.subr.bf16.mxu0 0
  %2567 = vmatpush1.bf16.msra.mxu0 %v196
  %2568 = vmatprep.subr.bf16.mxu0 0
  %2569 = vmatpush1.bf16.msra.mxu0 %v197
  %2570 = vmatprep.subr.bf16.mxu0 0
  %2571 = vmatpush1.bf16.msra.mxu0 %v198
  %2572 = vmatprep.subr.bf16.mxu0 0
  %2573 = vmatpush1.bf16.msra.mxu0 %v199
  %2574 = vmatprep.subr.bf16.mxu0 0
  %2575 = vmatpush1.bf16.msra.mxu0 %v200
  %2576 = vmatprep.subr.bf16.mxu0 0
  %2577 = vmatpush1.bf16.msra.mxu0 %v201
  %2578 = vmatprep.subr.bf16.mxu0 0
  %2579 = vmatpush1.bf16.msra.mxu0 %v202
  %2580 = vmatprep.subr.bf16.mxu0 0
  %2581 = vmatpush1.bf16.msra.mxu0 %v203
  %2582 = vmatprep.subr.bf16.mxu0 0
  %2583 = vmatpush1.bf16.msra.mxu0 %v204
  %2584 = vmatprep.subr.bf16.mxu0 0
  %2585 = vmatpush1.bf16.msra.mxu0 %v205
  %2586 = vmatprep.subr.bf16.mxu0 0
  %2587 = vmatpush1.bf16.msra.mxu0 %v206
  %2588 = vmatprep.mubr.bf16.mxu0 %v2460
  %2589 = vmatmul.mubr.bf16.gmra.mrb[0].mxu0 %v2459
  %v2590 = vpop.f32.mrb[0].mxu0
  %v2591 = vadd.f32 0.0, %v2590
  %v2592 = vpop.f32.mrb[0].mxu0
  %v2593 = vpop.f32.mrb[0].mxu0
  %v2594 = vadd.f32 0.0, %v2593
  %v2595 = vpop.f32.mrb[0].mxu0
  %2596 = vmatprep.mubr.bf16.mxu0 %v2462
  %2597 = vmatmul.mubr.bf16.gmra.mrb[0].mxu0 %v2461
  %v2598 = vpop.f32.mrb[0].mxu0
  %v2599 = vadd.f32 0.0, %v2598
  %v2600 = vpop.f32.mrb[0].mxu0
  %v2601 = vpop.f32.mrb[0].mxu0
  %v2602 = vadd.f32 0.0, %v2601
  %v2603 = vpop.f32.mrb[0].mxu0
  %2604 = vmatprep.mubr.bf16.mxu0 %v2464
  %2605 = vmatmul.mubr.bf16.gmra.mrb[0].mxu0 %v2463
  %v2606 = vpop.f32.mrb[0].mxu0
  %v2607 = vadd.f32 0.0, %v2606
  %v2608 = vpop.f32.mrb[0].mxu0
  %v2609 = vpop.f32.mrb[0].mxu0
  %v2610 = vadd.f32 0.0, %v2609
  %v2611 = vpop.f32.mrb[0].mxu0
  %2612 = vmatprep.mubr.bf16.mxu0 %v2466
  %2613 = vmatmul.mubr.bf16.gmra.mrb[0].mxu0 %v2465
  %v2614 = vpop.f32.mrb[0].mxu0
  %v2615 = vadd.f32 0.0, %v2614
  %v2616 = vpop.f32.mrb[0].mxu0
  %v2617 = vpop.f32.mrb[0].mxu0
  %v2618 = vadd.f32 0.0, %v2617
  %v2619 = vpop.f32.mrb[0].mxu0
  %2620 = vdwg.mxu0
  %v2621 = vpack.c.bf16 %v2594, %v2591
  %v2622 = vpack.c.bf16 %v2602, %v2599
  %v2623 = vpack.c.bf16 %v2610, %v2607
  %v2624 = vpack.c.bf16 %v2618, %v2615
  %v2625 = vld [vmem:[%s8] sm:$0xf]
  %v2626 = vld [vmem:[%s8 + $0x4] sm:$0xf]
  %v2627 = vld [vmem:[%s8 + $0x8] sm:$0xf]
  %v2628 = vld [vmem:[%s8 + $0xc] sm:$0xf]
  %v2629 = vld [vmem:[%s8 + $0x10] sm:$0xf]
  %v2630 = vld [vmem:[%s8 + $0x14] sm:$0xf]
  %v2631 = vld [vmem:[%s8 + $0x18] sm:$0xf]
  %v2632 = vld [vmem:[%s8 + $0x1c] sm:$0xf]
  %v2633 = vld [vmem:[%s9] sm:$0x1]
  %v2635 = vlaneseq
  %v2636 = vshrl.u32 %v2635, 7
  %v2637 = vsub.s32 0, %v2636
  %v2638 = vrot.slane %v2633, %v2637
  %v2648 = vunpack.c.l.b16 %v2625
  %v2649 = vunpack.c.l.b16 %v2626
  %v2650 = vunpack.c.l.b16 %v2627
  %v2651 = vunpack.c.l.b16 %v2628
  %v2652 = vunpack.c.l.b16 %v2629
  %v2653 = vunpack.c.l.b16 %v2630
  %v2654 = vunpack.c.l.b16 %v2631
  %v2655 = vunpack.c.l.b16 %v2632
  %v2656 = vpack.c.b16 %v2649, %v2648
  %v2657 = vpack.c.b16 %v2651, %v2650
  %v2658 = vpack.c.b16 %v2653, %v2652
  %v2659 = vpack.c.b16 %v2655, %v2654
  %v2665 = vsel %vm231, %v2621, 0
  %v2668 = vsel %vm231, %v2622, 0
  %v2671 = vsel %vm231, %v2623, 0
  %v2674 = vsel %vm231, %v2624, 0
  %2676 = vmatprep.subr.bf16.mxu0 0
  %2677 = vmatpush1.bf16.msra.mxu0 %v2656
  %2678 = vmatprep.subr.bf16.mxu0 0
  %2679 = vmatpush1.bf16.msra.mxu0 %v2657
  %2680 = vmatprep.subr.bf16.mxu0 0
  %2681 = vmatpush1.bf16.msra.mxu0 %v2658
  %2682 = vmatprep.subr.bf16.mxu0 0
  %2683 = vmatpush1.bf16.msra.mxu0 %v2659
  %2684 = vmatprep.subr.bf16.mxu0 0
  %2685 = vmatpush1.bf16.msra.mxu0 0
  %2686 = vmatprep.subr.bf16.mxu0 0
  %2687 = vmatpush1.bf16.msra.mxu0 0
  %2688 = vmatprep.subr.bf16.mxu0 0
  %2689 = vmatpush1.bf16.msra.mxu0 0
  %2690 = vmatprep.subr.bf16.mxu0 0
  %2691 = vmatpush1.bf16.msra.mxu0 0
  %2692 = vmatprep.subr.bf16.mxu0 0
  %2693 = vmatpush1.bf16.msra.mxu0 0
  %2694 = vmatprep.subr.bf16.mxu0 0
  %2695 = vmatpush1.bf16.msra.mxu0 0
  %2696 = vmatprep.subr.bf16.mxu0 0
  %2697 = vmatpush1.bf16.msra.mxu0 0
  %2698 = vmatprep.subr.bf16.mxu0 0
  %2699 = vmatpush1.bf16.msra.mxu0 0
  %2700 = vmatprep.subr.bf16.mxu0 0
  %2701 = vmatpush1.bf16.msra.mxu0 0
  %2702 = vmatprep.subr.bf16.mxu0 0
  %2703 = vmatpush1.bf16.msra.mxu0 0
  %2704 = vmatprep.subr.bf16.mxu0 0
  %2705 = vmatpush1.bf16.msra.mxu0 0
  %2706 = vmatprep.subr.bf16.mxu0 0
  %2707 = vmatpush1.bf16.msra.mxu0 0
  %2708 = vmatprep.mubr.bf16.mxu0 0
  %2709 = vmatmul.mubr.bf16.gmra.mrb[0].mxu0 %v2665
  %v2710 = vpop.f32.mrb[0].mxu0
  %v2711 = vadd.f32 %v2638, %v2710
  %v2712 = vpop.f32.mrb[0].mxu0
  %v2713 = vpop.f32.mrb[0].mxu0
  %v2714 = vadd.f32 %v2638, %v2713
  %v2715 = vpop.f32.mrb[0].mxu0
  %2716 = vmatprep.mubr.bf16.mxu0 0
  %2717 = vmatmul.mubr.bf16.gmra.mrb[0].mxu0 %v2668
  %v2718 = vpop.f32.mrb[0].mxu0
  %v2719 = vadd.f32 %v2638, %v2718
  %v2720 = vpop.f32.mrb[0].mxu0
  %v2721 = vpop.f32.mrb[0].mxu0
  %v2722 = vadd.f32 %v2638, %v2721
  %v2723 = vpop.f32.mrb[0].mxu0
  %2724 = vmatprep.mubr.bf16.mxu0 0
  %2725 = vmatmul.mubr.bf16.gmra.mrb[0].mxu0 %v2671
  %v2726 = vpop.f32.mrb[0].mxu0
  %v2727 = vadd.f32 %v2638, %v2726
  %v2728 = vpop.f32.mrb[0].mxu0
  %v2729 = vpop.f32.mrb[0].mxu0
  %v2730 = vadd.f32 %v2638, %v2729
  %v2731 = vpop.f32.mrb[0].mxu0
  %2732 = vmatprep.mubr.bf16.mxu0 0
  %2733 = vmatmul.mubr.bf16.gmra.mrb[0].mxu0 %v2674
  %v2734 = vpop.f32.mrb[0].mxu0
  %v2735 = vadd.f32 %v2638, %v2734
  %v2736 = vpop.f32.mrb[0].mxu0
  %v2737 = vpop.f32.mrb[0].mxu0
  %v2738 = vadd.f32 %v2638, %v2737
  %v2739 = vpop.f32.mrb[0].mxu0
  %2740 = vdwg.mxu0
  %v2741 = vpack.c.bf16 %v2513, %v2510
  %v2742 = vpack.c.bf16 %v2521, %v2518
  %v2743 = vpack.c.bf16 %v2529, %v2526
  %v2744 = vpack.c.bf16 %v2537, %v2534
  %v2745 = vld [vmem:[%s6] sm:$0xf]
  %v2746 = vld [vmem:[%s6 + $0x4] sm:$0xf]
  %v2747 = vld [vmem:[%s6 + $0x8] sm:$0xf]
  %v2748 = vld [vmem:[%s6 + $0xc] sm:$0xf]
  %v2749 = vld [vmem:[%s7] sm:$0x1]
  %v2751 = vlaneseq
  %v2752 = vshrl.u32 %v2751, 7
  %v2753 = vsub.s32 0, %v2752
  %v2754 = vrot.slane %v2749, %v2753
  %v2760 = vunpack.c.l.b16 %v2745
  %v2761 = vunpack.c.l.b16 %v2746
  %v2762 = vunpack.c.l.b16 %v2747
  %v2763 = vunpack.c.l.b16 %v2748
  %v2764 = vpack.c.b16 %v2761, %v2760
  %v2765 = vpack.c.b16 %v2763, %v2762
  %v2769 = vsel %vm473, %v2741, 0
  %v2772 = vsel %vm473, %v2742, 0
  %v2775 = vsel %vm473, %v2743, 0
  %v2778 = vsel %vm473, %v2744, 0
  %2780 = vmatprep.subr.bf16.mxu0 0
  %2781 = vmatpush1.bf16.msra.mxu0 %v2764
  %2782 = vmatprep.subr.bf16.mxu0 0
  %2783 = vmatpush1.bf16.msra.mxu0 %v2765
  %2784 = vmatprep.subr.bf16.mxu0 0
  %2785 = vmatpush1.bf16.msra.mxu0 0
  %2786 = vmatprep.subr.bf16.mxu0 0
  %2787 = vmatpush1.bf16.msra.mxu0 0
  %2788 = vmatprep.subr.bf16.mxu0 0
  %2789 = vmatpush1.bf16.msra.mxu0 0
  %2790 = vmatprep.subr.bf16.mxu0 0
  %2791 = vmatpush1.bf16.msra.mxu0 0
  %2792 = vmatprep.subr.bf16.mxu0 0
  %2793 = vmatpush1.bf16.msra.mxu0 0
  %2794 = vmatprep.subr.bf16.mxu0 0
  %2795 = vmatpush1.bf16.msra.mxu0 0
  %2796 = vmatprep.subr.bf16.mxu0 0
  %2797 = vmatpush1.bf16.msra.mxu0 0
  %2798 = vmatprep.subr.bf16.mxu0 0
  %2799 = vmatpush1.bf16.msra.mxu0 0
  %2800 = vmatprep.subr.bf16.mxu0 0
  %2801 = vmatpush1.bf16.msra.mxu0 0
  %2802 = vmatprep.subr.bf16.mxu0 0
  %2803 = vmatpush1.bf16.msra.mxu0 0
  %2804 = vmatprep.subr.bf16.mxu0 0
  %2805 = vmatpush1.bf16.msra.mxu0 0
  %2806 = vmatprep.subr.bf16.mxu0 0
  %2807 = vmatpush1.bf16.msra.mxu0 0
  %2808 = vmatprep.subr.bf16.mxu0 0
  %2809 = vmatpush1.bf16.msra.mxu0 0
  %2810 = vmatprep.subr.bf16.mxu0 0
  %2811 = vmatpush1.bf16.msra.mxu0 0
  %2812 = vmatprep.mubr.bf16.mxu0 0
  %2813 = vmatmul.mubr.bf16.gmra.mrb[0].mxu0 %v2769
  %v2814 = vpop.f32.mrb[0].mxu0
  %v2815 = vadd.f32 %v2754, %v2814
  %v2816 = vpop.f32.mrb[0].mxu0
  %v2817 = vpop.f32.mrb[0].mxu0
  %v2818 = vadd.f32 %v2754, %v2817
  %v2819 = vpop.f32.mrb[0].mxu0
  %2820 = vmatprep.mubr.bf16.mxu0 0
  %2821 = vmatmul.mubr.bf16.gmra.mrb[0].mxu0 %v2772
  %v2822 = vpop.f32.mrb[0].mxu0
  %v2823 = vadd.f32 %v2754, %v2822
  %v2824 = vpop.f32.mrb[0].mxu0
  %v2825 = vpop.f32.mrb[0].mxu0
  %v2826 = vadd.f32 %v2754, %v2825
  %v2827 = vpop.f32.mrb[0].mxu0
  %2828 = vmatprep.mubr.bf16.mxu0 0
  %2829 = vmatmul.mubr.bf16.gmra.mrb[0].mxu0 %v2775
  %v2830 = vpop.f32.mrb[0].mxu0
  %v2831 = vadd.f32 %v2754, %v2830
  %v2832 = vpop.f32.mrb[0].mxu0
  %v2833 = vpop.f32.mrb[0].mxu0
  %v2834 = vadd.f32 %v2754, %v2833
  %v2835 = vpop.f32.mrb[0].mxu0
  %2836 = vmatprep.mubr.bf16.mxu0 0
  %2837 = vmatmul.mubr.bf16.gmra.mrb[0].mxu0 %v2778
  %v2838 = vpop.f32.mrb[0].mxu0
  %v2839 = vadd.f32 %v2754, %v2838
  %v2840 = vpop.f32.mrb[0].mxu0
  %v2841 = vpop.f32.mrb[0].mxu0
  %v2842 = vadd.f32 %v2754, %v2841
  %v2843 = vpop.f32.mrb[0].mxu0
  %2844 = vdwg.mxu0
  %v2845 = vadd.f32 %v2815, %v2711
  %v2846 = vadd.f32 %v2818, %v2714
  %v2847 = vadd.f32 %v2823, %v2719
  %v2848 = vadd.f32 %v2826, %v2722
  %v2849 = vadd.f32 %v2831, %v2727
  %v2850 = vadd.f32 %v2834, %v2730
  %v2851 = vadd.f32 %v2839, %v2735
  %v2852 = vadd.f32 %v2842, %v2738
  %v2853 = vmax.f32 %v2845, 0.0
  %v2854 = vmax.f32 %v2846, 0.0
  %v2855 = vmax.f32 %v2847, 0.0
  %v2856 = vmax.f32 %v2848, 0.0
  %v2857 = vmax.f32 %v2849, 0.0
  %v2858 = vmax.f32 %v2850, 0.0
  %v2859 = vmax.f32 %v2851, 0.0
  %v2860 = vmax.f32 %v2852, 0.0
  %v2861 = vpack.c.bf16 %v2854, %v2853
  %v2862 = vpack.c.bf16 %v2856, %v2855
  %v2863 = vpack.c.bf16 %v2858, %v2857
  %v2864 = vpack.c.bf16 %v2860, %v2859
  %v2865 = vld [vmem:[%s10] sm:$0xf]
  %v2866 = vld [vmem:[%s10 + $0x4] sm:$0xf]
  %v2867 = vld [vmem:[%s10 + $0x8] sm:$0xf]
  %v2868 = vld [vmem:[%s10 + $0xc] sm:$0xf]
  %v2869 = vld [vmem:[%s10 + $0x10] sm:$0xf]
  %v2870 = vld [vmem:[%s10 + $0x14] sm:$0xf]
  %v2871 = vld [vmem:[%s10 + $0x18] sm:$0xf]
  %v2872 = vld [vmem:[%s10 + $0x1c] sm:$0xf]
  %v2873 = vld [vmem:[%s10 + $0x20] sm:$0xf]
  %v2874 = vld [vmem:[%s10 + $0x24] sm:$0xf]
  %v2875 = vld [vmem:[%s10 + $0x28] sm:$0xf]
  %v2876 = vld [vmem:[%s10 + $0x2c] sm:$0xf]
  %v2877 = vld [vmem:[%s10 + $0x30] sm:$0xf]
  %v2878 = vld [vmem:[%s10 + $0x34] sm:$0xf]
  %v2879 = vld [vmem:[%s10 + $0x38] sm:$0xf]
  %v2880 = vld [vmem:[%s10 + $0x3c] sm:$0xf]
  %v2881 = vld [vmem:[%s11] sm:$0x1]
  %v2883 = vlaneseq
  %v2884 = vshrl.u32 %v2883, 7
  %v2885 = vsub.s32 0, %v2884
  %v2886 = vrot.slane %v2881, %v2885
  %v2904 = vunpack.c.l.b16 %v2865
  %v2905 = vunpack.c.l.b16 %v2866
  %v2906 = vunpack.c.l.b16 %v2867
  %v2907 = vunpack.c.l.b16 %v2868
  %v2908 = vunpack.c.l.b16 %v2869
  %v2909 = vunpack.c.l.b16 %v2870
  %v2910 = vunpack.c.l.b16 %v2871
  %v2911 = vunpack.c.l.b16 %v2872
  %v2912 = vunpack.c.l.b16 %v2873
  %v2913 = vunpack.c.l.b16 %v2874
  %v2914 = vunpack.c.l.b16 %v2875
  %v2915 = vunpack.c.l.b16 %v2876
  %v2916 = vunpack.c.l.b16 %v2877
  %v2917 = vunpack.c.l.b16 %v2878
  %v2918 = vunpack.c.l.b16 %v2879
  %v2919 = vunpack.c.l.b16 %v2880
  %v2920 = vpack.c.b16 %v2905, %v2904
  %v2921 = vpack.c.b16 %v2907, %v2906
  %v2922 = vpack.c.b16 %v2909, %v2908
  %v2923 = vpack.c.b16 %v2911, %v2910
  %v2924 = vpack.c.b16 %v2913, %v2912
  %v2925 = vpack.c.b16 %v2915, %v2914
  %v2926 = vpack.c.b16 %v2917, %v2916
  %v2927 = vpack.c.b16 %v2919, %v2918
  %2936 = vmatprep.subr.bf16.mxu0 0
  %2937 = vmatpush1.bf16.msra.mxu0 %v2920
  %2938 = vmatprep.subr.bf16.mxu0 0
  %2939 = vmatpush1.bf16.msra.mxu0 %v2921
  %2940 = vmatprep.subr.bf16.mxu0 0
  %2941 = vmatpush1.bf16.msra.mxu0 %v2922
  %2942 = vmatprep.subr.bf16.mxu0 0
  %2943 = vmatpush1.bf16.msra.mxu0 %v2923
  %2944 = vmatprep.subr.bf16.mxu0 0
  %2945 = vmatpush1.bf16.msra.mxu0 %v2924
  %2946 = vmatprep.subr.bf16.mxu0 0
  %2947 = vmatpush1.bf16.msra.mxu0 %v2925
  %2948 = vmatprep.subr.bf16.mxu0 0
  %2949 = vmatpush1.bf16.msra.mxu0 %v2926
  %2950 = vmatprep.subr.bf16.mxu0 0
  %2951 = vmatpush1.bf16.msra.mxu0 %v2927
  %2952 = vmatprep.subr.bf16.mxu0 0
  %2953 = vmatpush1.bf16.msra.mxu0 0
  %2954 = vmatprep.subr.bf16.mxu0 0
  %2955 = vmatpush1.bf16.msra.mxu0 0
  %2956 = vmatprep.subr.bf16.mxu0 0
  %2957 = vmatpush1.bf16.msra.mxu0 0
  %2958 = vmatprep.subr.bf16.mxu0 0
  %2959 = vmatpush1.bf16.msra.mxu0 0
  %2960 = vmatprep.subr.bf16.mxu0 0
  %2961 = vmatpush1.bf16.msra.mxu0 0
  %2962 = vmatprep.subr.bf16.mxu0 0
  %2963 = vmatpush1.bf16.msra.mxu0 0
  %2964 = vmatprep.subr.bf16.mxu0 0
  %2965 = vmatpush1.bf16.msra.mxu0 0
  %2966 = vmatprep.subr.bf16.mxu0 0
  %2967 = vmatpush1.bf16.msra.mxu0 0
  %2968 = vmatprep.mubr.bf16.mxu0 0
  %2969 = vmatmul.mubr.bf16.gmra.mrb[0].mxu0 %v2861
  %v2970 = vpop.f32.mrb[0].mxu0
  %v2971 = vadd.f32 %v2886, %v2970
  %v2972 = vpop.f32.mrb[0].mxu0
  %v2973 = vpop.f32.mrb[0].mxu0
  %v2974 = vadd.f32 %v2886, %v2973
  %v2975 = vpop.f32.mrb[0].mxu0
  %2976 = vmatprep.mubr.bf16.mxu0 0
  %2977 = vmatmul.mubr.bf16.gmra.mrb[0].mxu0 %v2862
  %v2978 = vpop.f32.mrb[0].mxu0
  %v2979 = vadd.f32 %v2886, %v2978
  %v2980 = vpop.f32.mrb[0].mxu0
  %v2981 = vpop.f32.mrb[0].mxu0
  %v2982 = vadd.f32 %v2886, %v2981
  %v2983 = vpop.f32.mrb[0].mxu0
  %2984 = vmatprep.mubr.bf16.mxu0 0
  %2985 = vmatmul.mubr.bf16.gmra.mrb[0].mxu0 %v2863
  %v2986 = vpop.f32.mrb[0].mxu0
  %v2987 = vadd.f32 %v2886, %v2986
  %v2988 = vpop.f32.mrb[0].mxu0
  %v2989 = vpop.f32.mrb[0].mxu0
  %v2990 = vadd.f32 %v2886, %v2989
  %v2991 = vpop.f32.mrb[0].mxu0
  %2992 = vmatprep.mubr.bf16.mxu0 0
  %2993 = vmatmul.mubr.bf16.gmra.mrb[0].mxu0 %v2864
  %v2994 = vpop.f32.mrb[0].mxu0
  %v2995 = vadd.f32 %v2886, %v2994
  %v2996 = vpop.f32.mrb[0].mxu0
  %v2997 = vpop.f32.mrb[0].mxu0
  %v2998 = vadd.f32 %v2886, %v2997
  %v2999 = vpop.f32.mrb[0].mxu0
  %3000 = vdwg.mxu0
  %v3001 = vmax.f32 %v2971, 0.0
  %v3002 = vmax.f32 %v2974, 0.0
  %v3003 = vmax.f32 %v2979, 0.0
  %v3004 = vmax.f32 %v2982, 0.0
  %v3005 = vmax.f32 %v2987, 0.0
  %v3006 = vmax.f32 %v2990, 0.0
  %v3007 = vmax.f32 %v2995, 0.0
  %v3008 = vmax.f32 %v2998, 0.0
  %3009 = vst.msk [vmem:[#allocation3] sm:$0xff] %vm473, 0.0
  %3010 = vst.msk [vmem:[#allocation3 + $0x8] sm:$0x3] %vm476, 0.0
  %3011 = vst.msk [vmem:[#allocation3 + $0x10] sm:$0xff] %vm473, 0.0
  %3012 = vst.msk [vmem:[#allocation3 + $0x18] sm:$0x3] %vm476, 0.0
  %3013 = vst.msk [vmem:[#allocation3 + $0x20] sm:$0xff] %vm473, 0.0
  %3014 = vst.msk [vmem:[#allocation3 + $0x28] sm:$0x3] %vm476, 0.0
  %3015 = vst.msk [vmem:[#allocation3 + $0x30] sm:$0xff] %vm473, 0.0
  %3016 = vst.msk [vmem:[#allocation3 + $0x38] sm:$0x3] %vm476, 0.0
  %3017 = vst.msk [vmem:[#allocation3 + $0x40] sm:$0xff] %vm473, 0.0
  %3018 = vst.msk [vmem:[#allocation3 + $0x48] sm:$0x3] %vm476, 0.0
  %3019 = vst.msk [vmem:[#allocation3 + $0x50] sm:$0xff] %vm473, 0.0
  %3020 = vst.msk [vmem:[#allocation3 + $0x58] sm:$0x3] %vm476, 0.0
  %3021 = vst.msk [vmem:[#allocation3 + $0x60] sm:$0xff] %vm473, 0.0
  %3022 = vst.msk [vmem:[#allocation3 + $0x68] sm:$0x3] %vm476, 0.0
  %3023 = vst.msk [vmem:[#allocation3 + $0x70] sm:$0xff] %vm473, 0.0
  %3024 = vst.msk [vmem:[#allocation3 + $0x78] sm:$0x3] %vm476, 0.0
  %3025 = vst.msk [vmem:[#allocation3 + $0x80] sm:$0xff] %vm473, 0.0
  %3026 = vst.msk [vmem:[#allocation3 + $0x88] sm:$0x3] %vm476, 0.0
  %3027 = vst.msk [vmem:[#allocation3 + $0x90] sm:$0xff] %vm473, 0.0
  %3028 = vst.msk [vmem:[#allocation3 + $0x98] sm:$0x3] %vm476, 0.0
  %3029 = vst.msk [vmem:[#allocation3 + $0xa0] sm:$0xff] %vm473, 0.0
  %3030 = vst.msk [vmem:[#allocation3 + $0xa8] sm:$0x3] %vm476, 0.0
  %3031 = vst.msk [vmem:[#allocation3 + $0xb0] sm:$0xff] %vm473, 0.0
  %3032 = vst.msk [vmem:[#allocation3 + $0xb8] sm:$0x3] %vm476, 0.0
  %s3033 = scalar_lea.vmem [#allocation3], 16
  %3034 = vst.msk [vmem:[%s3033 + $0x1] sm:$0xff] %vm473, %v3001
  %3035 = vst.msk [vmem:[%s3033 + $0x11] sm:$0xff] %vm473, %v3002
  %3036 = vst.msk [vmem:[%s3033 + $0x21] sm:$0xff] %vm473, %v3003
  %3037 = vst.msk [vmem:[%s3033 + $0x31] sm:$0xff] %vm473, %v3004
  %3038 = vst.msk [vmem:[%s3033 + $0x61] sm:$0xff] %vm473, %v3005
  %3039 = vst.msk [vmem:[%s3033 + $0x71] sm:$0xff] %vm473, %v3006
  %3040 = vst.msk [vmem:[%s3033 + $0x81] sm:$0xff] %vm473, %v3007
  %3041 = vst.msk [vmem:[%s3033 + $0x91] sm:$0xff] %vm473, %v3008
  %v3042 = vld [vmem:[#allocation3] sm:$0xff]
  %v3043 = vld [vmem:[#allocation3 + $0x10] sm:$0xff]
  %v3044 = vld [vmem:[#allocation3 + $0x20] sm:$0xff]
  %v3045 = vld [vmem:[#allocation3 + $0x30] sm:$0xff]
  %v3046 = vld [vmem:[#allocation3 + $0x60] sm:$0xff]
  %v3047 = vld [vmem:[#allocation3 + $0x70] sm:$0xff]
  %v3048 = vld [vmem:[#allocation3 + $0x80] sm:$0xff]
  %v3049 = vld [vmem:[#allocation3 + $0x90] sm:$0xff]
  %v3050 = vld [vmem:[%s3033] sm:$0xff]
  %v3051 = vld [vmem:[%s3033 + $0x10] sm:$0xff]
  %v3052 = vld [vmem:[%s3033 + $0x20] sm:$0xff]
  %v3053 = vld [vmem:[%s3033 + $0x30] sm:$0xff]
  %v3054 = vld [vmem:[%s3033 + $0x60] sm:$0xff]
  %v3055 = vld [vmem:[%s3033 + $0x70] sm:$0xff]
  %v3056 = vld [vmem:[%s3033 + $0x80] sm:$0xff]
  %v3057 = vld [vmem:[%s3033 + $0x90] sm:$0xff]
  %s3058 = scalar_lea.vmem [#allocation3], 32
  %v3059 = vld [vmem:[%s3058] sm:$0xff]
  %v3060 = vld [vmem:[%s3058 + $0x10] sm:$0xff]
  %v3061 = vld [vmem:[%s3058 + $0x20] sm:$0xff]
  %v3062 = vld [vmem:[%s3058 + $0x30] sm:$0xff]
  %v3063 = vld [vmem:[%s3058 + $0x60] sm:$0xff]
  %v3064 = vld [vmem:[%s3058 + $0x70] sm:$0xff]
  %v3065 = vld [vmem:[%s3058 + $0x80] sm:$0xff]
  %v3066 = vld [vmem:[%s3058 + $0x90] sm:$0xff]
  %v3067 = vld [vmem:[#allocation3 + $0x1] sm:$0xff]
  %v3068 = vld [vmem:[#allocation3 + $0x11] sm:$0xff]
  %v3069 = vld [vmem:[#allocation3 + $0x21] sm:$0xff]
  %v3070 = vld [vmem:[#allocation3 + $0x31] sm:$0xff]
  %v3071 = vld [vmem:[#allocation3 + $0x61] sm:$0xff]
  %v3072 = vld [vmem:[#allocation3 + $0x71] sm:$0xff]
  %v3073 = vld [vmem:[#allocation3 + $0x81] sm:$0xff]
  %v3074 = vld [vmem:[#allocation3 + $0x91] sm:$0xff]
  %v3075 = vld [vmem:[%s3033 + $0x1] sm:$0xff]
  %v3076 = vld [vmem:[%s3033 + $0x11] sm:$0xff]
  %v3077 = vld [vmem:[%s3033 + $0x21] sm:$0xff]
  %v3078 = vld [vmem:[%s3033 + $0x31] sm:$0xff]
  %v3079 = vld [vmem:[%s3033 + $0x61] sm:$0xff]
  %v3080 = vld [vmem:[%s3033 + $0x71] sm:$0xff]
  %v3081 = vld [vmem:[%s3033 + $0x81] sm:$0xff]
  %v3082 = vld [vmem:[%s3033 + $0x91] sm:$0xff]
  %v3083 = vld [vmem:[%s3058 + $0x1] sm:$0xff]
  %v3084 = vld [vmem:[%s3058 + $0x11] sm:$0xff]
  %v3085 = vld [vmem:[%s3058 + $0x21] sm:$0xff]
  %v3086 = vld [vmem:[%s3058 + $0x31] sm:$0xff]
  %v3087 = vld [vmem:[%s3058 + $0x61] sm:$0xff]
  %v3088 = vld [vmem:[%s3058 + $0x71] sm:$0xff]
  %v3089 = vld [vmem:[%s3058 + $0x81] sm:$0xff]
  %v3090 = vld [vmem:[%s3058 + $0x91] sm:$0xff]
  %v3091 = vld [vmem:[#allocation3 + $0x2] sm:$0xff]
  %v3092 = vld [vmem:[#allocation3 + $0x12] sm:$0xff]
  %v3093 = vld [vmem:[#allocation3 + $0x22] sm:$0xff]
  %v3094 = vld [vmem:[#allocation3 + $0x32] sm:$0xff]
  %v3095 = vld [vmem:[#allocation3 + $0x62] sm:$0xff]
  %v3096 = vld [vmem:[#allocation3 + $0x72] sm:$0xff]
  %v3097 = vld [vmem:[#allocation3 + $0x82] sm:$0xff]
  %v3098 = vld [vmem:[#allocation3 + $0x92] sm:$0xff]
  %v3099 = vld [vmem:[%s3033 + $0x2] sm:$0xff]
  %v3100 = vld [vmem:[%s3033 + $0x12] sm:$0xff]
  %v3101 = vld [vmem:[%s3033 + $0x22] sm:$0xff]
  %v3102 = vld [vmem:[%s3033 + $0x32] sm:$0xff]
  %v3103 = vld [vmem:[%s3033 + $0x62] sm:$0xff]
  %v3104 = vld [vmem:[%s3033 + $0x72] sm:$0xff]
  %v3105 = vld [vmem:[%s3033 + $0x82] sm:$0xff]
  %v3106 = vld [vmem:[%s3033 + $0x92] sm:$0xff]
  %v3107 = vld [vmem:[%s3058 + $0x2] sm:$0xff]
  %v3108 = vld [vmem:[%s3058 + $0x12] sm:$0xff]
  %v3109 = vld [vmem:[%s3058 + $0x22] sm:$0xff]
  %v3110 = vld [vmem:[%s3058 + $0x32] sm:$0xff]
  %v3111 = vld [vmem:[%s3058 + $0x62] sm:$0xff]
  %v3112 = vld [vmem:[%s3058 + $0x72] sm:$0xff]
  %v3113 = vld [vmem:[%s3058 + $0x82] sm:$0xff]
  %v3114 = vld [vmem:[%s3058 + $0x92] sm:$0xff]
  %3123 = vrot.lane.b32.xlu0 %v3050, 32
  %v3124 = vpop.permute.xlu0 %3123
  %3125 = vrot.lane.b32.xlu0 %v3051, 32
  %v3126 = vpop.permute.xlu0 %3125
  %3127 = vrot.lane.b32.xlu0 %v3052, 32
  %v3128 = vpop.permute.xlu0 %3127
  %3129 = vrot.lane.b32.xlu0 %v3053, 32
  %v3130 = vpop.permute.xlu0 %3129
  %3131 = vrot.lane.b32.xlu0 %v3054, 32
  %v3132 = vpop.permute.xlu0 %3131
  %3133 = vrot.lane.b32.xlu0 %v3055, 32
  %v3134 = vpop.permute.xlu0 %3133
  %3135 = vrot.lane.b32.xlu0 %v3056, 32
  %v3136 = vpop.permute.xlu0 %3135
  %3137 = vrot.lane.b32.xlu0 %v3057, 32
  %v3138 = vpop.permute.xlu0 %3137
  %3155 = vrot.lane.b32.xlu0 %v3059, 64
  %v3156 = vpop.permute.xlu0 %3155
  %3157 = vrot.lane.b32.xlu0 %v3060, 64
  %v3158 = vpop.permute.xlu0 %3157
  %3159 = vrot.lane.b32.xlu0 %v3061, 64
  %v3160 = vpop.permute.xlu0 %3159
  %3161 = vrot.lane.b32.xlu0 %v3062, 64
  %v3162 = vpop.permute.xlu0 %3161
  %3163 = vrot.lane.b32.xlu0 %v3063, 64
  %v3164 = vpop.permute.xlu0 %3163
  %3165 = vrot.lane.b32.xlu0 %v3064, 64
  %v3166 = vpop.permute.xlu0 %3165
  %3167 = vrot.lane.b32.xlu0 %v3065, 64
  %v3168 = vpop.permute.xlu0 %3167
  %3169 = vrot.lane.b32.xlu0 %v3066, 64
  %v3170 = vpop.permute.xlu0 %3169
  %3187 = vrot.lane.b32.xlu0 %v3067, 96
  %v3188 = vpop.permute.xlu0 %3187
  %3189 = vrot.lane.b32.xlu0 %v3068, 96
  %v3190 = vpop.permute.xlu0 %3189
  %3191 = vrot.lane.b32.xlu0 %v3069, 96
  %v3192 = vpop.permute.xlu0 %3191
  %3193 = vrot.lane.b32.xlu0 %v3070, 96
  %v3194 = vpop.permute.xlu0 %3193
  %3195 = vrot.lane.b32.xlu0 %v3071, 96
  %v3196 = vpop.permute.xlu0 %3195
  %3197 = vrot.lane.b32.xlu0 %v3072, 96
  %v3198 = vpop.permute.xlu0 %3197
  %3199 = vrot.lane.b32.xlu0 %v3073, 96
  %v3200 = vpop.permute.xlu0 %3199
  %3201 = vrot.lane.b32.xlu0 %v3074, 96
  %v3202 = vpop.permute.xlu0 %3201
  %3219 = vrot.lane.b32.xlu0 %v3083, 32
  %v3220 = vpop.permute.xlu0 %3219
  %3221 = vrot.lane.b32.xlu0 %v3084, 32
  %v3222 = vpop.permute.xlu0 %3221
  %3223 = vrot.lane.b32.xlu0 %v3085, 32
  %v3224 = vpop.permute.xlu0 %3223
  %3225 = vrot.lane.b32.xlu0 %v3086, 32
  %v3226 = vpop.permute.xlu0 %3225
  %3227 = vrot.lane.b32.xlu0 %v3087, 32
  %v3228 = vpop.permute.xlu0 %3227
  %3229 = vrot.lane.b32.xlu0 %v3088, 32
  %v3230 = vpop.permute.xlu0 %3229
  %3231 = vrot.lane.b32.xlu0 %v3089, 32
  %v3232 = vpop.permute.xlu0 %3231
  %3233 = vrot.lane.b32.xlu0 %v3090, 32
  %v3234 = vpop.permute.xlu0 %3233
  %3251 = vrot.lane.b32.xlu0 %v3091, 64
  %v3252 = vpop.permute.xlu0 %3251
  %3253 = vrot.lane.b32.xlu0 %v3092, 64
  %v3254 = vpop.permute.xlu0 %3253
  %3255 = vrot.lane.b32.xlu0 %v3093, 64
  %v3256 = vpop.permute.xlu0 %3255
  %3257 = vrot.lane.b32.xlu0 %v3094, 64
  %v3258 = vpop.permute.xlu0 %3257
  %3259 = vrot.lane.b32.xlu0 %v3095, 64
  %v3260 = vpop.permute.xlu0 %3259
  %3261 = vrot.lane.b32.xlu0 %v3096, 64
  %v3262 = vpop.permute.xlu0 %3261
  %3263 = vrot.lane.b32.xlu0 %v3097, 64
  %v3264 = vpop.permute.xlu0 %3263
  %3265 = vrot.lane.b32.xlu0 %v3098, 64
  %v3266 = vpop.permute.xlu0 %3265
  %3283 = vrot.lane.b32.xlu0 %v3099, 96
  %v3284 = vpop.permute.xlu0 %3283
  %3285 = vrot.lane.b32.xlu0 %v3100, 96
  %v3286 = vpop.permute.xlu0 %3285
  %3287 = vrot.lane.b32.xlu0 %v3101, 96
  %v3288 = vpop.permute.xlu0 %3287
  %3289 = vrot.lane.b32.xlu0 %v3102, 96
  %v3290 = vpop.permute.xlu0 %3289
  %3291 = vrot.lane.b32.xlu0 %v3103, 96
  %v3292 = vpop.permute.xlu0 %3291
  %3293 = vrot.lane.b32.xlu0 %v3104, 96
  %v3294 = vpop.permute.xlu0 %3293
  %3295 = vrot.lane.b32.xlu0 %v3105, 96
  %v3296 = vpop.permute.xlu0 %3295
  %3297 = vrot.lane.b32.xlu0 %v3106, 96
  %v3298 = vpop.permute.xlu0 %3297
  %v3307 = vsel %vm473, %v3042, %v3124
  %v3308 = vsel %vm473, %v3043, %v3126
  %v3309 = vsel %vm473, %v3044, %v3128
  %v3310 = vsel %vm473, %v3045, %v3130
  %v3311 = vsel %vm473, %v3046, %v3132
  %v3312 = vsel %vm473, %v3047, %v3134
  %v3313 = vsel %vm473, %v3048, %v3136
  %v3314 = vsel %vm473, %v3049, %v3138
  %v3315 = vsel %vm231, %v3307, %v3156
  %v3316 = vsel %vm231, %v3308, %v3158
  %v3317 = vsel %vm231, %v3309, %v3160
  %v3318 = vsel %vm231, %v3310, %v3162
  %v3319 = vsel %vm231, %v3311, %v3164
  %v3320 = vsel %vm231, %v3312, %v3166
  %v3321 = vsel %vm231, %v3313, %v3168
  %v3322 = vsel %vm231, %v3314, %v3170
  %v3323 = vsel %vm1689, %v3315, %v3188
  %v3324 = vsel %vm1689, %v3316, %v3190
  %v3325 = vsel %vm1689, %v3317, %v3192
  %v3326 = vsel %vm1689, %v3318, %v3194
  %v3327 = vsel %vm1689, %v3319, %v3196
  %v3328 = vsel %vm1689, %v3320, %v3198
  %v3329 = vsel %vm1689, %v3321, %v3200
  %v3330 = vsel %vm1689, %v3322, %v3202
  %v3331 = vsel %vm473, %v3075, %v3220
  %v3332 = vsel %vm473, %v3076, %v3222
  %v3333 = vsel %vm473, %v3077, %v3224
  %v3334 = vsel %vm473, %v3078, %v3226
  %v3335 = vsel %vm473, %v3079, %v3228
  %v3336 = vsel %vm473, %v3080, %v3230
  %v3337 = vsel %vm473, %v3081, %v3232
  %v3338 = vsel %vm473, %v3082, %v3234
  %v3339 = vsel %vm231, %v3331, %v3252
  %v3340 = vsel %vm231, %v3332, %v3254
  %v3341 = vsel %vm231, %v3333, %v3256
  %v3342 = vsel %vm231, %v3334, %v3258
  %v3343 = vsel %vm231, %v3335, %v3260
  %v3344 = vsel %vm231, %v3336, %v3262
  %v3345 = vsel %vm231, %v3337, %v3264
  %v3346 = vsel %vm231, %v3338, %v3266
  %v3347 = vsel %vm1689, %v3339, %v3284
  %v3348 = vsel %vm1689, %v3340, %v3286
  %v3349 = vsel %vm1689, %v3341, %v3288
  %v3350 = vsel %vm1689, %v3342, %v3290
  %v3351 = vsel %vm1689, %v3343, %v3292
  %v3352 = vsel %vm1689, %v3344, %v3294
  %v3353 = vsel %vm1689, %v3345, %v3296
  %v3354 = vsel %vm1689, %v3346, %v3298
  %v3355 = vpack.c.bf16 %v3324, %v3323
  %v3356 = vpack.c.bf16 %v3348, %v3347
  %v3357 = vpack.c.bf16 %v3108, %v3107
  %v3358 = vpack.c.bf16 %v3326, %v3325
  %v3359 = vpack.c.bf16 %v3350, %v3349
  %v3360 = vpack.c.bf16 %v3110, %v3109
  %v3361 = vpack.c.bf16 %v3328, %v3327
  %v3362 = vpack.c.bf16 %v3352, %v3351
  %v3363 = vpack.c.bf16 %v3112, %v3111
  %v3364 = vpack.c.bf16 %v3330, %v3329
  %v3365 = vpack.c.bf16 %v3354, %v3353
  %v3366 = vpack.c.bf16 %v3114, %v3113
  %v3367 = vld [vmem:[%s12] sm:$0xf]
  %v3368 = vld [vmem:[%s12 + $0x4] sm:$0xf]
  %v3369 = vld [vmem:[%s12 + $0x8] sm:$0xf]
  %v3370 = vld [vmem:[%s12 + $0xc] sm:$0xf]
  %v3371 = vld [vmem:[%s12 + $0x10] sm:$0xf]
  %v3372 = vld [vmem:[%s12 + $0x14] sm:$0xf]
  %v3373 = vld [vmem:[%s12 + $0x18] sm:$0xf]
  %v3374 = vld [vmem:[%s12 + $0x1c] sm:$0xf]
  %v3375 = vld [vmem:[%s12 + $0x20] sm:$0xf]
  %v3376 = vld [vmem:[%s12 + $0x24] sm:$0xf]
  %v3377 = vld [vmem:[%s12 + $0x28] sm:$0xf]
  %v3378 = vld [vmem:[%s12 + $0x2c] sm:$0xf]
  %v3379 = vld [vmem:[%s12 + $0x30] sm:$0xf]
  %v3380 = vld [vmem:[%s12 + $0x34] sm:$0xf]
  %v3381 = vld [vmem:[%s12 + $0x38] sm:$0xf]
  %v3382 = vld [vmem:[%s12 + $0x3c] sm:$0xf]
  %v3383 = vld [vmem:[%s12 + $0x40] sm:$0xf]
  %v3384 = vld [vmem:[%s12 + $0x44] sm:$0xf]
  %v3385 = vld [vmem:[%s12 + $0x48] sm:$0xf]
  %v3386 = vld [vmem:[%s12 + $0x4c] sm:$0xf]
  %v3387 = vld [vmem:[%s12 + $0x50] sm:$0xf]
  %v3388 = vld [vmem:[%s12 + $0x54] sm:$0xf]
  %v3389 = vld [vmem:[%s12 + $0x58] sm:$0xf]
  %v3390 = vld [vmem:[%s12 + $0x5c] sm:$0xf]
  %v3391 = vld [vmem:[%s12 + $0x60] sm:$0xf]
  %v3392 = vld [vmem:[%s12 + $0x64] sm:$0xf]
  %v3393 = vld [vmem:[%s12 + $0x68] sm:$0xf]
  %v3394 = vld [vmem:[%s12 + $0x6c] sm:$0xf]
  %v3395 = vld [vmem:[%s12 + $0x70] sm:$0xf]
  %v3396 = vld [vmem:[%s12 + $0x74] sm:$0xf]
  %v3397 = vld [vmem:[%s12 + $0x78] sm:$0xf]
  %v3398 = vld [vmem:[%s12 + $0x7c] sm:$0xf]
  %v3399 = vld [vmem:[%s12 + $0x80] sm:$0xf]
  %v3400 = vld [vmem:[%s12 + $0x84] sm:$0xf]
  %v3401 = vld [vmem:[%s12 + $0x88] sm:$0xf]
  %v3402 = vld [vmem:[%s12 + $0x8c] sm:$0xf]
  %v3403 = vld [vmem:[%s13] sm:$0x1]
  %v3405 = vlaneseq
  %v3406 = vshrl.u32 %v3405, 7
  %v3407 = vsub.s32 0, %v3406
  %v3408 = vrot.slane %v3403, %v3407
  %v3446 = vunpack.c.l.b16 %v3367
  %v3447 = vunpack.c.l.b16 %v3368
  %v3448 = vunpack.c.l.b16 %v3369
  %v3449 = vunpack.c.l.b16 %v3370
  %v3450 = vunpack.c.l.b16 %v3371
  %v3451 = vunpack.c.l.b16 %v3372
  %v3452 = vunpack.c.l.b16 %v3373
  %v3453 = vunpack.c.l.b16 %v3374
  %v3454 = vunpack.c.l.b16 %v3375
  %v3455 = vunpack.c.l.b16 %v3376
  %v3456 = vunpack.c.l.b16 %v3377
  %v3457 = vunpack.c.l.b16 %v3378
  %v3458 = vunpack.c.l.b16 %v3379
  %v3459 = vunpack.c.l.b16 %v3380
  %v3460 = vunpack.c.l.b16 %v3381
  %v3461 = vunpack.c.l.b16 %v3382
  %v3462 = vunpack.c.l.b16 %v3383
  %v3463 = vunpack.c.l.b16 %v3384
  %v3464 = vunpack.c.l.b16 %v3385
  %v3465 = vunpack.c.l.b16 %v3386
  %v3466 = vunpack.c.l.b16 %v3387
  %v3467 = vunpack.c.l.b16 %v3388
  %v3468 = vunpack.c.l.b16 %v3389
  %v3469 = vunpack.c.l.b16 %v3390
  %v3470 = vunpack.c.l.b16 %v3391
  %v3471 = vunpack.c.l.b16 %v3392
  %v3472 = vunpack.c.l.b16 %v3393
  %v3473 = vunpack.c.l.b16 %v3394
  %v3474 = vunpack.c.l.b16 %v3395
  %v3475 = vunpack.c.l.b16 %v3396
  %v3476 = vunpack.c.l.b16 %v3397
  %v3477 = vunpack.c.l.b16 %v3398
  %v3478 = vunpack.c.l.b16 %v3399
  %v3479 = vunpack.c.l.b16 %v3400
  %v3480 = vunpack.c.l.b16 %v3401
  %v3481 = vunpack.c.l.b16 %v3402
  %v3482 = vpack.c.b16 %v3447, %v3446
  %v3483 = vpack.c.b16 %v3449, %v3448
  %v3484 = vpack.c.b16 %v3451, %v3450
  %v3485 = vpack.c.b16 %v3453, %v3452
  %v3486 = vpack.c.b16 %v3455, %v3454
  %v3487 = vpack.c.b16 %v3457, %v3456
  %v3488 = vpack.c.b16 %v3459, %v3458
  %v3489 = vpack.c.b16 %v3461, %v3460
  %v3490 = vpack.c.b16 %v3463, %v3462
  %v3491 = vpack.c.b16 %v3465, %v3464
  %v3492 = vpack.c.b16 %v3467, %v3466
  %v3493 = vpack.c.b16 %v3469, %v3468
  %v3494 = vpack.c.b16 %v3471, %v3470
  %v3495 = vpack.c.b16 %v3473, %v3472
  %v3496 = vpack.c.b16 %v3475, %v3474
  %v3497 = vpack.c.b16 %v3477, %v3476
  %v3498 = vpack.c.b16 %v3479, %v3478
  %v3499 = vpack.c.b16 %v3481, %v3480
  %v3519 = vsel %vm473, %v3357, 0
  %v3522 = vsel %vm473, %v3360, 0
  %v3525 = vsel %vm473, %v3363, 0
  %v3528 = vsel %vm473, %v3366, 0
  %3530 = vmatprep.subr.bf16.mxu0 0
  %3531 = vmatpush1.bf16.msra.mxu0 %v3482
  %3532 = vmatprep.subr.bf16.mxu0 0
  %3533 = vmatpush1.bf16.msra.mxu0 %v3483
  %3534 = vmatprep.subr.bf16.mxu0 0
  %3535 = vmatpush1.bf16.msra.mxu0 %v3484
  %3536 = vmatprep.subr.bf16.mxu0 0
  %3537 = vmatpush1.bf16.msra.mxu0 %v3485
  %3538 = vmatprep.subr.bf16.mxu0 0
  %3539 = vmatpush1.bf16.msra.mxu0 %v3486
  %3540 = vmatprep.subr.bf16.mxu0 0
  %3541 = vmatpush1.bf16.msra.mxu0 %v3487
  %3542 = vmatprep.subr.bf16.mxu0 0
  %3543 = vmatpush1.bf16.msra.mxu0 %v3488
  %3544 = vmatprep.subr.bf16.mxu0 0
  %3545 = vmatpush1.bf16.msra.mxu0 %v3489
  %3546 = vmatprep.subr.bf16.mxu0 0
  %3547 = vmatpush1.bf16.msra.mxu0 %v3490
  %3548 = vmatprep.subr.bf16.mxu0 0
  %3549 = vmatpush1.bf16.msra.mxu0 %v3491
  %3550 = vmatprep.subr.bf16.mxu0 0
  %3551 = vmatpush1.bf16.msra.mxu0 %v3492
  %3552 = vmatprep.subr.bf16.mxu0 0
  %3553 = vmatpush1.bf16.msra.mxu0 %v3493
  %3554 = vmatprep.subr.bf16.mxu0 0
  %3555 = vmatpush1.bf16.msra.mxu0 %v3494
  %3556 = vmatprep.subr.bf16.mxu0 0
  %3557 = vmatpush1.bf16.msra.mxu0 %v3495
  %3558 = vmatprep.subr.bf16.mxu0 0
  %3559 = vmatpush1.bf16.msra.mxu0 %v3496
  %3560 = vmatprep.subr.bf16.mxu0 0
  %3561 = vmatpush1.bf16.msra.mxu0 %v3497
  %3562 = vmatprep.mubr.bf16.mxu0 %v3356
  %3563 = vmatmul.mubr.bf16.gmra.mrb[0].mxu0 %v3355
  %v3564 = vpop.f32.mrb[0].mxu0
  %v3565 = vadd.f32 %v3408, %v3564
  %v3566 = vpop.f32.mrb[0].mxu0
  %v3567 = vpop.f32.mrb[0].mxu0
  %v3568 = vadd.f32 %v3408, %v3567
  %v3569 = vpop.f32.mrb[0].mxu0
  %3570 = vmatprep.mubr.bf16.mxu0 %v3359
  %3571 = vmatmul.mubr.bf16.gmra.mrb[0].mxu0 %v3358
  %v3572 = vpop.f32.mrb[0].mxu0
  %v3573 = vadd.f32 %v3408, %v3572
  %v3574 = vpop.f32.mrb[0].mxu0
  %v3575 = vpop.f32.mrb[0].mxu0
  %v3576 = vadd.f32 %v3408, %v3575
  %v3577 = vpop.f32.mrb[0].mxu0
  %3578 = vmatprep.mubr.bf16.mxu0 %v3362
  %3579 = vmatmul.mubr.bf16.gmra.mrb[0].mxu0 %v3361
  %v3580 = vpop.f32.mrb[0].mxu0
  %v3581 = vadd.f32 %v3408, %v3580
  %v3582 = vpop.f32.mrb[0].mxu0
  %v3583 = vpop.f32.mrb[0].mxu0
  %v3584 = vadd.f32 %v3408, %v3583
  %v3585 = vpop.f32.mrb[0].mxu0
  %3586 = vmatprep.mubr.bf16.mxu0 %v3365
  %3587 = vmatmul.mubr.bf16.gmra.mrb[0].mxu0 %v3364
  %v3588 = vpop.f32.mrb[0].mxu0
  %v3589 = vadd.f32 %v3408, %v3588
  %v3590 = vpop.f32.mrb[0].mxu0
  %v3591 = vpop.f32.mrb[0].mxu0
  %v3592 = vadd.f32 %v3408, %v3591
  %v3593 = vpop.f32.mrb[0].mxu0
  %3594 = vdwg.mxu0
  %3595 = vmatprep.subr.bf16.mxu0 0
  %3596 = vmatpush1.bf16.msra.mxu0 %v3498
  %3597 = vmatprep.subr.bf16.mxu0 0
  %3598 = vmatpush1.bf16.msra.mxu0 %v3499
  %3599 = vmatprep.subr.bf16.mxu0 0
  %3600 = vmatpush1.bf16.msra.mxu0 0
  %3601 = vmatprep.subr.bf16.mxu0 0
  %3602 = vmatpush1.bf16.msra.mxu0 0
  %3603 = vmatprep.subr.bf16.mxu0 0
  %3604 = vmatpush1.bf16.msra.mxu0 0
  %3605 = vmatprep.subr.bf16.mxu0 0
  %3606 = vmatpush1.bf16.msra.mxu0 0
  %3607 = vmatprep.subr.bf16.mxu0 0
  %3608 = vmatpush1.bf16.msra.mxu0 0
  %3609 = vmatprep.subr.bf16.mxu0 0
  %3610 = vmatpush1.bf16.msra.mxu0 0
  %3611 = vmatprep.subr.bf16.mxu0 0
  %3612 = vmatpush1.bf16.msra.mxu0 0
  %3613 = vmatprep.subr.bf16.mxu0 0
  %3614 = vmatpush1.bf16.msra.mxu0 0
  %3615 = vmatprep.subr.bf16.mxu0 0
  %3616 = vmatpush1.bf16.msra.mxu0 0
  %3617 = vmatprep.subr.bf16.mxu0 0
  %3618 = vmatpush1.bf16.msra.mxu0 0
  %3619 = vmatprep.subr.bf16.mxu0 0
  %3620 = vmatpush1.bf16.msra.mxu0 0
  %3621 = vmatprep.subr.bf16.mxu0 0
  %3622 = vmatpush1.bf16.msra.mxu0 0
  %3623 = vmatprep.subr.bf16.mxu0 0
  %3624 = vmatpush1.bf16.msra.mxu0 0
  %3625 = vmatprep.subr.bf16.mxu0 0
  %3626 = vmatpush1.bf16.msra.mxu0 0
  %3627 = vmatprep.mubr.bf16.mxu0 0
  %3628 = vmatmul.mubr.bf16.gmra.mrb[0].mxu0 %v3519
  %v3629 = vpop.f32.mrb[0].mxu0
  %v3630 = vadd.f32 %v3565, %v3629
  %v3631 = vpop.f32.mrb[0].mxu0
  %v3632 = vpop.f32.mrb[0].mxu0
  %v3633 = vadd.f32 %v3568, %v3632
  %v3634 = vpop.f32.mrb[0].mxu0
  %3635 = vmatprep.mubr.bf16.mxu0 0
  %3636 = vmatmul.mubr.bf16.gmra.mrb[0].mxu0 %v3522
  %v3637 = vpop.f32.mrb[0].mxu0
  %v3638 = vadd.f32 %v3573, %v3637
  %v3639 = vpop.f32.mrb[0].mxu0
  %v3640 = vpop.f32.mrb[0].mxu0
  %v3641 = vadd.f32 %v3576, %v3640
  %v3642 = vpop.f32.mrb[0].mxu0
  %3643 = vmatprep.mubr.bf16.mxu0 0
  %3644 = vmatmul.mubr.bf16.gmra.mrb[0].mxu0 %v3525
  %v3645 = vpop.f32.mrb[0].mxu0
  %v3646 = vadd.f32 %v3581, %v3645
  %v3647 = vpop.f32.mrb[0].mxu0
  %v3648 = vpop.f32.mrb[0].mxu0
  %v3649 = vadd.f32 %v3584, %v3648
  %v3650 = vpop.f32.mrb[0].mxu0
  %3651 = vmatprep.mubr.bf16.mxu0 0
  %3652 = vmatmul.mubr.bf16.gmra.mrb[0].mxu0 %v3528
  %v3653 = vpop.f32.mrb[0].mxu0
  %v3654 = vadd.f32 %v3589, %v3653
  %v3655 = vpop.f32.mrb[0].mxu0
  %v3656 = vpop.f32.mrb[0].mxu0
  %v3657 = vadd.f32 %v3592, %v3656
  %v3658 = vpop.f32.mrb[0].mxu0
  %3659 = vdwg.mxu0
  %v3660 = vmax.f32 %v3630, 0.0
  %v3661 = vmax.f32 %v3633, 0.0
  %v3662 = vmax.f32 %v3638, 0.0
  %v3663 = vmax.f32 %v3641, 0.0
  %v3664 = vmax.f32 %v3646, 0.0
  %v3665 = vmax.f32 %v3649, 0.0
  %v3666 = vmax.f32 %v3654, 0.0
  %v3667 = vmax.f32 %v3657, 0.0
  %v3668 = vpack.c.bf16 %v3661, %v3660
  %v3669 = vpack.c.bf16 %v3663, %v3662
  %v3670 = vpack.c.bf16 %v3665, %v3664
  %v3671 = vpack.c.bf16 %v3667, %v3666
  %v3672 = vld [vmem:[%s14] sm:$0xf]
  %v3673 = vld [vmem:[%s14 + $0x4] sm:$0xf]
  %v3674 = vld [vmem:[%s14 + $0x8] sm:$0xf]
  %v3675 = vld [vmem:[%s14 + $0xc] sm:$0xf]
  %v3676 = vld [vmem:[%s15] sm:$0x1]
  %v3678 = vlaneseq
  %v3679 = vshrl.u32 %v3678, 7
  %v3680 = vsub.s32 0, %v3679
  %v3681 = vrot.slane %v3676, %v3680
  %v3687 = vunpack.c.l.b16 %v3672
  %v3688 = vunpack.c.l.b16 %v3673
  %v3689 = vunpack.c.l.b16 %v3674
  %v3690 = vunpack.c.l.b16 %v3675
  %v3691 = vpack.c.b16 %v3688, %v3687
  %v3692 = vpack.c.b16 %v3690, %v3689
  %v3696 = vsel %vm473, %v3668, 0
  %v3699 = vsel %vm473, %v3669, 0
  %v3702 = vsel %vm473, %v3670, 0
  %v3705 = vsel %vm473, %v3671, 0
  %3707 = vmatprep.subr.bf16.mxu0 0
  %3708 = vmatpush1.bf16.msra.mxu0 %v3691
  %3709 = vmatprep.subr.bf16.mxu0 0
  %3710 = vmatpush1.bf16.msra.mxu0 %v3692
  %3711 = vmatprep.subr.bf16.mxu0 0
  %3712 = vmatpush1.bf16.msra.mxu0 0
  %3713 = vmatprep.subr.bf16.mxu0 0
  %3714 = vmatpush1.bf16.msra.mxu0 0
  %3715 = vmatprep.subr.bf16.mxu0 0
  %3716 = vmatpush1.bf16.msra.mxu0 0
  %3717 = vmatprep.subr.bf16.mxu0 0
  %3718 = vmatpush1.bf16.msra.mxu0 0
  %3719 = vmatprep.subr.bf16.mxu0 0
  %3720 = vmatpush1.bf16.msra.mxu0 0
  %3721 = vmatprep.subr.bf16.mxu0 0
  %3722 = vmatpush1.bf16.msra.mxu0 0
  %3723 = vmatprep.subr.bf16.mxu0 0
  %3724 = vmatpush1.bf16.msra.mxu0 0
  %3725 = vmatprep.subr.bf16.mxu0 0
  %3726 = vmatpush1.bf16.msra.mxu0 0
  %3727 = vmatprep.subr.bf16.mxu0 0
  %3728 = vmatpush1.bf16.msra.mxu0 0
  %3729 = vmatprep.subr.bf16.mxu0 0
  %3730 = vmatpush1.bf16.msra.mxu0 0
  %3731 = vmatprep.subr.bf16.mxu0 0
  %3732 = vmatpush1.bf16.msra.mxu0 0
  %3733 = vmatprep.subr.bf16.mxu0 0
  %3734 = vmatpush1.bf16.msra.mxu0 0
  %3735 = vmatprep.subr.bf16.mxu0 0
  %3736 = vmatpush1.bf16.msra.mxu0 0
  %3737 = vmatprep.subr.bf16.mxu0 0
  %3738 = vmatpush1.bf16.msra.mxu0 0
  %3739 = vmatprep.mubr.bf16.mxu0 0
  %3740 = vmatmul.mubr.bf16.gmra.mrb[0].mxu0 %v3696
  %v3741 = vpop.f32.mrb[0].mxu0
  %v3742 = vadd.f32 %v3681, %v3741
  %v3743 = vpop.f32.mrb[0].mxu0
  %v3744 = vpop.f32.mrb[0].mxu0
  %v3745 = vadd.f32 %v3681, %v3744
  %v3746 = vpop.f32.mrb[0].mxu0
  %3747 = vmatprep.mubr.bf16.mxu0 0
  %3748 = vmatmul.mubr.bf16.gmra.mrb[0].mxu0 %v3699
  %v3749 = vpop.f32.mrb[0].mxu0
  %v3750 = vadd.f32 %v3681, %v3749
  %v3751 = vpop.f32.mrb[0].mxu0
  %v3752 = vpop.f32.mrb[0].mxu0
  %v3753 = vadd.f32 %v3681, %v3752
  %v3754 = vpop.f32.mrb[0].mxu0
  %3755 = vmatprep.mubr.bf16.mxu0 0
  %3756 = vmatmul.mubr.bf16.gmra.mrb[0].mxu0 %v3702
  %v3757 = vpop.f32.mrb[0].mxu0
  %v3758 = vadd.f32 %v3681, %v3757
  %v3759 = vpop.f32.mrb[0].mxu0
  %v3760 = vpop.f32.mrb[0].mxu0
  %v3761 = vadd.f32 %v3681, %v3760
  %v3762 = vpop.f32.mrb[0].mxu0
  %3763 = vmatprep.mubr.bf16.mxu0 0
  %3764 = vmatmul.mubr.bf16.gmra.mrb[0].mxu0 %v3705
  %v3765 = vpop.f32.mrb[0].mxu0
  %v3766 = vadd.f32 %v3681, %v3765
  %v3767 = vpop.f32.mrb[0].mxu0
  %v3768 = vpop.f32.mrb[0].mxu0
  %v3769 = vadd.f32 %v3681, %v3768
  %v3770 = vpop.f32.mrb[0].mxu0
  %3771 = vdwg.mxu0
  %v3772 = vadd.f32 %v3742, %v2853
  %v3773 = vadd.f32 %v3745, %v2854
  %v3774 = vadd.f32 %v3750, %v2855
  %v3775 = vadd.f32 %v3753, %v2856
  %v3776 = vadd.f32 %v3758, %v2857
  %v3777 = vadd.f32 %v3761, %v2858
  %v3778 = vadd.f32 %v3766, %v2859
  %v3779 = vadd.f32 %v3769, %v2860
  %v3780 = vmax.f32 %v3772, 0.0
  %v3781 = vmax.f32 %v3773, 0.0
  %v3782 = vmax.f32 %v3774, 0.0
  %v3783 = vmax.f32 %v3775, 0.0
  %v3784 = vmax.f32 %v3776, 0.0
  %v3785 = vmax.f32 %v3777, 0.0
  %v3786 = vmax.f32 %v3778, 0.0
  %v3787 = vmax.f32 %v3779, 0.0
  %v3788 = vpack.c.bf16 %v3781, %v3780
  %v3789 = vpack.c.bf16 %v3783, %v3782
  %v3790 = vpack.c.bf16 %v3785, %v3784
  %v3791 = vpack.c.bf16 %v3787, %v3786
  %v3792 = vld [vmem:[%s16] sm:$0xf]
  %v3793 = vld [vmem:[%s16 + $0x4] sm:$0xf]
  %v3794 = vld [vmem:[%s16 + $0x8] sm:$0xf]
  %v3795 = vld [vmem:[%s16 + $0xc] sm:$0xf]
  %v3796 = vld [vmem:[%s16 + $0x10] sm:$0xf]
  %v3797 = vld [vmem:[%s16 + $0x14] sm:$0xf]
  %v3798 = vld [vmem:[%s16 + $0x18] sm:$0xf]
  %v3799 = vld [vmem:[%s16 + $0x1c] sm:$0xf]
  %v3800 = vld [vmem:[%s16 + $0x20] sm:$0xf]
  %v3801 = vld [vmem:[%s16 + $0x24] sm:$0xf]
  %v3802 = vld [vmem:[%s16 + $0x28] sm:$0xf]
  %v3803 = vld [vmem:[%s16 + $0x2c] sm:$0xf]
  %v3804 = vld [vmem:[%s16 + $0x30] sm:$0xf]
  %v3805 = vld [vmem:[%s16 + $0x34] sm:$0xf]
  %v3806 = vld [vmem:[%s16 + $0x38] sm:$0xf]
  %v3807 = vld [vmem:[%s16 + $0x3c] sm:$0xf]
  %v3808 = vld [vmem:[%s17] sm:$0x1]
  %v3810 = vlaneseq
  %v3811 = vshrl.u32 %v3810, 7
  %v3812 = vsub.s32 0, %v3811
  %v3813 = vrot.slane %v3808, %v3812
  %v3831 = vunpack.c.l.b16 %v3792
  %v3832 = vunpack.c.l.b16 %v3793
  %v3833 = vunpack.c.l.b16 %v3794
  %v3834 = vunpack.c.l.b16 %v3795
  %v3835 = vunpack.c.l.b16 %v3796
  %v3836 = vunpack.c.l.b16 %v3797
  %v3837 = vunpack.c.l.b16 %v3798
  %v3838 = vunpack.c.l.b16 %v3799
  %v3839 = vunpack.c.l.b16 %v3800
  %v3840 = vunpack.c.l.b16 %v3801
  %v3841 = vunpack.c.l.b16 %v3802
  %v3842 = vunpack.c.l.b16 %v3803
  %v3843 = vunpack.c.l.b16 %v3804
  %v3844 = vunpack.c.l.b16 %v3805
  %v3845 = vunpack.c.l.b16 %v3806
  %v3846 = vunpack.c.l.b16 %v3807
  %v3847 = vpack.c.b16 %v3832, %v3831
  %v3848 = vpack.c.b16 %v3834, %v3833
  %v3849 = vpack.c.b16 %v3836, %v3835
  %v3850 = vpack.c.b16 %v3838, %v3837
  %v3851 = vpack.c.b16 %v3840, %v3839
  %v3852 = vpack.c.b16 %v3842, %v3841
  %v3853 = vpack.c.b16 %v3844, %v3843
  %v3854 = vpack.c.b16 %v3846, %v3845
  %3863 = vmatprep.subr.bf16.mxu0 0
  %3864 = vmatpush1.bf16.msra.mxu0 %v3847
  %3865 = vmatprep.subr.bf16.mxu0 0
  %3866 = vmatpush1.bf16.msra.mxu0 %v3848
  %3867 = vmatprep.subr.bf16.mxu0 0
  %3868 = vmatpush1.bf16.msra.mxu0 %v3849
  %3869 = vmatprep.subr.bf16.mxu0 0
  %3870 = vmatpush1.bf16.msra.mxu0 %v3850
  %3871 = vmatprep.subr.bf16.mxu0 0
  %3872 = vmatpush1.bf16.msra.mxu0 %v3851
  %3873 = vmatprep.subr.bf16.mxu0 0
  %3874 = vmatpush1.bf16.msra.mxu0 %v3852
  %3875 = vmatprep.subr.bf16.mxu0 0
  %3876 = vmatpush1.bf16.msra.mxu0 %v3853
  %3877 = vmatprep.subr.bf16.mxu0 0
  %3878 = vmatpush1.bf16.msra.mxu0 %v3854
  %3879 = vmatprep.subr.bf16.mxu0 0
  %3880 = vmatpush1.bf16.msra.mxu0 0
  %3881 = vmatprep.subr.bf16.mxu0 0
  %3882 = vmatpush1.bf16.msra.mxu0 0
  %3883 = vmatprep.subr.bf16.mxu0 0
  %3884 = vmatpush1.bf16.msra.mxu0 0
  %3885 = vmatprep.subr.bf16.mxu0 0
  %3886 = vmatpush1.bf16.msra.mxu0 0
  %3887 = vmatprep.subr.bf16.mxu0 0
  %3888 = vmatpush1.bf16.msra.mxu0 0
  %3889 = vmatprep.subr.bf16.mxu0 0
  %3890 = vmatpush1.bf16.msra.mxu0 0
  %3891 = vmatprep.subr.bf16.mxu0 0
  %3892 = vmatpush1.bf16.msra.mxu0 0
  %3893 = vmatprep.subr.bf16.mxu0 0
  %3894 = vmatpush1.bf16.msra.mxu0 0
  %3895 = vmatprep.mubr.bf16.mxu0 0
  %3896 = vmatmul.mubr.bf16.gmra.mrb[0].mxu0 %v3788
  %v3897 = vpop.f32.mrb[0].mxu0
  %v3898 = vadd.f32 %v3813, %v3897
  %v3899 = vpop.f32.mrb[0].mxu0
  %v3900 = vpop.f32.mrb[0].mxu0
  %v3901 = vadd.f32 %v3813, %v3900
  %v3902 = vpop.f32.mrb[0].mxu0
  %3903 = vmatprep.mubr.bf16.mxu0 0
  %3904 = vmatmul.mubr.bf16.gmra.mrb[0].mxu0 %v3789
  %v3905 = vpop.f32.mrb[0].mxu0
  %v3906 = vadd.f32 %v3813, %v3905
  %v3907 = vpop.f32.mrb[0].mxu0
  %v3908 = vpop.f32.mrb[0].mxu0
  %v3909 = vadd.f32 %v3813, %v3908
  %v3910 = vpop.f32.mrb[0].mxu0
  %3911 = vmatprep.mubr.bf16.mxu0 0
  %3912 = vmatmul.mubr.bf16.gmra.mrb[0].mxu0 %v3790
  %v3913 = vpop.f32.mrb[0].mxu0
  %v3914 = vadd.f32 %v3813, %v3913
  %v3915 = vpop.f32.mrb[0].mxu0
  %v3916 = vpop.f32.mrb[0].mxu0
  %v3917 = vadd.f32 %v3813, %v3916
  %v3918 = vpop.f32.mrb[0].mxu0
  %3919 = vmatprep.mubr.bf16.mxu0 0
  %3920 = vmatmul.mubr.bf16.gmra.mrb[0].mxu0 %v3791
  %v3921 = vpop.f32.mrb[0].mxu0
  %v3922 = vadd.f32 %v3813, %v3921
  %v3923 = vpop.f32.mrb[0].mxu0
  %v3924 = vpop.f32.mrb[0].mxu0
  %v3925 = vadd.f32 %v3813, %v3924
  %v3926 = vpop.f32.mrb[0].mxu0
  %3927 = vdwg.mxu0
  %v3928 = vmax.f32 %v3898, 0.0
  %v3929 = vmax.f32 %v3901, 0.0
  %v3930 = vmax.f32 %v3906, 0.0
  %v3931 = vmax.f32 %v3909, 0.0
  %v3932 = vmax.f32 %v3914, 0.0
  %v3933 = vmax.f32 %v3917, 0.0
  %v3934 = vmax.f32 %v3922, 0.0
  %v3935 = vmax.f32 %v3925, 0.0
  %3936 = vst.msk [vmem:[#allocation3] sm:$0xff] %vm473, 0.0
  %3937 = vst.msk [vmem:[#allocation3 + $0x8] sm:$0x3] %vm476, 0.0
  %3938 = vst.msk [vmem:[#allocation3 + $0x10] sm:$0xff] %vm473, 0.0
  %3939 = vst.msk [vmem:[#allocation3 + $0x18] sm:$0x3] %vm476, 0.0
  %3940 = vst.msk [vmem:[#allocation3 + $0x20] sm:$0xff] %vm473, 0.0
  %3941 = vst.msk [vmem:[#allocation3 + $0x28] sm:$0x3] %vm476, 0.0
  %3942 = vst.msk [vmem:[#allocation3 + $0x30] sm:$0xff] %vm473, 0.0
  %3943 = vst.msk [vmem:[#allocation3 + $0x38] sm:$0x3] %vm476, 0.0
  %3944 = vst.msk [vmem:[#allocation3 + $0x40] sm:$0xff] %vm473, 0.0
  %3945 = vst.msk [vmem:[#allocation3 + $0x48] sm:$0x3] %vm476, 0.0
  %3946 = vst.msk [vmem:[#allocation3 + $0x50] sm:$0xff] %vm473, 0.0
  %3947 = vst.msk [vmem:[#allocation3 + $0x58] sm:$0x3] %vm476, 0.0
  %3948 = vst.msk [vmem:[#allocation3 + $0x60] sm:$0xff] %vm473, 0.0
  %3949 = vst.msk [vmem:[#allocation3 + $0x68] sm:$0x3] %vm476, 0.0
  %3950 = vst.msk [vmem:[#allocation3 + $0x70] sm:$0xff] %vm473, 0.0
  %3951 = vst.msk [vmem:[#allocation3 + $0x78] sm:$0x3] %vm476, 0.0
  %3952 = vst.msk [vmem:[#allocation3 + $0x80] sm:$0xff] %vm473, 0.0
  %3953 = vst.msk [vmem:[#allocation3 + $0x88] sm:$0x3] %vm476, 0.0
  %3954 = vst.msk [vmem:[#allocation3 + $0x90] sm:$0xff] %vm473, 0.0
  %3955 = vst.msk [vmem:[#allocation3 + $0x98] sm:$0x3] %vm476, 0.0
  %3956 = vst.msk [vmem:[#allocation3 + $0xa0] sm:$0xff] %vm473, 0.0
  %3957 = vst.msk [vmem:[#allocation3 + $0xa8] sm:$0x3] %vm476, 0.0
  %3958 = vst.msk [vmem:[#allocation3 + $0xb0] sm:$0xff] %vm473, 0.0
  %3959 = vst.msk [vmem:[#allocation3 + $0xb8] sm:$0x3] %vm476, 0.0
  %3960 = vst.msk [vmem:[%s3033 + $0x1] sm:$0xff] %vm473, %v3928
  %3961 = vst.msk [vmem:[%s3033 + $0x11] sm:$0xff] %vm473, %v3929
  %3962 = vst.msk [vmem:[%s3033 + $0x21] sm:$0xff] %vm473, %v3930
  %3963 = vst.msk [vmem:[%s3033 + $0x31] sm:$0xff] %vm473, %v3931
  %3964 = vst.msk [vmem:[%s3033 + $0x61] sm:$0xff] %vm473, %v3932
  %3965 = vst.msk [vmem:[%s3033 + $0x71] sm:$0xff] %vm473, %v3933
  %3966 = vst.msk [vmem:[%s3033 + $0x81] sm:$0xff] %vm473, %v3934
  %3967 = vst.msk [vmem:[%s3033 + $0x91] sm:$0xff] %vm473, %v3935
  %v3968 = vld [vmem:[#allocation3] sm:$0xff]
  %v3969 = vld [vmem:[#allocation3 + $0x10] sm:$0xff]
  %v3970 = vld [vmem:[#allocation3 + $0x20] sm:$0xff]
  %v3971 = vld [vmem:[#allocation3 + $0x30] sm:$0xff]
  %v3972 = vld [vmem:[#allocation3 + $0x60] sm:$0xff]
  %v3973 = vld [vmem:[#allocation3 + $0x70] sm:$0xff]
  %v3974 = vld [vmem:[#allocation3 + $0x80] sm:$0xff]
  %v3975 = vld [vmem:[#allocation3 + $0x90] sm:$0xff]
  %v3976 = vld [vmem:[%s3033] sm:$0xff]
  %v3977 = vld [vmem:[%s3033 + $0x10] sm:$0xff]
  %v3978 = vld [vmem:[%s3033 + $0x20] sm:$0xff]
  %v3979 = vld [vmem:[%s3033 + $0x30] sm:$0xff]
  %v3980 = vld [vmem:[%s3033 + $0x60] sm:$0xff]
  %v3981 = vld [vmem:[%s3033 + $0x70] sm:$0xff]
  %v3982 = vld [vmem:[%s3033 + $0x80] sm:$0xff]
  %v3983 = vld [vmem:[%s3033 + $0x90] sm:$0xff]
  %v3984 = vld [vmem:[%s3058] sm:$0xff]
  %v3985 = vld [vmem:[%s3058 + $0x10] sm:$0xff]
  %v3986 = vld [vmem:[%s3058 + $0x20] sm:$0xff]
  %v3987 = vld [vmem:[%s3058 + $0x30] sm:$0xff]
  %v3988 = vld [vmem:[%s3058 + $0x60] sm:$0xff]
  %v3989 = vld [vmem:[%s3058 + $0x70] sm:$0xff]
  %v3990 = vld [vmem:[%s3058 + $0x80] sm:$0xff]
  %v3991 = vld [vmem:[%s3058 + $0x90] sm:$0xff]
  %v3992 = vld [vmem:[#allocation3 + $0x1] sm:$0xff]
  %v3993 = vld [vmem:[#allocation3 + $0x11] sm:$0xff]
  %v3994 = vld [vmem:[#allocation3 + $0x21] sm:$0xff]
  %v3995 = vld [vmem:[#allocation3 + $0x31] sm:$0xff]
  %v3996 = vld [vmem:[#allocation3 + $0x61] sm:$0xff]
  %v3997 = vld [vmem:[#allocation3 + $0x71] sm:$0xff]
  %v3998 = vld [vmem:[#allocation3 + $0x81] sm:$0xff]
  %v3999 = vld [vmem:[#allocation3 + $0x91] sm:$0xff]
  %v4000 = vld [vmem:[%s3033 + $0x1] sm:$0xff]
  %v4001 = vld [vmem:[%s3033 + $0x11] sm:$0xff]
  %v4002 = vld [vmem:[%s3033 + $0x21] sm:$0xff]
  %v4003 = vld [vmem:[%s3033 + $0x31] sm:$0xff]
  %v4004 = vld [vmem:[%s3033 + $0x61] sm:$0xff]
  %v4005 = vld [vmem:[%s3033 + $0x71] sm:$0xff]
  %v4006 = vld [vmem:[%s3033 + $0x81] sm:$0xff]
  %v4007 = vld [vmem:[%s3033 + $0x91] sm:$0xff]
  %v4008 = vld [vmem:[%s3058 + $0x1] sm:$0xff]
  %v4009 = vld [vmem:[%s3058 + $0x11] sm:$0xff]
  %v4010 = vld [vmem:[%s3058 + $0x21] sm:$0xff]
  %v4011 = vld [vmem:[%s3058 + $0x31] sm:$0xff]
  %v4012 = vld [vmem:[%s3058 + $0x61] sm:$0xff]
  %v4013 = vld [vmem:[%s3058 + $0x71] sm:$0xff]
  %v4014 = vld [vmem:[%s3058 + $0x81] sm:$0xff]
  %v4015 = vld [vmem:[%s3058 + $0x91] sm:$0xff]
  %v4016 = vld [vmem:[#allocation3 + $0x2] sm:$0xff]
  %v4017 = vld [vmem:[#allocation3 + $0x12] sm:$0xff]
  %v4018 = vld [vmem:[#allocation3 + $0x22] sm:$0xff]
  %v4019 = vld [vmem:[#allocation3 + $0x32] sm:$0xff]
  %v4020 = vld [vmem:[#allocation3 + $0x62] sm:$0xff]
  %v4021 = vld [vmem:[#allocation3 + $0x72] sm:$0xff]
  %v4022 = vld [vmem:[#allocation3 + $0x82] sm:$0xff]
  %v4023 = vld [vmem:[#allocation3 + $0x92] sm:$0xff]
  %v4024 = vld [vmem:[%s3033 + $0x2] sm:$0xff]
  %v4025 = vld [vmem:[%s3033 + $0x12] sm:$0xff]
  %v4026 = vld [vmem:[%s3033 + $0x22] sm:$0xff]
  %v4027 = vld [vmem:[%s3033 + $0x32] sm:$0xff]
  %v4028 = vld [vmem:[%s3033 + $0x62] sm:$0xff]
  %v4029 = vld [vmem:[%s3033 + $0x72] sm:$0xff]
  %v4030 = vld [vmem:[%s3033 + $0x82] sm:$0xff]
  %v4031 = vld [vmem:[%s3033 + $0x92] sm:$0xff]
  %v4032 = vld [vmem:[%s3058 + $0x2] sm:$0xff]
  %v4033 = vld [vmem:[%s3058 + $0x12] sm:$0xff]
  %v4034 = vld [vmem:[%s3058 + $0x22] sm:$0xff]
  %v4035 = vld [vmem:[%s3058 + $0x32] sm:$0xff]
  %v4036 = vld [vmem:[%s3058 + $0x62] sm:$0xff]
  %v4037 = vld [vmem:[%s3058 + $0x72] sm:$0xff]
  %v4038 = vld [vmem:[%s3058 + $0x82] sm:$0xff]
  %v4039 = vld [vmem:[%s3058 + $0x92] sm:$0xff]
  %4048 = vrot.lane.b32.xlu0 %v3976, 32
  %v4049 = vpop.permute.xlu0 %4048
  %4050 = vrot.lane.b32.xlu0 %v3977, 32
  %v4051 = vpop.permute.xlu0 %4050
  %4052 = vrot.lane.b32.xlu0 %v3978, 32
  %v4053 = vpop.permute.xlu0 %4052
  %4054 = vrot.lane.b32.xlu0 %v3979, 32
  %v4055 = vpop.permute.xlu0 %4054
  %4056 = vrot.lane.b32.xlu0 %v3980, 32
  %v4057 = vpop.permute.xlu0 %4056
  %4058 = vrot.lane.b32.xlu0 %v3981, 32
  %v4059 = vpop.permute.xlu0 %4058
  %4060 = vrot.lane.b32.xlu0 %v3982, 32
  %v4061 = vpop.permute.xlu0 %4060
  %4062 = vrot.lane.b32.xlu0 %v3983, 32
  %v4063 = vpop.permute.xlu0 %4062
  %4080 = vrot.lane.b32.xlu0 %v3984, 64
  %v4081 = vpop.permute.xlu0 %4080
  %4082 = vrot.lane.b32.xlu0 %v3985, 64
  %v4083 = vpop.permute.xlu0 %4082
  %4084 = vrot.lane.b32.xlu0 %v3986, 64
  %v4085 = vpop.permute.xlu0 %4084
  %4086 = vrot.lane.b32.xlu0 %v3987, 64
  %v4087 = vpop.permute.xlu0 %4086
  %4088 = vrot.lane.b32.xlu0 %v3988, 64
  %v4089 = vpop.permute.xlu0 %4088
  %4090 = vrot.lane.b32.xlu0 %v3989, 64
  %v4091 = vpop.permute.xlu0 %4090
  %4092 = vrot.lane.b32.xlu0 %v3990, 64
  %v4093 = vpop.permute.xlu0 %4092
  %4094 = vrot.lane.b32.xlu0 %v3991, 64
  %v4095 = vpop.permute.xlu0 %4094
  %4112 = vrot.lane.b32.xlu0 %v3992, 96
  %v4113 = vpop.permute.xlu0 %4112
  %4114 = vrot.lane.b32.xlu0 %v3993, 96
  %v4115 = vpop.permute.xlu0 %4114
  %4116 = vrot.lane.b32.xlu0 %v3994, 96
  %v4117 = vpop.permute.xlu0 %4116
  %4118 = vrot.lane.b32.xlu0 %v3995, 96
  %v4119 = vpop.permute.xlu0 %4118
  %4120 = vrot.lane.b32.xlu0 %v3996, 96
  %v4121 = vpop.permute.xlu0 %4120
  %4122 = vrot.lane.b32.xlu0 %v3997, 96
  %v4123 = vpop.permute.xlu0 %4122
  %4124 = vrot.lane.b32.xlu0 %v3998, 96
  %v4125 = vpop.permute.xlu0 %4124
  %4126 = vrot.lane.b32.xlu0 %v3999, 96
  %v4127 = vpop.permute.xlu0 %4126
  %4144 = vrot.lane.b32.xlu0 %v4008, 32
  %v4145 = vpop.permute.xlu0 %4144
  %4146 = vrot.lane.b32.xlu0 %v4009, 32
  %v4147 = vpop.permute.xlu0 %4146
  %4148 = vrot.lane.b32.xlu0 %v4010, 32
  %v4149 = vpop.permute.xlu0 %4148
  %4150 = vrot.lane.b32.xlu0 %v4011, 32
  %v4151 = vpop.permute.xlu0 %4150
  %4152 = vrot.lane.b32.xlu0 %v4012, 32
  %v4153 = vpop.permute.xlu0 %4152
  %4154 = vrot.lane.b32.xlu0 %v4013, 32
  %v4155 = vpop.permute.xlu0 %4154
  %4156 = vrot.lane.b32.xlu0 %v4014, 32
  %v4157 = vpop.permute.xlu0 %4156
  %4158 = vrot.lane.b32.xlu0 %v4015, 32
  %v4159 = vpop.permute.xlu0 %4158
  %4176 = vrot.lane.b32.xlu0 %v4016, 64
  %v4177 = vpop.permute.xlu0 %4176
  %4178 = vrot.lane.b32.xlu0 %v4017, 64
  %v4179 = vpop.permute.xlu0 %4178
  %4180 = vrot.lane.b32.xlu0 %v4018, 64
  %v4181 = vpop.permute.xlu0 %4180
  %4182 = vrot.lane.b32.xlu0 %v4019, 64
  %v4183 = vpop.permute.xlu0 %4182
  %4184 = vrot.lane.b32.xlu0 %v4020, 64
  %v4185 = vpop.permute.xlu0 %4184
  %4186 = vrot.lane.b32.xlu0 %v4021, 64
  %v4187 = vpop.permute.xlu0 %4186
  %4188 = vrot.lane.b32.xlu0 %v4022, 64
  %v4189 = vpop.permute.xlu0 %4188
  %4190 = vrot.lane.b32.xlu0 %v4023, 64
  %v4191 = vpop.permute.xlu0 %4190
  %4208 = vrot.lane.b32.xlu0 %v4024, 96
  %v4209 = vpop.permute.xlu0 %4208
  %4210 = vrot.lane.b32.xlu0 %v4025, 96
  %v4211 = vpop.permute.xlu0 %4210
  %4212 = vrot.lane.b32.xlu0 %v4026, 96
  %v4213 = vpop.permute.xlu0 %4212
  %4214 = vrot.lane.b32.xlu0 %v4027, 96
  %v4215 = vpop.permute.xlu0 %4214
  %4216 = vrot.lane.b32.xlu0 %v4028, 96
  %v4217 = vpop.permute.xlu0 %4216
  %4218 = vrot.lane.b32.xlu0 %v4029, 96
  %v4219 = vpop.permute.xlu0 %4218
  %4220 = vrot.lane.b32.xlu0 %v4030, 96
  %v4221 = vpop.permute.xlu0 %4220
  %4222 = vrot.lane.b32.xlu0 %v4031, 96
  %v4223 = vpop.permute.xlu0 %4222
  %v4232 = vsel %vm473, %v3968, %v4049
  %v4233 = vsel %vm473, %v3969, %v4051
  %v4234 = vsel %vm473, %v3970, %v4053
  %v4235 = vsel %vm473, %v3971, %v4055
  %v4236 = vsel %vm473, %v3972, %v4057
  %v4237 = vsel %vm473, %v3973, %v4059
  %v4238 = vsel %vm473, %v3974, %v4061
  %v4239 = vsel %vm473, %v3975, %v4063
  %v4240 = vsel %vm231, %v4232, %v4081
  %v4241 = vsel %vm231, %v4233, %v4083
  %v4242 = vsel %vm231, %v4234, %v4085
  %v4243 = vsel %vm231, %v4235, %v4087
  %v4244 = vsel %vm231, %v4236, %v4089
  %v4245 = vsel %vm231, %v4237, %v4091
  %v4246 = vsel %vm231, %v4238, %v4093
  %v4247 = vsel %vm231, %v4239, %v4095
  %v4248 = vsel %vm1689, %v4240, %v4113
  %v4249 = vsel %vm1689, %v4241, %v4115
  %v4250 = vsel %vm1689, %v4242, %v4117
  %v4251 = vsel %vm1689, %v4243, %v4119
  %v4252 = vsel %vm1689, %v4244, %v4121
  %v4253 = vsel %vm1689, %v4245, %v4123
  %v4254 = vsel %vm1689, %v4246, %v4125
  %v4255 = vsel %vm1689, %v4247, %v4127
  %v4256 = vsel %vm473, %v4000, %v4145
  %v4257 = vsel %vm473, %v4001, %v4147
  %v4258 = vsel %vm473, %v4002, %v4149
  %v4259 = vsel %vm473, %v4003, %v4151
  %v4260 = vsel %vm473, %v4004, %v4153
  %v4261 = vsel %vm473, %v4005, %v4155
  %v4262 = vsel %vm473, %v4006, %v4157
  %v4263 = vsel %vm473, %v4007, %v4159
  %v4264 = vsel %vm231, %v4256, %v4177
  %v4265 = vsel %vm231, %v4257, %v4179
  %v4266 = vsel %vm231, %v4258, %v4181
  %v4267 = vsel %vm231, %v4259, %v4183
  %v4268 = vsel %vm231, %v4260, %v4185
  %v4269 = vsel %vm231, %v4261, %v4187
  %v4270 = vsel %vm231, %v4262, %v4189
  %v4271 = vsel %vm231, %v4263, %v4191
  %v4272 = vsel %vm1689, %v4264, %v4209
  %v4273 = vsel %vm1689, %v4265, %v4211
  %v4274 = vsel %vm1689, %v4266, %v4213
  %v4275 = vsel %vm1689, %v4267, %v4215
  %v4276 = vsel %vm1689, %v4268, %v4217
  %v4277 = vsel %vm1689, %v4269, %v4219
  %v4278 = vsel %vm1689, %v4270, %v4221
  %v4279 = vsel %vm1689, %v4271, %v4223
  %v4280 = vpack.c.bf16 %v4249, %v4248
  %v4281 = vpack.c.bf16 %v4273, %v4272
  %v4282 = vpack.c.bf16 %v4033, %v4032
  %v4283 = vpack.c.bf16 %v4251, %v4250
  %v4284 = vpack.c.bf16 %v4275, %v4274
  %v4285 = vpack.c.bf16 %v4035, %v4034
  %v4286 = vpack.c.bf16 %v4253, %v4252
  %v4287 = vpack.c.bf16 %v4277, %v4276
  %v4288 = vpack.c.bf16 %v4037, %v4036
  %v4289 = vpack.c.bf16 %v4255, %v4254
  %v4290 = vpack.c.bf16 %v4279, %v4278
  %v4291 = vpack.c.bf16 %v4039, %v4038
  %v4292 = vld [vmem:[%s18] sm:$0xf]
  %v4293 = vld [vmem:[%s18 + $0x4] sm:$0xf]
  %v4294 = vld [vmem:[%s18 + $0x8] sm:$0xf]
  %v4295 = vld [vmem:[%s18 + $0xc] sm:$0xf]
  %v4296 = vld [vmem:[%s18 + $0x10] sm:$0xf]
  %v4297 = vld [vmem:[%s18 + $0x14] sm:$0xf]
  %v4298 = vld [vmem:[%s18 + $0x18] sm:$0xf]
  %v4299 = vld [vmem:[%s18 + $0x1c] sm:$0xf]
  %v4300 = vld [vmem:[%s18 + $0x20] sm:$0xf]
  %v4301 = vld [vmem:[%s18 + $0x24] sm:$0xf]
  %v4302 = vld [vmem:[%s18 + $0x28] sm:$0xf]
  %v4303 = vld [vmem:[%s18 + $0x2c] sm:$0xf]
  %v4304 = vld [vmem:[%s18 + $0x30] sm:$0xf]
  %v4305 = vld [vmem:[%s18 + $0x34] sm:$0xf]
  %v4306 = vld [vmem:[%s18 + $0x38] sm:$0xf]
  %v4307 = vld [vmem:[%s18 + $0x3c] sm:$0xf]
  %v4308 = vld [vmem:[%s18 + $0x40] sm:$0xf]
  %v4309 = vld [vmem:[%s18 + $0x44] sm:$0xf]
  %v4310 = vld [vmem:[%s18 + $0x48] sm:$0xf]
  %v4311 = vld [vmem:[%s18 + $0x4c] sm:$0xf]
  %v4312 = vld [vmem:[%s18 + $0x50] sm:$0xf]
  %v4313 = vld [vmem:[%s18 + $0x54] sm:$0xf]
  %v4314 = vld [vmem:[%s18 + $0x58] sm:$0xf]
  %v4315 = vld [vmem:[%s18 + $0x5c] sm:$0xf]
  %v4316 = vld [vmem:[%s18 + $0x60] sm:$0xf]
  %v4317 = vld [vmem:[%s18 + $0x64] sm:$0xf]
  %v4318 = vld [vmem:[%s18 + $0x68] sm:$0xf]
  %v4319 = vld [vmem:[%s18 + $0x6c] sm:$0xf]
  %v4320 = vld [vmem:[%s18 + $0x70] sm:$0xf]
  %v4321 = vld [vmem:[%s18 + $0x74] sm:$0xf]
  %v4322 = vld [vmem:[%s18 + $0x78] sm:$0xf]
  %v4323 = vld [vmem:[%s18 + $0x7c] sm:$0xf]
  %v4324 = vld [vmem:[%s18 + $0x80] sm:$0xf]
  %v4325 = vld [vmem:[%s18 + $0x84] sm:$0xf]
  %v4326 = vld [vmem:[%s18 + $0x88] sm:$0xf]
  %v4327 = vld [vmem:[%s18 + $0x8c] sm:$0xf]
  %v4328 = vld [vmem:[%s19] sm:$0x1]
  %v4330 = vlaneseq
  %v4331 = vshrl.u32 %v4330, 7
  %v4332 = vsub.s32 0, %v4331
  %v4333 = vrot.slane %v4328, %v4332
  %v4371 = vunpack.c.l.b16 %v4292
  %v4372 = vunpack.c.l.b16 %v4293
  %v4373 = vunpack.c.l.b16 %v4294
  %v4374 = vunpack.c.l.b16 %v4295
  %v4375 = vunpack.c.l.b16 %v4296
  %v4376 = vunpack.c.l.b16 %v4297
  %v4377 = vunpack.c.l.b16 %v4298
  %v4378 = vunpack.c.l.b16 %v4299
  %v4379 = vunpack.c.l.b16 %v4300
  %v4380 = vunpack.c.l.b16 %v4301
  %v4381 = vunpack.c.l.b16 %v4302
  %v4382 = vunpack.c.l.b16 %v4303
  %v4383 = vunpack.c.l.b16 %v4304
  %v4384 = vunpack.c.l.b16 %v4305
  %v4385 = vunpack.c.l.b16 %v4306
  %v4386 = vunpack.c.l.b16 %v4307
  %v4387 = vunpack.c.l.b16 %v4308
  %v4388 = vunpack.c.l.b16 %v4309
  %v4389 = vunpack.c.l.b16 %v4310
  %v4390 = vunpack.c.l.b16 %v4311
  %v4391 = vunpack.c.l.b16 %v4312
  %v4392 = vunpack.c.l.b16 %v4313
  %v4393 = vunpack.c.l.b16 %v4314
  %v4394 = vunpack.c.l.b16 %v4315
  %v4395 = vunpack.c.l.b16 %v4316
  %v4396 = vunpack.c.l.b16 %v4317
  %v4397 = vunpack.c.l.b16 %v4318
  %v4398 = vunpack.c.l.b16 %v4319
  %v4399 = vunpack.c.l.b16 %v4320
  %v4400 = vunpack.c.l.b16 %v4321
  %v4401 = vunpack.c.l.b16 %v4322
  %v4402 = vunpack.c.l.b16 %v4323
  %v4403 = vunpack.c.l.b16 %v4324
  %v4404 = vunpack.c.l.b16 %v4325
  %v4405 = vunpack.c.l.b16 %v4326
  %v4406 = vunpack.c.l.b16 %v4327
  %v4407 = vpack.c.b16 %v4372, %v4371
  %v4408 = vpack.c.b16 %v4374, %v4373
  %v4409 = vpack.c.b16 %v4376, %v4375
  %v4410 = vpack.c.b16 %v4378, %v4377
  %v4411 = vpack.c.b16 %v4380, %v4379
  %v4412 = vpack.c.b16 %v4382, %v4381
  %v4413 = vpack.c.b16 %v4384, %v4383
  %v4414 = vpack.c.b16 %v4386, %v4385
  %v4415 = vpack.c.b16 %v4388, %v4387
  %v4416 = vpack.c.b16 %v4390, %v4389
  %v4417 = vpack.c.b16 %v4392, %v4391
  %v4418 = vpack.c.b16 %v4394, %v4393
  %v4419 = vpack.c.b16 %v4396, %v4395
  %v4420 = vpack.c.b16 %v4398, %v4397
  %v4421 = vpack.c.b16 %v4400, %v4399
  %v4422 = vpack.c.b16 %v4402, %v4401
  %v4423 = vpack.c.b16 %v4404, %v4403
  %v4424 = vpack.c.b16 %v4406, %v4405
  %v4444 = vsel %vm473, %v4282, 0
  %v4447 = vsel %vm473, %v4285, 0
  %v4450 = vsel %vm473, %v4288, 0
  %v4453 = vsel %vm473, %v4291, 0
  %4455 = vmatprep.subr.bf16.mxu0 0
  %4456 = vmatpush1.bf16.msra.mxu0 %v4407
  %4457 = vmatprep.subr.bf16.mxu0 0
  %4458 = vmatpush1.bf16.msra.mxu0 %v4408
  %4459 = vmatprep.subr.bf16.mxu0 0
  %4460 = vmatpush1.bf16.msra.mxu0 %v4409
  %4461 = vmatprep.subr.bf16.mxu0 0
  %4462 = vmatpush1.bf16.msra.mxu0 %v4410
  %4463 = vmatprep.subr.bf16.mxu0 0
  %4464 = vmatpush1.bf16.msra.mxu0 %v4411
  %4465 = vmatprep.subr.bf16.mxu0 0
  %4466 = vmatpush1.bf16.msra.mxu0 %v4412
  %4467 = vmatprep.subr.bf16.mxu0 0
  %4468 = vmatpush1.bf16.msra.mxu0 %v4413
  %4469 = vmatprep.subr.bf16.mxu0 0
  %4470 = vmatpush1.bf16.msra.mxu0 %v4414
  %4471 = vmatprep.subr.bf16.mxu0 0
  %4472 = vmatpush1.bf16.msra.mxu0 %v4415
  %4473 = vmatprep.subr.bf16.mxu0 0
  %4474 = vmatpush1.bf16.msra.mxu0 %v4416
  %4475 = vmatprep.subr.bf16.mxu0 0
  %4476 = vmatpush1.bf16.msra.mxu0 %v4417
  %4477 = vmatprep.subr.bf16.mxu0 0
  %4478 = vmatpush1.bf16.msra.mxu0 %v4418
  %4479 = vmatprep.subr.bf16.mxu0 0
  %4480 = vmatpush1.bf16.msra.mxu0 %v4419
  %4481 = vmatprep.subr.bf16.mxu0 0
  %4482 = vmatpush1.bf16.msra.mxu0 %v4420
  %4483 = vmatprep.subr.bf16.mxu0 0
  %4484 = vmatpush1.bf16.msra.mxu0 %v4421
  %4485 = vmatprep.subr.bf16.mxu0 0
  %4486 = vmatpush1.bf16.msra.mxu0 %v4422
  %4487 = vmatprep.mubr.bf16.mxu0 %v4281
  %4488 = vmatmul.mubr.bf16.gmra.mrb[0].mxu0 %v4280
  %v4489 = vpop.f32.mrb[0].mxu0
  %v4490 = vadd.f32 %v4333, %v4489
  %v4491 = vpop.f32.mrb[0].mxu0
  %v4492 = vpop.f32.mrb[0].mxu0
  %v4493 = vadd.f32 %v4333, %v4492
  %v4494 = vpop.f32.mrb[0].mxu0
  %4495 = vmatprep.mubr.bf16.mxu0 %v4284
  %4496 = vmatmul.mubr.bf16.gmra.mrb[0].mxu0 %v4283
  %v4497 = vpop.f32.mrb[0].mxu0
  %v4498 = vadd.f32 %v4333, %v4497
  %v4499 = vpop.f32.mrb[0].mxu0
  %v4500 = vpop.f32.mrb[0].mxu0
  %v4501 = vadd.f32 %v4333, %v4500
  %v4502 = vpop.f32.mrb[0].mxu0
  %4503 = vmatprep.mubr.bf16.mxu0 %v4287
  %4504 = vmatmul.mubr.bf16.gmra.mrb[0].mxu0 %v4286
  %v4505 = vpop.f32.mrb[0].mxu0
  %v4506 = vadd.f32 %v4333, %v4505
  %v4507 = vpop.f32.mrb[0].mxu0
  %v4508 = vpop.f32.mrb[0].mxu0
  %v4509 = vadd.f32 %v4333, %v4508
  %v4510 = vpop.f32.mrb[0].mxu0
  %4511 = vmatprep.mubr.bf16.mxu0 %v4290
  %4512 = vmatmul.mubr.bf16.gmra.mrb[0].mxu0 %v4289
  %v4513 = vpop.f32.mrb[0].mxu0
  %v4514 = vadd.f32 %v4333, %v4513
  %v4515 = vpop.f32.mrb[0].mxu0
  %v4516 = vpop.f32.mrb[0].mxu0
  %v4517 = vadd.f32 %v4333, %v4516
  %v4518 = vpop.f32.mrb[0].mxu0
  %4519 = vdwg.mxu0
  %4520 = vmatprep.subr.bf16.mxu0 0
  %4521 = vmatpush1.bf16.msra.mxu0 %v4423
  %4522 = vmatprep.subr.bf16.mxu0 0
  %4523 = vmatpush1.bf16.msra.mxu0 %v4424
  %4524 = vmatprep.subr.bf16.mxu0 0
  %4525 = vmatpush1.bf16.msra.mxu0 0
  %4526 = vmatprep.subr.bf16.mxu0 0
  %4527 = vmatpush1.bf16.msra.mxu0 0
  %4528 = vmatprep.subr.bf16.mxu0 0
  %4529 = vmatpush1.bf16.msra.mxu0 0
  %4530 = vmatprep.subr.bf16.mxu0 0
  %4531 = vmatpush1.bf16.msra.mxu0 0
  %4532 = vmatprep.subr.bf16.mxu0 0
  %4533 = vmatpush1.bf16.msra.mxu0 0
  %4534 = vmatprep.subr.bf16.mxu0 0
  %4535 = vmatpush1.bf16.msra.mxu0 0
  %4536 = vmatprep.subr.bf16.mxu0 0
  %4537 = vmatpush1.bf16.msra.mxu0 0
  %4538 = vmatprep.subr.bf16.mxu0 0
  %4539 = vmatpush1.bf16.msra.mxu0 0
  %4540 = vmatprep.subr.bf16.mxu0 0
  %4541 = vmatpush1.bf16.msra.mxu0 0
  %4542 = vmatprep.subr.bf16.mxu0 0
  %4543 = vmatpush1.bf16.msra.mxu0 0
  %4544 = vmatprep.subr.bf16.mxu0 0
  %4545 = vmatpush1.bf16.msra.mxu0 0
  %4546 = vmatprep.subr.bf16.mxu0 0
  %4547 = vmatpush1.bf16.msra.mxu0 0
  %4548 = vmatprep.subr.bf16.mxu0 0
  %4549 = vmatpush1.bf16.msra.mxu0 0
  %4550 = vmatprep.subr.bf16.mxu0 0
  %4551 = vmatpush1.bf16.msra.mxu0 0
  %4552 = vmatprep.mubr.bf16.mxu0 0
  %4553 = vmatmul.mubr.bf16.gmra.mrb[0].mxu0 %v4444
  %v4554 = vpop.f32.mrb[0].mxu0
  %v4555 = vadd.f32 %v4490, %v4554
  %v4556 = vpop.f32.mrb[0].mxu0
  %v4557 = vpop.f32.mrb[0].mxu0
  %v4558 = vadd.f32 %v4493, %v4557
  %v4559 = vpop.f32.mrb[0].mxu0
  %4560 = vmatprep.mubr.bf16.mxu0 0
  %4561 = vmatmul.mubr.bf16.gmra.mrb[0].mxu0 %v4447
  %v4562 = vpop.f32.mrb[0].mxu0
  %v4563 = vadd.f32 %v4498, %v4562
  %v4564 = vpop.f32.mrb[0].mxu0
  %v4565 = vpop.f32.mrb[0].mxu0
  %v4566 = vadd.f32 %v4501, %v4565
  %v4567 = vpop.f32.mrb[0].mxu0
  %4568 = vmatprep.mubr.bf16.mxu0 0
  %4569 = vmatmul.mubr.bf16.gmra.mrb[0].mxu0 %v4450
  %v4570 = vpop.f32.mrb[0].mxu0
  %v4571 = vadd.f32 %v4506, %v4570
  %v4572 = vpop.f32.mrb[0].mxu0
  %v4573 = vpop.f32.mrb[0].mxu0
  %v4574 = vadd.f32 %v4509, %v4573
  %v4575 = vpop.f32.mrb[0].mxu0
  %4576 = vmatprep.mubr.bf16.mxu0 0
  %4577 = vmatmul.mubr.bf16.gmra.mrb[0].mxu0 %v4453
  %v4578 = vpop.f32.mrb[0].mxu0
  %v4579 = vadd.f32 %v4514, %v4578
  %v4580 = vpop.f32.mrb[0].mxu0
  %v4581 = vpop.f32.mrb[0].mxu0
  %v4582 = vadd.f32 %v4517, %v4581
  %v4583 = vpop.f32.mrb[0].mxu0
  %4584 = vdwg.mxu0
  %v4585 = vmax.f32 %v4555, 0.0
  %v4586 = vmax.f32 %v4558, 0.0
  %v4587 = vmax.f32 %v4563, 0.0
  %v4588 = vmax.f32 %v4566, 0.0
  %v4589 = vmax.f32 %v4571, 0.0
  %v4590 = vmax.f32 %v4574, 0.0
  %v4591 = vmax.f32 %v4579, 0.0
  %v4592 = vmax.f32 %v4582, 0.0
  %v4593 = vpack.c.bf16 %v4586, %v4585
  %v4594 = vpack.c.bf16 %v4588, %v4587
  %v4595 = vpack.c.bf16 %v4590, %v4589
  %v4596 = vpack.c.bf16 %v4592, %v4591
  %v4597 = vld [vmem:[%s20] sm:$0xf]
  %v4598 = vld [vmem:[%s20 + $0x4] sm:$0xf]
  %v4599 = vld [vmem:[%s20 + $0x8] sm:$0xf]
  %v4600 = vld [vmem:[%s20 + $0xc] sm:$0xf]
  %v4601 = vld [vmem:[%s21] sm:$0x1]
  %v4603 = vlaneseq
  %v4604 = vshrl.u32 %v4603, 7
  %v4605 = vsub.s32 0, %v4604
  %v4606 = vrot.slane %v4601, %v4605
  %v4612 = vunpack.c.l.b16 %v4597
  %v4613 = vunpack.c.l.b16 %v4598
  %v4614 = vunpack.c.l.b16 %v4599
  %v4615 = vunpack.c.l.b16 %v4600
  %v4616 = vpack.c.b16 %v4613, %v4612
  %v4617 = vpack.c.b16 %v4615, %v4614
  %v4621 = vsel %vm473, %v4593, 0
  %v4624 = vsel %vm473, %v4594, 0
  %v4627 = vsel %vm473, %v4595, 0
  %v4630 = vsel %vm473, %v4596, 0
  %4632 = vmatprep.subr.bf16.mxu0 0
  %4633 = vmatpush1.bf16.msra.mxu0 %v4616
  %4634 = vmatprep.subr.bf16.mxu0 0
  %4635 = vmatpush1.bf16.msra.mxu0 %v4617
  %4636 = vmatprep.subr.bf16.mxu0 0
  %4637 = vmatpush1.bf16.msra.mxu0 0
  %4638 = vmatprep.subr.bf16.mxu0 0
  %4639 = vmatpush1.bf16.msra.mxu0 0
  %4640 = vmatprep.subr.bf16.mxu0 0
  %4641 = vmatpush1.bf16.msra.mxu0 0
  %4642 = vmatprep.subr.bf16.mxu0 0
  %4643 = vmatpush1.bf16.msra.mxu0 0
  %4644 = vmatprep.subr.bf16.mxu0 0
  %4645 = vmatpush1.bf16.msra.mxu0 0
  %4646 = vmatprep.subr.bf16.mxu0 0
  %4647 = vmatpush1.bf16.msra.mxu0 0
  %4648 = vmatprep.subr.bf16.mxu0 0
  %4649 = vmatpush1.bf16.msra.mxu0 0
  %4650 = vmatprep.subr.bf16.mxu0 0
  %4651 = vmatpush1.bf16.msra.mxu0 0
  %4652 = vmatprep.subr.bf16.mxu0 0
  %4653 = vmatpush1.bf16.msra.mxu0 0
  %4654 = vmatprep.subr.bf16.mxu0 0
  %4655 = vmatpush1.bf16.msra.mxu0 0
  %4656 = vmatprep.subr.bf16.mxu0 0
  %4657 = vmatpush1.bf16.msra.mxu0 0
  %4658 = vmatprep.subr.bf16.mxu0 0
  %4659 = vmatpush1.bf16.msra.mxu0 0
  %4660 = vmatprep.subr.bf16.mxu0 0
  %4661 = vmatpush1.bf16.msra.mxu0 0
  %4662 = vmatprep.subr.bf16.mxu0 0
  %4663 = vmatpush1.bf16.msra.mxu0 0
  %4664 = vmatprep.mubr.bf16.mxu0 0
  %4665 = vmatmul.mubr.bf16.gmra.mrb[0].mxu0 %v4621
  %v4666 = vpop.f32.mrb[0].mxu0
  %v4667 = vadd.f32 %v4606, %v4666
  %v4668 = vpop.f32.mrb[0].mxu0
  %v4669 = vpop.f32.mrb[0].mxu0
  %v4670 = vadd.f32 %v4606, %v4669
  %v4671 = vpop.f32.mrb[0].mxu0
  %4672 = vmatprep.mubr.bf16.mxu0 0
  %4673 = vmatmul.mubr.bf16.gmra.mrb[0].mxu0 %v4624
  %v4674 = vpop.f32.mrb[0].mxu0
  %v4675 = vadd.f32 %v4606, %v4674
  %v4676 = vpop.f32.mrb[0].mxu0
  %v4677 = vpop.f32.mrb[0].mxu0
  %v4678 = vadd.f32 %v4606, %v4677
  %v4679 = vpop.f32.mrb[0].mxu0
  %4680 = vmatprep.mubr.bf16.mxu0 0
  %4681 = vmatmul.mubr.bf16.gmra.mrb[0].mxu0 %v4627
  %v4682 = vpop.f32.mrb[0].mxu0
  %v4683 = vadd.f32 %v4606, %v4682
  %v4684 = vpop.f32.mrb[0].mxu0
  %v4685 = vpop.f32.mrb[0].mxu0
  %v4686 = vadd.f32 %v4606, %v4685
  %v4687 = vpop.f32.mrb[0].mxu0
  %4688 = vmatprep.mubr.bf16.mxu0 0
  %4689 = vmatmul.mubr.bf16.gmra.mrb[0].mxu0 %v4630
  %v4690 = vpop.f32.mrb[0].mxu0
  %v4691 = vadd.f32 %v4606, %v4690
  %v4692 = vpop.f32.mrb[0].mxu0
  %v4693 = vpop.f32.mrb[0].mxu0
  %v4694 = vadd.f32 %v4606, %v4693
  %v4695 = vpop.f32.mrb[0].mxu0
  %4696 = vdwg.mxu0
  %v4697 = vadd.f32 %v4667, %v3780
  %v4698 = vadd.f32 %v4670, %v3781
  %v4699 = vadd.f32 %v4675, %v3782
  %v4700 = vadd.f32 %v4678, %v3783
  %v4701 = vadd.f32 %v4683, %v3784
  %v4702 = vadd.f32 %v4686, %v3785
  %v4703 = vadd.f32 %v4691, %v3786
  %v4704 = vadd.f32 %v4694, %v3787
  %v4705 = vmax.f32 %v4697, 0.0
  %v4706 = vmax.f32 %v4698, 0.0
  %v4707 = vmax.f32 %v4699, 0.0
  %v4708 = vmax.f32 %v4700, 0.0
  %v4709 = vmax.f32 %v4701, 0.0
  %v4710 = vmax.f32 %v4702, 0.0
  %v4711 = vmax.f32 %v4703, 0.0
  %v4712 = vmax.f32 %v4704, 0.0
  %4713 = vst [vmem:[%s22] sm:$0xff] %v4705
  %4714 = vst [vmem:[%s22 + $0x8] sm:$0xff] %v4706
  %4715 = vst [vmem:[%s22 + $0x10] sm:$0xff] %v4707
  %4716 = vst [vmem:[%s22 + $0x18] sm:$0xff] %v4708
  %4717 = vst [vmem:[%s22 + $0x20] sm:$0xff] %v4709
  %4718 = vst [vmem:[%s22 + $0x28] sm:$0xff] %v4710
  %4719 = vst [vmem:[%s22 + $0x30] sm:$0xff] %v4711
  %4720 = vst [vmem:[%s22 + $0x38] sm:$0xff] %v4712
  // Predicated region
  $region90: #{encoder_forward.1} parent=0 // pred_check
    _
  $region91: #{encoder_forward.1} parent=0 // pred_check_branch
    %4722 = sbr.rel (0) target = $region93
  $region92: #{encoder_forward.1} parent=0 // pred_region
    _
  $region93: #{encoder_forward.1} parent=0 // pred_fallthru
    _
  // Predicated region
  $region94: #{encoder_forward.1} parent=0 // pred_check
    _
  $region95: #{encoder_forward.1} parent=0 // pred_check_branch
    %4724 = sbr.rel (0) target = $region97
  $region96: #{encoder_forward.1} parent=0 // pred_region
    _
  $region97: #{encoder_forward.1} parent=0 // pred_fallthru
    _

</llo_original>
